<compile_context>
chip_gen: v7x
topology: tpu7x:2x2x1
jax: 0.10.0
libtpu: 0.0.40
codegen_flags: <defaults>
</compile_context>

<pallas_src>
import math
from functools import partial

import jax
import jax.numpy as jnp
from jax.experimental import pallas as pl
from jax.experimental.pallas import tpu as pltpu

LN_EPS = 1e-5      # torch.nn.LayerNorm default
OUT_PAD = 128      # logits padded to a full lane width (lane-dense stores)


# ---------------------------------------------------------------------------
# math helpers
# ---------------------------------------------------------------------------
def _gelu(x):
    # exact GELU (erf formulation) -> matches torch.nn.GELU() default
    return 0.5 * x * (1.0 + jax.lax.erf(x / math.sqrt(2.0)))


def _layer_norm(x, w, b):
    mu = jnp.mean(x, axis=-1, keepdims=True)
    var = jnp.mean(jnp.square(x - mu), axis=-1, keepdims=True)
    return (x - mu) * jax.lax.rsqrt(var + LN_EPS) * w + b


def _attention_heads(q, k, v, num_heads):
    """Batched multi-head attention core on a (Bb, *, E) block.

    Per-head lane slices (heads are lane-contiguous); the batched einsum keeps
    examples separate.  Softmax is normalized AFTER p @ v via an approximate
    reciprocal (EUP slot).  Returns the head-concatenated output [Bb, Nq, E]
    (output projection is applied once by the caller).
    """
    bb, nq, e = q.shape
    hd = e // num_heads
    scale = 1.0 / math.sqrt(hd)
    heads = []
    for h in range(num_heads):
        sl = slice(h * hd, (h + 1) * hd)
        qh, kh, vh = q[:, :, sl], k[:, :, sl], v[:, :, sl]
        s = jnp.einsum("bqd,bkd->bqk", qh, kh,
                       preferred_element_type=jnp.float32) * scale
        s = s - jnp.max(s, axis=-1, keepdims=True)
        p = jnp.exp(s)
        denom = jnp.sum(p, axis=-1, keepdims=True)
        oh = jnp.einsum("bqk,bkd->bqd", p, vh,
                        preferred_element_type=jnp.float32)
        heads.append(oh * pl.reciprocal(denom, approx=True))
    return jnp.concatenate(heads, axis=-1)                      # [bb, nq, e]


# ---------------------------------------------------------------------------
# Pallas kernel: one batch *block* per grid step, everything resident in VMEM
# ---------------------------------------------------------------------------
def classifier_kernel(num_heads,
                      emb_ref, mask_ref,
                      w1_ref, w2_ref, w3_ref, w4_ref, b4_ref,
                      c_qkv_w_ref, c_qkv_b_ref, c_wo_ref,
                      s_qkv_w_ref, s_qkv_b_ref, s_wo_ref,
                      vec_e_ref, vec_mlp_ref,
                      out_ref):
    bb, n, e = emb_ref.shape
    m = mask_ref.shape[1]

    # unpack packed vector slabs (static row slices)
    ve = vec_e_ref[...]                       # [9, E]
    b2, c_bo, s_bo = ve[0:1], ve[1:2], ve[2:3]
    ln1w, ln1b = ve[3:4], ve[4:5]
    ln2w, ln2b = ve[5:6], ve[6:7]
    ln3w, ln3b = ve[7:8], ve[8:9]
    vm = vec_mlp_ref[...]                     # [2, mlp_dim]
    b1, b3 = vm[0:1], vm[1:2]

    x0 = emb_ref[...].reshape(bb * n, e)      # batch folded into rows
    mt = mask_ref[...].reshape(bb * m, e)

    # ---- input MLP: Linear -> GELU -> Linear -> LayerNorm ----
    h = _gelu(jnp.dot(x0, w1_ref[...], preferred_element_type=jnp.float32) + b1)
    h = jnp.dot(h, w2_ref[...], preferred_element_type=jnp.float32) + b2
    x = _layer_norm(h, ln1w, ln1b)            # [bb*n, e]

    # ---- cross attention (query=x, key=value=mask tokens), residual + LN ----
    cw = c_qkv_w_ref[...]                     # [e, 3e]  (wq | wk | wv)
    cb = c_qkv_b_ref[...]                     # [1, 3e]
    q = jnp.dot(x, cw[:, :e], preferred_element_type=jnp.float32) + cb[:, :e]
    kv = jnp.dot(mt, cw[:, e:], preferred_element_type=jnp.float32) + cb[:, e:]
    attn = _attention_heads(q.reshape(bb, n, e),
                            kv[:, :e].reshape(bb, m, e),
                            kv[:, e:].reshape(bb, m, e), num_heads)
    ca = jnp.dot(attn.reshape(bb * n, e), c_wo_ref[...],
                 preferred_element_type=jnp.float32) + c_bo
    x = _layer_norm(x + ca, ln2w, ln2b)

    # ---- self attention (fully fused QKV), residual + LN ----
    qkv = jnp.dot(x, s_qkv_w_ref[...],
                  preferred_element_type=jnp.float32) + s_qkv_b_ref[...]
    attn = _attention_heads(qkv[:, :e].reshape(bb, n, e),
                            qkv[:, e:2 * e].reshape(bb, n, e),
                            qkv[:, 2 * e:].reshape(bb, n, e), num_heads)
    sa = jnp.dot(attn.reshape(bb * n, e), s_wo_ref[...],
                 preferred_element_type=jnp.float32) + s_bo
    x = _layer_norm(x + sa, ln3w, ln3b)       # [bb*n, e]

    # ---- mean pool over sequence + output MLP (lane-padded logits) ----
    xm = jnp.mean(x.reshape(bb, n, e), axis=1)        # [bb, e]
    h = _gelu(jnp.dot(xm, w3_ref[...], preferred_element_type=jnp.float32) + b3)
    logits = jnp.dot(h, w4_ref[...], preferred_element_type=jnp.float32) + b4_ref[...]
    out_ref[0] = logits                                # [bb, OUT_PAD]


# ---------------------------------------------------------------------------
# wrapper: weight packing, batch blocking, pallas_call
# ---------------------------------------------------------------------------
_PACKED_ORDER = ["w1", "w2", "w3", "w4p", "b4p",
                 "c_qkv_w", "c_qkv_b", "c_wo",
                 "s_qkv_w", "s_qkv_b", "s_wo",
                 "vec_e", "vec_mlp"]


def _pack_params(params):
    p = {}
    p["w1"], p["w2"], p["w3"] = params["w1"], params["w2"], params["w3"]
    w4, b4 = params["w4"], params["b4"]
    p["w4p"] = jnp.pad(w4, ((0, 0), (0, OUT_PAD - w4.shape[1])))
    p["b4p"] = jnp.pad(b4, ((0, 0), (0, OUT_PAD - b4.shape[1])))
    p["c_qkv_w"] = jnp.concatenate([params["cwq"], params["cwk"], params["cwv"]], axis=1)
    p["c_qkv_b"] = jnp.concatenate([params["cbq"], params["cbk"], params["cbv"]], axis=1)
    p["c_wo"] = params["cwo"]
    p["s_qkv_w"] = jnp.concatenate([params["swq"], params["swk"], params["swv"]], axis=1)
    p["s_qkv_b"] = jnp.concatenate([params["sbq"], params["sbk"], params["sbv"]], axis=1)
    p["s_wo"] = params["swo"]
    p["vec_e"] = jnp.concatenate([params["b2"], params["cbo"], params["sbo"],
                                  params["ln1w"], params["ln1b"],
                                  params["ln2w"], params["ln2b"],
                                  params["ln3w"], params["ln3b"]], axis=0)   # [9, E]
    p["vec_mlp"] = jnp.concatenate([params["b1"], params["b3"]], axis=0)     # [2, mlp]
    return p


def _choose_block_b(B, max_block=32):
    """Batch-block size: amortize per-step overhead, keep >=2 grid steps (v7x)."""
    bb = min(B, max_block)
    if B > 1 and pl.cdiv(B, bb) < 2:
        bb = pl.cdiv(B, 2)
    return max(int(bb), 1)


def classifier_forward(emb, mask, params, num_heads, *, block_b=None):
    B, N, E = emb.shape
    _, M, _ = mask.shape
    mlp_dim = params["w1"].shape[1]

    if block_b is None:
        block_b = _choose_block_b(B)
    G = pl.cdiv(B, block_b)
    Bp = G * block_b
    if Bp != B:  # pad batch so every grid step sees a full block
        emb = jnp.pad(emb, ((0, Bp - B), (0, 0), (0, 0)))
        mask = jnp.pad(mask, ((0, Bp - B), (0, 0), (0, 0)))

    packed = _pack_params(params)
    weights = [packed[k] for k in _PACKED_ORDER]

    in_specs = [
        pl.BlockSpec((block_b, N, E), lambda g: (g, 0, 0)),
        pl.BlockSpec((block_b, M, E), lambda g: (g, 0, 0)),
    ] + [pl.BlockSpec(w.shape, lambda g: (0, 0)) for w in weights]
    # lane-dense output: one (block_b, OUT_PAD) slab per grid step
    out_spec = pl.BlockSpec((1, block_b, OUT_PAD), lambda g: (g, 0, 0))

    # advisory cost estimate for XLA scheduling around the custom call
    flops_per_ex = (
        4 * N * E * mlp_dim                        # input MLP (two GEMMs)
        + 2 * N * E * E + 2 * M * E * (2 * E)      # cross: q proj + fused kv proj
        + 4 * N * M * E                            # cross: scores + p@v
        + 2 * N * E * E                            # cross: out proj
        + 2 * N * E * (3 * E)                      # self: fused qkv proj
        + 4 * N * N * E                            # self: scores + p@v
        + 2 * N * E * E                            # self: out proj
        + 2 * E * mlp_dim + 2 * mlp_dim * 2        # output MLP
    )
    transc_per_ex = N * mlp_dim + mlp_dim + num_heads * (N * M + N * N)
    weight_bytes = sum(int(w.size) * w.dtype.itemsize for w in weights)
    cost = pl.CostEstimate(
        flops=int(Bp * flops_per_ex),
        transcendentals=int(Bp * transc_per_ex),
        bytes_accessed=int(emb.nbytes + mask.nbytes
                           + G * weight_bytes + Bp * OUT_PAD * 4),
    )

    out = pl.pallas_call(
        partial(classifier_kernel, num_heads),
        out_shape=jax.ShapeDtypeStruct((G, block_b, OUT_PAD), jnp.float32),
        grid_spec=pltpu.PrefetchScalarGridSpec(
            num_scalar_prefetch=0,
            grid=(G,),
            in_specs=in_specs,
            out_specs=out_spec),
        compiler_params=pltpu.CompilerParams(
            dimension_semantics=("parallel",)),
        cost_estimate=cost,
    )(emb, mask, *weights)

    return out.reshape(Bp, OUT_PAD)[:B, :2]


# ---------------------------------------------------------------------------
# deterministic parameter init (synthetic; no checkpoint load)
# ---------------------------------------------------------------------------
def init_params(key, E, mlp_dim):
    keys = iter(jax.random.split(key, 32))

    def rnd(shape, scale=0.05):
        return (scale * jax.random.normal(next(keys), shape)).astype(jnp.float32)

    p = {}
    p["w1"], p["b1"] = rnd((E, mlp_dim)), rnd((1, mlp_dim))
    p["w2"], p["b2"] = rnd((mlp_dim, E)), rnd((1, E))
    p["ln1w"], p["ln1b"] = jnp.ones((1, E), jnp.float32), jnp.zeros((1, E), jnp.float32)
    for pref in ("c", "s"):                       # cross / self attention
        for nm in ("q", "k", "v", "o"):
            p[f"{pref}w{nm}"] = rnd((E, E))
            p[f"{pref}b{nm}"] = rnd((1, E))
    p["ln2w"], p["ln2b"] = jnp.ones((1, E), jnp.float32), jnp.zeros((1, E), jnp.float32)
    p["ln3w"], p["ln3b"] = jnp.ones((1, E), jnp.float32), jnp.zeros((1, E), jnp.float32)
    p["w3"], p["b3"] = rnd((E, mlp_dim)), rnd((1, mlp_dim))
    p["w4"], p["b4"] = rnd((mlp_dim, 2)), rnd((1, 2))
    return p


# ---------------------------------------------------------------------------
# pure-JAX reference (exact math, per-example) for correctness check
# ---------------------------------------------------------------------------
def _mha_ref(q_in, k_in, v_in, wq, bq, wk, bk, wv, bv, wo, bo, num_heads):
    e = q_in.shape[-1]
    hd = e // num_heads
    scale = 1.0 / math.sqrt(hd)
    q = jnp.dot(q_in, wq) + bq
    k = jnp.dot(k_in, wk) + bk
    v = jnp.dot(v_in, wv) + bv
    out = jnp.zeros((q_in.shape[0], e), jnp.float32)
    for h in range(num_heads):
        qh = q[:, h * hd:(h + 1) * hd]
        kh = k[:, h * hd:(h + 1) * hd]
        vh = v[:, h * hd:(h + 1) * hd]
        s = jnp.dot(qh, kh.T) * scale
        s = s - jnp.max(s, axis=-1, keepdims=True)
        p = jnp.exp(s)
        p = p / jnp.sum(p, axis=-1, keepdims=True)
        oh = jnp.dot(p, vh)
        out = out + jnp.dot(oh, wo[h * hd:(h + 1) * hd, :])
    return out + bo


def reference_forward(emb, mask, params, num_heads):
    def single(e, m):
        h = _gelu(jnp.dot(e, params["w1"]) + params["b1"])
        h = jnp.dot(h, params["w2"]) + params["b2"]
        x = _layer_norm(h, params["ln1w"], params["ln1b"])
        ca = _mha_ref(x, m, m, params["cwq"], params["cbq"], params["cwk"], params["cbk"],
                      params["cwv"], params["cbv"], params["cwo"], params["cbo"], num_heads)
        x = _layer_norm(x + ca, params["ln2w"], params["ln2b"])
        sa = _mha_ref(x, x, x, params["swq"], params["sbq"], params["swk"], params["sbk"],
                      params["swv"], params["sbv"], params["swo"], params["sbo"], num_heads)
        x = _layer_norm(x + sa, params["ln3w"], params["ln3b"])
        xm = jnp.mean(x, axis=0, keepdims=True)
        h = _gelu(jnp.dot(xm, params["w3"]) + params["b3"])
        return jnp.dot(h, params["w4"]) + params["b4"]
    return jax.vmap(single)(emb, mask).reshape(emb.shape[0], 2)


if __name__ == "__main__":
    # small shapes consistent with the forward signature
    B, N, M = 4, 8, 16             # batch, query tokens, mask tokens
    E, MLP_DIM, HEADS = 32, 64, 4  # embedding_dim, classifier_mlp_dim, attention_heads

    key = jax.random.PRNGKey(0)
    k_emb, k_mask, k_par = jax.random.split(key, 3)
    embeddings_sampled = jax.random.normal(k_emb, (B, N, E), jnp.float32)
    mask_tokens = jax.random.normal(k_mask, (B, M, E), jnp.float32)
    params = init_params(k_par, E, MLP_DIM)

    logits = classifier_forward(embeddings_sampled, mask_tokens, params, HEADS)
    logits = jax.block_until_ready(logits)

    ref = reference_forward(embeddings_sampled, mask_tokens, params, HEADS)
    assert logits.shape == (B, 2)
    # slightly looser tolerance: approx reciprocal in the softmax denominator
    assert jnp.allclose(logits, ref, rtol=2e-3, atol=2e-3), (logits, ref)
    print("KERNEL_OK")
</pallas_src>

<mosaic_0001>
module attributes {stable_mosaic.version = 11 : i64} {
  func.func @classifier_kernel(%arg0: i32, %arg1: memref<2x8x32xf32, #tpu.memory_space<vmem>>, %arg2: memref<2x16x32xf32, #tpu.memory_space<vmem>>, %arg3: memref<32x64xf32, #tpu.memory_space<vmem>>, %arg4: memref<64x32xf32, #tpu.memory_space<vmem>>, %arg5: memref<32x64xf32, #tpu.memory_space<vmem>>, %arg6: memref<64x128xf32, #tpu.memory_space<vmem>>, %arg7: memref<1x128xf32, #tpu.memory_space<vmem>>, %arg8: memref<32x96xf32, #tpu.memory_space<vmem>>, %arg9: memref<1x96xf32, #tpu.memory_space<vmem>>, %arg10: memref<32x32xf32, #tpu.memory_space<vmem>>, %arg11: memref<32x96xf32, #tpu.memory_space<vmem>>, %arg12: memref<1x96xf32, #tpu.memory_space<vmem>>, %arg13: memref<32x32xf32, #tpu.memory_space<vmem>>, %arg14: memref<9x32xf32, #tpu.memory_space<vmem>>, %arg15: memref<2x64xf32, #tpu.memory_space<vmem>>, %arg16: memref<1x2x128xf32, #tpu.memory_space<vmem>>) attributes {dimension_semantics = [#tpu.dimension_semantics<parallel>], iteration_bounds = array<i64: 2>, scalar_prefetch = 0 : i64, scratch_operands = 0 : i64, tpu.core_type = #tpu.core_type<tc>, window_params = [{transform_indices = @transform_0, window_bounds = array<i64: 2, 8, 32>}, {transform_indices = @transform_1, window_bounds = array<i64: 2, 16, 32>}, {pipeline_mode = #tpu.pipeline_mode<synchronous>, transform_indices = @transform_2, window_bounds = array<i64: 32, 64>}, {pipeline_mode = #tpu.pipeline_mode<synchronous>, transform_indices = @transform_3, window_bounds = array<i64: 64, 32>}, {pipeline_mode = #tpu.pipeline_mode<synchronous>, transform_indices = @transform_4, window_bounds = array<i64: 32, 64>}, {pipeline_mode = #tpu.pipeline_mode<synchronous>, transform_indices = @transform_5, window_bounds = array<i64: 64, 128>}, {pipeline_mode = #tpu.pipeline_mode<synchronous>, transform_indices = @transform_6, window_bounds = array<i64: 1, 128>}, {pipeline_mode = #tpu.pipeline_mode<synchronous>, transform_indices = @transform_7, window_bounds = array<i64: 32, 96>}, {pipeline_mode = #tpu.pipeline_mode<synchronous>, transform_indices = @transform_8, window_bounds = array<i64: 1, 96>}, {pipeline_mode = #tpu.pipeline_mode<synchronous>, transform_indices = @transform_9, window_bounds = array<i64: 32, 32>}, {pipeline_mode = #tpu.pipeline_mode<synchronous>, transform_indices = @transform_10, window_bounds = array<i64: 32, 96>}, {pipeline_mode = #tpu.pipeline_mode<synchronous>, transform_indices = @transform_11, window_bounds = array<i64: 1, 96>}, {pipeline_mode = #tpu.pipeline_mode<synchronous>, transform_indices = @transform_12, window_bounds = array<i64: 32, 32>}, {pipeline_mode = #tpu.pipeline_mode<synchronous>, transform_indices = @transform_13, window_bounds = array<i64: 9, 32>}, {pipeline_mode = #tpu.pipeline_mode<synchronous>, transform_indices = @transform_14, window_bounds = array<i64: 2, 64>}, {transform_indices = @transform_15, window_bounds = array<i64: 1, 2, 128>}]} {
    %c0 = arith.constant 0 : index
    %c0_0 = arith.constant 0 : index
    %0 = vector.load %arg14[%c0, %c0_0] : memref<9x32xf32, #tpu.memory_space<vmem>>, vector<9x32xf32>
    %1 = vector.extract_strided_slice %0 {offsets = [0, 0], sizes = [1, 32], strides = [1, 1]} : vector<9x32xf32> to vector<1x32xf32>
    %2 = vector.extract_strided_slice %0 {offsets = [1, 0], sizes = [1, 32], strides = [1, 1]} : vector<9x32xf32> to vector<1x32xf32>
    %3 = vector.extract_strided_slice %0 {offsets = [2, 0], sizes = [1, 32], strides = [1, 1]} : vector<9x32xf32> to vector<1x32xf32>
    %4 = vector.extract_strided_slice %0 {offsets = [3, 0], sizes = [1, 32], strides = [1, 1]} : vector<9x32xf32> to vector<1x32xf32>
    %5 = vector.extract_strided_slice %0 {offsets = [4, 0], sizes = [1, 32], strides = [1, 1]} : vector<9x32xf32> to vector<1x32xf32>
    %6 = vector.extract_strided_slice %0 {offsets = [5, 0], sizes = [1, 32], strides = [1, 1]} : vector<9x32xf32> to vector<1x32xf32>
    %7 = vector.extract_strided_slice %0 {offsets = [6, 0], sizes = [1, 32], strides = [1, 1]} : vector<9x32xf32> to vector<1x32xf32>
    %8 = vector.extract_strided_slice %0 {offsets = [7, 0], sizes = [1, 32], strides = [1, 1]} : vector<9x32xf32> to vector<1x32xf32>
    %9 = vector.extract_strided_slice %0 {offsets = [8, 0], sizes = [1, 32], strides = [1, 1]} : vector<9x32xf32> to vector<1x32xf32>
    %c0_1 = arith.constant 0 : index
    %c0_2 = arith.constant 0 : index
    %10 = vector.load %arg15[%c0_1, %c0_2] : memref<2x64xf32, #tpu.memory_space<vmem>>, vector<2x64xf32>
    %11 = vector.extract_strided_slice %10 {offsets = [0, 0], sizes = [1, 64], strides = [1, 1]} : vector<2x64xf32> to vector<1x64xf32>
    %12 = vector.extract_strided_slice %10 {offsets = [1, 0], sizes = [1, 64], strides = [1, 1]} : vector<2x64xf32> to vector<1x64xf32>
    %c0_3 = arith.constant 0 : index
    %c0_4 = arith.constant 0 : index
    %c0_5 = arith.constant 0 : index
    %13 = vector.load %arg1[%c0_3, %c0_4, %c0_5] : memref<2x8x32xf32, #tpu.memory_space<vmem>>, vector<2x8x32xf32>
    %14 = vector.shape_cast %13 : vector<2x8x32xf32> to vector<16x32xf32>
    %c0_6 = arith.constant 0 : index
    %c0_7 = arith.constant 0 : index
    %c0_8 = arith.constant 0 : index
    %15 = vector.load %arg2[%c0_6, %c0_7, %c0_8] : memref<2x16x32xf32, #tpu.memory_space<vmem>>, vector<2x16x32xf32>
    %16 = vector.shape_cast %15 : vector<2x16x32xf32> to vector<32x32xf32>
    %c0_9 = arith.constant 0 : index
    %c0_10 = arith.constant 0 : index
    %17 = vector.load %arg3[%c0_9, %c0_10] : memref<32x64xf32, #tpu.memory_space<vmem>>, vector<32x64xf32>
    %cst = arith.constant dense<0.000000e+00> : vector<16x64xf32>
    %18 = tpu.matmul %14, %17, %cst {dimension_numbers = #tpu.dot_dimension_numbers<[1], [0], [0], [1], [0, 0, 1, 1], [], []>} : vector<16x32xf32>, vector<32x64xf32>, vector<16x64xf32> -> vector<16x64xf32>
    %19 = vector.broadcast %11 : vector<1x64xf32> to vector<16x64xf32>
    %20 = arith.addf %18, %19 : vector<16x64xf32>
    %cst_11 = arith.constant 5.000000e-01 : f32
    %21 = vector.broadcast %cst_11 : f32 to vector<16x64xf32>
    %22 = arith.mulf %21, %20 : vector<16x64xf32>
    %cst_12 = arith.constant 1.41421354 : f32
    %23 = vector.broadcast %cst_12 : f32 to vector<16x64xf32>
    %24 = arith.divf %20, %23 : vector<16x64xf32>
    %25 = math.erf %24 : vector<16x64xf32>
    %cst_13 = arith.constant 1.000000e+00 : f32
    %26 = vector.broadcast %cst_13 : f32 to vector<16x64xf32>
    %27 = arith.addf %26, %25 : vector<16x64xf32>
    %28 = arith.mulf %22, %27 : vector<16x64xf32>
    %c0_14 = arith.constant 0 : index
    %c0_15 = arith.constant 0 : index
    %29 = vector.load %arg4[%c0_14, %c0_15] : memref<64x32xf32, #tpu.memory_space<vmem>>, vector<64x32xf32>
    %cst_16 = arith.constant dense<0.000000e+00> : vector<16x32xf32>
    %30 = tpu.matmul %28, %29, %cst_16 {dimension_numbers = #tpu.dot_dimension_numbers<[1], [0], [0], [1], [0, 0, 1, 1], [], []>} : vector<16x64xf32>, vector<64x32xf32>, vector<16x32xf32> -> vector<16x32xf32>
    %31 = vector.broadcast %1 : vector<1x32xf32> to vector<16x32xf32>
    %32 = arith.addf %30, %31 : vector<16x32xf32>
    %cst_17 = arith.constant dense<0.000000e+00> : vector<16xf32>
    %33 = vector.multi_reduction <add>, %32, %cst_17 [1] : vector<16x32xf32> to vector<16xf32>
    %34 = vector.shape_cast %33 : vector<16xf32> to vector<16x1xf32>
    %cst_18 = arith.constant 3.200000e+01 : f32
    %35 = vector.broadcast %cst_18 : f32 to vector<16x1xf32>
    %36 = arith.divf %34, %35 : vector<16x1xf32>
    %37 = vector.broadcast %36 : vector<16x1xf32> to vector<16x32xf32>
    %38 = arith.subf %32, %37 : vector<16x32xf32>
    %39 = arith.mulf %38, %38 : vector<16x32xf32>
    %cst_19 = arith.constant dense<0.000000e+00> : vector<16xf32>
    %40 = vector.multi_reduction <add>, %39, %cst_19 [1] : vector<16x32xf32> to vector<16xf32>
    %41 = vector.shape_cast %40 : vector<16xf32> to vector<16x1xf32>
    %cst_20 = arith.constant 3.200000e+01 : f32
    %42 = vector.broadcast %cst_20 : f32 to vector<16x1xf32>
    %43 = arith.divf %41, %42 : vector<16x1xf32>
    %44 = vector.broadcast %36 : vector<16x1xf32> to vector<16x32xf32>
    %45 = arith.subf %32, %44 : vector<16x32xf32>
    %cst_21 = arith.constant 9.99999974E-6 : f32
    %46 = vector.broadcast %cst_21 : f32 to vector<16x1xf32>
    %47 = arith.addf %43, %46 : vector<16x1xf32>
    %48 = math.rsqrt %47 : vector<16x1xf32>
    %49 = vector.broadcast %48 : vector<16x1xf32> to vector<16x32xf32>
    %50 = arith.mulf %45, %49 : vector<16x32xf32>
    %51 = vector.broadcast %4 : vector<1x32xf32> to vector<16x32xf32>
    %52 = arith.mulf %50, %51 : vector<16x32xf32>
    %53 = vector.broadcast %5 : vector<1x32xf32> to vector<16x32xf32>
    %54 = arith.addf %52, %53 : vector<16x32xf32>
    %c0_22 = arith.constant 0 : index
    %c0_23 = arith.constant 0 : index
    %55 = vector.load %arg8[%c0_22, %c0_23] : memref<32x96xf32, #tpu.memory_space<vmem>>, vector<32x96xf32>
    %c0_24 = arith.constant 0 : index
    %c0_25 = arith.constant 0 : index
    %56 = vector.load %arg9[%c0_24, %c0_25] : memref<1x96xf32, #tpu.memory_space<vmem>>, vector<1x96xf32>
    %57 = vector.extract_strided_slice %55 {offsets = [0, 0], sizes = [32, 32], strides = [1, 1]} : vector<32x96xf32> to vector<32x32xf32>
    %cst_26 = arith.constant dense<0.000000e+00> : vector<16x32xf32>
    %58 = tpu.matmul %54, %57, %cst_26 {dimension_numbers = #tpu.dot_dimension_numbers<[1], [0], [0], [1], [0, 0, 1, 1], [], []>} : vector<16x32xf32>, vector<32x32xf32>, vector<16x32xf32> -> vector<16x32xf32>
    %59 = vector.extract_strided_slice %56 {offsets = [0, 0], sizes = [1, 32], strides = [1, 1]} : vector<1x96xf32> to vector<1x32xf32>
    %60 = vector.broadcast %59 : vector<1x32xf32> to vector<16x32xf32>
    %61 = arith.addf %58, %60 : vector<16x32xf32>
    %62 = vector.extract_strided_slice %55 {offsets = [0, 32], sizes = [32, 64], strides = [1, 1]} : vector<32x96xf32> to vector<32x64xf32>
    %cst_27 = arith.constant dense<0.000000e+00> : vector<32x64xf32>
    %63 = tpu.matmul %16, %62, %cst_27 {dimension_numbers = #tpu.dot_dimension_numbers<[1], [0], [0], [1], [0, 0, 1, 1], [], []>} : vector<32x32xf32>, vector<32x64xf32>, vector<32x64xf32> -> vector<32x64xf32>
    %64 = vector.extract_strided_slice %56 {offsets = [0, 32], sizes = [1, 64], strides = [1, 1]} : vector<1x96xf32> to vector<1x64xf32>
    %65 = vector.broadcast %64 : vector<1x64xf32> to vector<32x64xf32>
    %66 = arith.addf %63, %65 : vector<32x64xf32>
    %67 = vector.shape_cast %61 : vector<16x32xf32> to vector<2x8x32xf32>
    %68 = vector.extract_strided_slice %66 {offsets = [0, 0], sizes = [32, 32], strides = [1, 1]} : vector<32x64xf32> to vector<32x32xf32>
    %69 = vector.shape_cast %68 : vector<32x32xf32> to vector<2x16x32xf32>
    %70 = vector.extract_strided_slice %66 {offsets = [0, 32], sizes = [32, 32], strides = [1, 1]} : vector<32x64xf32> to vector<32x32xf32>
    %71 = vector.shape_cast %70 : vector<32x32xf32> to vector<2x16x32xf32>
    %72 = vector.extract_strided_slice %67 {offsets = [0, 0, 0], sizes = [2, 8, 8], strides = [1, 1, 1]} : vector<2x8x32xf32> to vector<2x8x8xf32>
    %73 = vector.extract_strided_slice %69 {offsets = [0, 0, 0], sizes = [2, 16, 8], strides = [1, 1, 1]} : vector<2x16x32xf32> to vector<2x16x8xf32>
    %74 = vector.extract_strided_slice %71 {offsets = [0, 0, 0], sizes = [2, 16, 8], strides = [1, 1, 1]} : vector<2x16x32xf32> to vector<2x16x8xf32>
    "tpu.trace_start"() <{level = 10 : i32, message = "bqd,bkd->bqk"}> : () -> ()
    %cst_28 = arith.constant dense<0.000000e+00> : vector<2x8x16xf32>
    %75 = tpu.matmul %72, %73, %cst_28 {dimension_numbers = #tpu.dot_dimension_numbers<[2], [2], [1], [1], [0, 0, 0, 1, 1, 1], [0], [0]>} : vector<2x8x8xf32>, vector<2x16x8xf32>, vector<2x8x16xf32> -> vector<2x8x16xf32>
    "tpu.trace_stop"() : () -> ()
    %cst_29 = arith.constant 0.353553385 : f32
    %76 = vector.broadcast %cst_29 : f32 to vector<2x8x16xf32>
    %77 = arith.mulf %75, %76 : vector<2x8x16xf32>
    %cst_30 = arith.constant dense<0xFF800000> : vector<2x8xf32>
    %78 = vector.multi_reduction <maximumf>, %77, %cst_30 [2] : vector<2x8x16xf32> to vector<2x8xf32>
    %79 = vector.shape_cast %78 : vector<2x8xf32> to vector<2x8x1xf32>
    %80 = vector.broadcast %79 : vector<2x8x1xf32> to vector<2x8x16xf32>
    %81 = arith.subf %77, %80 : vector<2x8x16xf32>
    %82 = math.exp %81 : vector<2x8x16xf32>
    %cst_31 = arith.constant dense<0.000000e+00> : vector<2x8xf32>
    %83 = vector.multi_reduction <add>, %82, %cst_31 [2] : vector<2x8x16xf32> to vector<2x8xf32>
    %84 = vector.shape_cast %83 : vector<2x8xf32> to vector<2x8x1xf32>
    "tpu.trace_start"() <{level = 10 : i32, message = "bqk,bkd->bqd"}> : () -> ()
    %cst_32 = arith.constant dense<0.000000e+00> : vector<2x8x8xf32>
    %85 = tpu.matmul %82, %74, %cst_32 {dimension_numbers = #tpu.dot_dimension_numbers<[2], [1], [1], [2], [0, 0, 0, 1, 1, 2], [0], [0]>} : vector<2x8x16xf32>, vector<2x16x8xf32>, vector<2x8x8xf32> -> vector<2x8x8xf32>
    "tpu.trace_stop"() : () -> ()
    %86 = tpu.reciprocal %84 {approx = true} : vector<2x8x1xf32> -> vector<2x8x1xf32>
    %87 = vector.broadcast %86 : vector<2x8x1xf32> to vector<2x8x8xf32>
    %88 = arith.mulf %85, %87 : vector<2x8x8xf32>
    %89 = vector.extract_strided_slice %67 {offsets = [0, 0, 8], sizes = [2, 8, 8], strides = [1, 1, 1]} : vector<2x8x32xf32> to vector<2x8x8xf32>
    %90 = vector.extract_strided_slice %69 {offsets = [0, 0, 8], sizes = [2, 16, 8], strides = [1, 1, 1]} : vector<2x16x32xf32> to vector<2x16x8xf32>
    %91 = vector.extract_strided_slice %71 {offsets = [0, 0, 8], sizes = [2, 16, 8], strides = [1, 1, 1]} : vector<2x16x32xf32> to vector<2x16x8xf32>
    "tpu.trace_start"() <{level = 10 : i32, message = "bqd,bkd->bqk"}> : () -> ()
    %cst_33 = arith.constant dense<0.000000e+00> : vector<2x8x16xf32>
    %92 = tpu.matmul %89, %90, %cst_33 {dimension_numbers = #tpu.dot_dimension_numbers<[2], [2], [1], [1], [0, 0, 0, 1, 1, 1], [0], [0]>} : vector<2x8x8xf32>, vector<2x16x8xf32>, vector<2x8x16xf32> -> vector<2x8x16xf32>
    "tpu.trace_stop"() : () -> ()
    %cst_34 = arith.constant 0.353553385 : f32
    %93 = vector.broadcast %cst_34 : f32 to vector<2x8x16xf32>
    %94 = arith.mulf %92, %93 : vector<2x8x16xf32>
    %cst_35 = arith.constant dense<0xFF800000> : vector<2x8xf32>
    %95 = vector.multi_reduction <maximumf>, %94, %cst_35 [2] : vector<2x8x16xf32> to vector<2x8xf32>
    %96 = vector.shape_cast %95 : vector<2x8xf32> to vector<2x8x1xf32>
    %97 = vector.broadcast %96 : vector<2x8x1xf32> to vector<2x8x16xf32>
    %98 = arith.subf %94, %97 : vector<2x8x16xf32>
    %99 = math.exp %98 : vector<2x8x16xf32>
    %cst_36 = arith.constant dense<0.000000e+00> : vector<2x8xf32>
    %100 = vector.multi_reduction <add>, %99, %cst_36 [2] : vector<2x8x16xf32> to vector<2x8xf32>
    %101 = vector.shape_cast %100 : vector<2x8xf32> to vector<2x8x1xf32>
    "tpu.trace_start"() <{level = 10 : i32, message = "bqk,bkd->bqd"}> : () -> ()
    %cst_37 = arith.constant dense<0.000000e+00> : vector<2x8x8xf32>
    %102 = tpu.matmul %99, %91, %cst_37 {dimension_numbers = #tpu.dot_dimension_numbers<[2], [1], [1], [2], [0, 0, 0, 1, 1, 2], [0], [0]>} : vector<2x8x16xf32>, vector<2x16x8xf32>, vector<2x8x8xf32> -> vector<2x8x8xf32>
    "tpu.trace_stop"() : () -> ()
    %103 = tpu.reciprocal %101 {approx = true} : vector<2x8x1xf32> -> vector<2x8x1xf32>
    %104 = vector.broadcast %103 : vector<2x8x1xf32> to vector<2x8x8xf32>
    %105 = arith.mulf %102, %104 : vector<2x8x8xf32>
    %106 = vector.extract_strided_slice %67 {offsets = [0, 0, 16], sizes = [2, 8, 8], strides = [1, 1, 1]} : vector<2x8x32xf32> to vector<2x8x8xf32>
    %107 = vector.extract_strided_slice %69 {offsets = [0, 0, 16], sizes = [2, 16, 8], strides = [1, 1, 1]} : vector<2x16x32xf32> to vector<2x16x8xf32>
    %108 = vector.extract_strided_slice %71 {offsets = [0, 0, 16], sizes = [2, 16, 8], strides = [1, 1, 1]} : vector<2x16x32xf32> to vector<2x16x8xf32>
    "tpu.trace_start"() <{level = 10 : i32, message = "bqd,bkd->bqk"}> : () -> ()
    %cst_38 = arith.constant dense<0.000000e+00> : vector<2x8x16xf32>
    %109 = tpu.matmul %106, %107, %cst_38 {dimension_numbers = #tpu.dot_dimension_numbers<[2], [2], [1], [1], [0, 0, 0, 1, 1, 1], [0], [0]>} : vector<2x8x8xf32>, vector<2x16x8xf32>, vector<2x8x16xf32> -> vector<2x8x16xf32>
    "tpu.trace_stop"() : () -> ()
    %cst_39 = arith.constant 0.353553385 : f32
    %110 = vector.broadcast %cst_39 : f32 to vector<2x8x16xf32>
    %111 = arith.mulf %109, %110 : vector<2x8x16xf32>
    %cst_40 = arith.constant dense<0xFF800000> : vector<2x8xf32>
    %112 = vector.multi_reduction <maximumf>, %111, %cst_40 [2] : vector<2x8x16xf32> to vector<2x8xf32>
    %113 = vector.shape_cast %112 : vector<2x8xf32> to vector<2x8x1xf32>
    %114 = vector.broadcast %113 : vector<2x8x1xf32> to vector<2x8x16xf32>
    %115 = arith.subf %111, %114 : vector<2x8x16xf32>
    %116 = math.exp %115 : vector<2x8x16xf32>
    %cst_41 = arith.constant dense<0.000000e+00> : vector<2x8xf32>
    %117 = vector.multi_reduction <add>, %116, %cst_41 [2] : vector<2x8x16xf32> to vector<2x8xf32>
    %118 = vector.shape_cast %117 : vector<2x8xf32> to vector<2x8x1xf32>
    "tpu.trace_start"() <{level = 10 : i32, message = "bqk,bkd->bqd"}> : () -> ()
    %cst_42 = arith.constant dense<0.000000e+00> : vector<2x8x8xf32>
    %119 = tpu.matmul %116, %108, %cst_42 {dimension_numbers = #tpu.dot_dimension_numbers<[2], [1], [1], [2], [0, 0, 0, 1, 1, 2], [0], [0]>} : vector<2x8x16xf32>, vector<2x16x8xf32>, vector<2x8x8xf32> -> vector<2x8x8xf32>
    "tpu.trace_stop"() : () -> ()
    %120 = tpu.reciprocal %118 {approx = true} : vector<2x8x1xf32> -> vector<2x8x1xf32>
    %121 = vector.broadcast %120 : vector<2x8x1xf32> to vector<2x8x8xf32>
    %122 = arith.mulf %119, %121 : vector<2x8x8xf32>
    %123 = vector.extract_strided_slice %67 {offsets = [0, 0, 24], sizes = [2, 8, 8], strides = [1, 1, 1]} : vector<2x8x32xf32> to vector<2x8x8xf32>
    %124 = vector.extract_strided_slice %69 {offsets = [0, 0, 24], sizes = [2, 16, 8], strides = [1, 1, 1]} : vector<2x16x32xf32> to vector<2x16x8xf32>
    %125 = vector.extract_strided_slice %71 {offsets = [0, 0, 24], sizes = [2, 16, 8], strides = [1, 1, 1]} : vector<2x16x32xf32> to vector<2x16x8xf32>
    "tpu.trace_start"() <{level = 10 : i32, message = "bqd,bkd->bqk"}> : () -> ()
    %cst_43 = arith.constant dense<0.000000e+00> : vector<2x8x16xf32>
    %126 = tpu.matmul %123, %124, %cst_43 {dimension_numbers = #tpu.dot_dimension_numbers<[2], [2], [1], [1], [0, 0, 0, 1, 1, 1], [0], [0]>} : vector<2x8x8xf32>, vector<2x16x8xf32>, vector<2x8x16xf32> -> vector<2x8x16xf32>
    "tpu.trace_stop"() : () -> ()
    %cst_44 = arith.constant 0.353553385 : f32
    %127 = vector.broadcast %cst_44 : f32 to vector<2x8x16xf32>
    %128 = arith.mulf %126, %127 : vector<2x8x16xf32>
    %cst_45 = arith.constant dense<0xFF800000> : vector<2x8xf32>
    %129 = vector.multi_reduction <maximumf>, %128, %cst_45 [2] : vector<2x8x16xf32> to vector<2x8xf32>
    %130 = vector.shape_cast %129 : vector<2x8xf32> to vector<2x8x1xf32>
    %131 = vector.broadcast %130 : vector<2x8x1xf32> to vector<2x8x16xf32>
    %132 = arith.subf %128, %131 : vector<2x8x16xf32>
    %133 = math.exp %132 : vector<2x8x16xf32>
    %cst_46 = arith.constant dense<0.000000e+00> : vector<2x8xf32>
    %134 = vector.multi_reduction <add>, %133, %cst_46 [2] : vector<2x8x16xf32> to vector<2x8xf32>
    %135 = vector.shape_cast %134 : vector<2x8xf32> to vector<2x8x1xf32>
    "tpu.trace_start"() <{level = 10 : i32, message = "bqk,bkd->bqd"}> : () -> ()
    %cst_47 = arith.constant dense<0.000000e+00> : vector<2x8x8xf32>
    %136 = tpu.matmul %133, %125, %cst_47 {dimension_numbers = #tpu.dot_dimension_numbers<[2], [1], [1], [2], [0, 0, 0, 1, 1, 2], [0], [0]>} : vector<2x8x16xf32>, vector<2x16x8xf32>, vector<2x8x8xf32> -> vector<2x8x8xf32>
    "tpu.trace_stop"() : () -> ()
    %137 = tpu.reciprocal %135 {approx = true} : vector<2x8x1xf32> -> vector<2x8x1xf32>
    %138 = vector.broadcast %137 : vector<2x8x1xf32> to vector<2x8x8xf32>
    %139 = arith.mulf %136, %138 : vector<2x8x8xf32>
    %140 = tpu.concatenate %88, %105, %122, %139 in 2 : vector<2x8x8xf32>, vector<2x8x8xf32>, vector<2x8x8xf32>, vector<2x8x8xf32> -> vector<2x8x32xf32>
    %141 = vector.shape_cast %140 : vector<2x8x32xf32> to vector<16x32xf32>
    %c0_48 = arith.constant 0 : index
    %c0_49 = arith.constant 0 : index
    %142 = vector.load %arg10[%c0_48, %c0_49] : memref<32x32xf32, #tpu.memory_space<vmem>>, vector<32x32xf32>
    %cst_50 = arith.constant dense<0.000000e+00> : vector<16x32xf32>
    %143 = tpu.matmul %141, %142, %cst_50 {dimension_numbers = #tpu.dot_dimension_numbers<[1], [0], [0], [1], [0, 0, 1, 1], [], []>} : vector<16x32xf32>, vector<32x32xf32>, vector<16x32xf32> -> vector<16x32xf32>
    %144 = vector.broadcast %2 : vector<1x32xf32> to vector<16x32xf32>
    %145 = arith.addf %143, %144 : vector<16x32xf32>
    %146 = arith.addf %54, %145 : vector<16x32xf32>
    %cst_51 = arith.constant dense<0.000000e+00> : vector<16xf32>
    %147 = vector.multi_reduction <add>, %146, %cst_51 [1] : vector<16x32xf32> to vector<16xf32>
    %148 = vector.shape_cast %147 : vector<16xf32> to vector<16x1xf32>
    %cst_52 = arith.constant 3.200000e+01 : f32
    %149 = vector.broadcast %cst_52 : f32 to vector<16x1xf32>
    %150 = arith.divf %148, %149 : vector<16x1xf32>
    %151 = vector.broadcast %150 : vector<16x1xf32> to vector<16x32xf32>
    %152 = arith.subf %146, %151 : vector<16x32xf32>
    %153 = arith.mulf %152, %152 : vector<16x32xf32>
    %cst_53 = arith.constant dense<0.000000e+00> : vector<16xf32>
    %154 = vector.multi_reduction <add>, %153, %cst_53 [1] : vector<16x32xf32> to vector<16xf32>
    %155 = vector.shape_cast %154 : vector<16xf32> to vector<16x1xf32>
    %cst_54 = arith.constant 3.200000e+01 : f32
    %156 = vector.broadcast %cst_54 : f32 to vector<16x1xf32>
    %157 = arith.divf %155, %156 : vector<16x1xf32>
    %158 = vector.broadcast %150 : vector<16x1xf32> to vector<16x32xf32>
    %159 = arith.subf %146, %158 : vector<16x32xf32>
    %cst_55 = arith.constant 9.99999974E-6 : f32
    %160 = vector.broadcast %cst_55 : f32 to vector<16x1xf32>
    %161 = arith.addf %157, %160 : vector<16x1xf32>
    %162 = math.rsqrt %161 : vector<16x1xf32>
    %163 = vector.broadcast %162 : vector<16x1xf32> to vector<16x32xf32>
    %164 = arith.mulf %159, %163 : vector<16x32xf32>
    %165 = vector.broadcast %6 : vector<1x32xf32> to vector<16x32xf32>
    %166 = arith.mulf %164, %165 : vector<16x32xf32>
    %167 = vector.broadcast %7 : vector<1x32xf32> to vector<16x32xf32>
    %168 = arith.addf %166, %167 : vector<16x32xf32>
    %c0_56 = arith.constant 0 : index
    %c0_57 = arith.constant 0 : index
    %169 = vector.load %arg11[%c0_56, %c0_57] : memref<32x96xf32, #tpu.memory_space<vmem>>, vector<32x96xf32>
    %cst_58 = arith.constant dense<0.000000e+00> : vector<16x96xf32>
    %170 = tpu.matmul %168, %169, %cst_58 {dimension_numbers = #tpu.dot_dimension_numbers<[1], [0], [0], [1], [0, 0, 1, 1], [], []>} : vector<16x32xf32>, vector<32x96xf32>, vector<16x96xf32> -> vector<16x96xf32>
    %c0_59 = arith.constant 0 : index
    %c0_60 = arith.constant 0 : index
    %171 = vector.load %arg12[%c0_59, %c0_60] : memref<1x96xf32, #tpu.memory_space<vmem>>, vector<1x96xf32>
    %172 = vector.broadcast %171 : vector<1x96xf32> to vector<16x96xf32>
    %173 = arith.addf %170, %172 : vector<16x96xf32>
    %174 = vector.extract_strided_slice %173 {offsets = [0, 0], sizes = [16, 32], strides = [1, 1]} : vector<16x96xf32> to vector<16x32xf32>
    %175 = vector.shape_cast %174 : vector<16x32xf32> to vector<2x8x32xf32>
    %176 = vector.extract_strided_slice %173 {offsets = [0, 32], sizes = [16, 32], strides = [1, 1]} : vector<16x96xf32> to vector<16x32xf32>
    %177 = vector.shape_cast %176 : vector<16x32xf32> to vector<2x8x32xf32>
    %178 = vector.extract_strided_slice %173 {offsets = [0, 64], sizes = [16, 32], strides = [1, 1]} : vector<16x96xf32> to vector<16x32xf32>
    %179 = vector.shape_cast %178 : vector<16x32xf32> to vector<2x8x32xf32>
    %180 = vector.extract_strided_slice %175 {offsets = [0, 0, 0], sizes = [2, 8, 8], strides = [1, 1, 1]} : vector<2x8x32xf32> to vector<2x8x8xf32>
    %181 = vector.extract_strided_slice %177 {offsets = [0, 0, 0], sizes = [2, 8, 8], strides = [1, 1, 1]} : vector<2x8x32xf32> to vector<2x8x8xf32>
    %182 = vector.extract_strided_slice %179 {offsets = [0, 0, 0], sizes = [2, 8, 8], strides = [1, 1, 1]} : vector<2x8x32xf32> to vector<2x8x8xf32>
    "tpu.trace_start"() <{level = 10 : i32, message = "bqd,bkd->bqk"}> : () -> ()
    %cst_61 = arith.constant dense<0.000000e+00> : vector<2x8x8xf32>
    %183 = tpu.matmul %180, %181, %cst_61 {dimension_numbers = #tpu.dot_dimension_numbers<[2], [2], [1], [1], [0, 0, 0, 1, 1, 1], [0], [0]>} : vector<2x8x8xf32>, vector<2x8x8xf32>, vector<2x8x8xf32> -> vector<2x8x8xf32>
    "tpu.trace_stop"() : () -> ()
    %cst_62 = arith.constant 0.353553385 : f32
    %184 = vector.broadcast %cst_62 : f32 to vector<2x8x8xf32>
    %185 = arith.mulf %183, %184 : vector<2x8x8xf32>
    %cst_63 = arith.constant dense<0xFF800000> : vector<2x8xf32>
    %186 = vector.multi_reduction <maximumf>, %185, %cst_63 [2] : vector<2x8x8xf32> to vector<2x8xf32>
    %187 = vector.shape_cast %186 : vector<2x8xf32> to vector<2x8x1xf32>
    %188 = vector.broadcast %187 : vector<2x8x1xf32> to vector<2x8x8xf32>
    %189 = arith.subf %185, %188 : vector<2x8x8xf32>
    %190 = math.exp %189 : vector<2x8x8xf32>
    %cst_64 = arith.constant dense<0.000000e+00> : vector<2x8xf32>
    %191 = vector.multi_reduction <add>, %190, %cst_64 [2] : vector<2x8x8xf32> to vector<2x8xf32>
    %192 = vector.shape_cast %191 : vector<2x8xf32> to vector<2x8x1xf32>
    "tpu.trace_start"() <{level = 10 : i32, message = "bqk,bkd->bqd"}> : () -> ()
    %cst_65 = arith.constant dense<0.000000e+00> : vector<2x8x8xf32>
    %193 = tpu.matmul %190, %182, %cst_65 {dimension_numbers = #tpu.dot_dimension_numbers<[2], [1], [1], [2], [0, 0, 0, 1, 1, 2], [0], [0]>} : vector<2x8x8xf32>, vector<2x8x8xf32>, vector<2x8x8xf32> -> vector<2x8x8xf32>
    "tpu.trace_stop"() : () -> ()
    %194 = tpu.reciprocal %192 {approx = true} : vector<2x8x1xf32> -> vector<2x8x1xf32>
    %195 = vector.broadcast %194 : vector<2x8x1xf32> to vector<2x8x8xf32>
    %196 = arith.mulf %193, %195 : vector<2x8x8xf32>
    %197 = vector.extract_strided_slice %175 {offsets = [0, 0, 8], sizes = [2, 8, 8], strides = [1, 1, 1]} : vector<2x8x32xf32> to vector<2x8x8xf32>
    %198 = vector.extract_strided_slice %177 {offsets = [0, 0, 8], sizes = [2, 8, 8], strides = [1, 1, 1]} : vector<2x8x32xf32> to vector<2x8x8xf32>
    %199 = vector.extract_strided_slice %179 {offsets = [0, 0, 8], sizes = [2, 8, 8], strides = [1, 1, 1]} : vector<2x8x32xf32> to vector<2x8x8xf32>
    "tpu.trace_start"() <{level = 10 : i32, message = "bqd,bkd->bqk"}> : () -> ()
    %cst_66 = arith.constant dense<0.000000e+00> : vector<2x8x8xf32>
    %200 = tpu.matmul %197, %198, %cst_66 {dimension_numbers = #tpu.dot_dimension_numbers<[2], [2], [1], [1], [0, 0, 0, 1, 1, 1], [0], [0]>} : vector<2x8x8xf32>, vector<2x8x8xf32>, vector<2x8x8xf32> -> vector<2x8x8xf32>
    "tpu.trace_stop"() : () -> ()
    %cst_67 = arith.constant 0.353553385 : f32
    %201 = vector.broadcast %cst_67 : f32 to vector<2x8x8xf32>
    %202 = arith.mulf %200, %201 : vector<2x8x8xf32>
    %cst_68 = arith.constant dense<0xFF800000> : vector<2x8xf32>
    %203 = vector.multi_reduction <maximumf>, %202, %cst_68 [2] : vector<2x8x8xf32> to vector<2x8xf32>
    %204 = vector.shape_cast %203 : vector<2x8xf32> to vector<2x8x1xf32>
    %205 = vector.broadcast %204 : vector<2x8x1xf32> to vector<2x8x8xf32>
    %206 = arith.subf %202, %205 : vector<2x8x8xf32>
    %207 = math.exp %206 : vector<2x8x8xf32>
    %cst_69 = arith.constant dense<0.000000e+00> : vector<2x8xf32>
    %208 = vector.multi_reduction <add>, %207, %cst_69 [2] : vector<2x8x8xf32> to vector<2x8xf32>
    %209 = vector.shape_cast %208 : vector<2x8xf32> to vector<2x8x1xf32>
    "tpu.trace_start"() <{level = 10 : i32, message = "bqk,bkd->bqd"}> : () -> ()
    %cst_70 = arith.constant dense<0.000000e+00> : vector<2x8x8xf32>
    %210 = tpu.matmul %207, %199, %cst_70 {dimension_numbers = #tpu.dot_dimension_numbers<[2], [1], [1], [2], [0, 0, 0, 1, 1, 2], [0], [0]>} : vector<2x8x8xf32>, vector<2x8x8xf32>, vector<2x8x8xf32> -> vector<2x8x8xf32>
    "tpu.trace_stop"() : () -> ()
    %211 = tpu.reciprocal %209 {approx = true} : vector<2x8x1xf32> -> vector<2x8x1xf32>
    %212 = vector.broadcast %211 : vector<2x8x1xf32> to vector<2x8x8xf32>
    %213 = arith.mulf %210, %212 : vector<2x8x8xf32>
    %214 = vector.extract_strided_slice %175 {offsets = [0, 0, 16], sizes = [2, 8, 8], strides = [1, 1, 1]} : vector<2x8x32xf32> to vector<2x8x8xf32>
    %215 = vector.extract_strided_slice %177 {offsets = [0, 0, 16], sizes = [2, 8, 8], strides = [1, 1, 1]} : vector<2x8x32xf32> to vector<2x8x8xf32>
    %216 = vector.extract_strided_slice %179 {offsets = [0, 0, 16], sizes = [2, 8, 8], strides = [1, 1, 1]} : vector<2x8x32xf32> to vector<2x8x8xf32>
    "tpu.trace_start"() <{level = 10 : i32, message = "bqd,bkd->bqk"}> : () -> ()
    %cst_71 = arith.constant dense<0.000000e+00> : vector<2x8x8xf32>
    %217 = tpu.matmul %214, %215, %cst_71 {dimension_numbers = #tpu.dot_dimension_numbers<[2], [2], [1], [1], [0, 0, 0, 1, 1, 1], [0], [0]>} : vector<2x8x8xf32>, vector<2x8x8xf32>, vector<2x8x8xf32> -> vector<2x8x8xf32>
    "tpu.trace_stop"() : () -> ()
    %cst_72 = arith.constant 0.353553385 : f32
    %218 = vector.broadcast %cst_72 : f32 to vector<2x8x8xf32>
    %219 = arith.mulf %217, %218 : vector<2x8x8xf32>
    %cst_73 = arith.constant dense<0xFF800000> : vector<2x8xf32>
    %220 = vector.multi_reduction <maximumf>, %219, %cst_73 [2] : vector<2x8x8xf32> to vector<2x8xf32>
    %221 = vector.shape_cast %220 : vector<2x8xf32> to vector<2x8x1xf32>
    %222 = vector.broadcast %221 : vector<2x8x1xf32> to vector<2x8x8xf32>
    %223 = arith.subf %219, %222 : vector<2x8x8xf32>
    %224 = math.exp %223 : vector<2x8x8xf32>
    %cst_74 = arith.constant dense<0.000000e+00> : vector<2x8xf32>
    %225 = vector.multi_reduction <add>, %224, %cst_74 [2] : vector<2x8x8xf32> to vector<2x8xf32>
    %226 = vector.shape_cast %225 : vector<2x8xf32> to vector<2x8x1xf32>
    "tpu.trace_start"() <{level = 10 : i32, message = "bqk,bkd->bqd"}> : () -> ()
    %cst_75 = arith.constant dense<0.000000e+00> : vector<2x8x8xf32>
    %227 = tpu.matmul %224, %216, %cst_75 {dimension_numbers = #tpu.dot_dimension_numbers<[2], [1], [1], [2], [0, 0, 0, 1, 1, 2], [0], [0]>} : vector<2x8x8xf32>, vector<2x8x8xf32>, vector<2x8x8xf32> -> vector<2x8x8xf32>
    "tpu.trace_stop"() : () -> ()
    %228 = tpu.reciprocal %226 {approx = true} : vector<2x8x1xf32> -> vector<2x8x1xf32>
    %229 = vector.broadcast %228 : vector<2x8x1xf32> to vector<2x8x8xf32>
    %230 = arith.mulf %227, %229 : vector<2x8x8xf32>
    %231 = vector.extract_strided_slice %175 {offsets = [0, 0, 24], sizes = [2, 8, 8], strides = [1, 1, 1]} : vector<2x8x32xf32> to vector<2x8x8xf32>
    %232 = vector.extract_strided_slice %177 {offsets = [0, 0, 24], sizes = [2, 8, 8], strides = [1, 1, 1]} : vector<2x8x32xf32> to vector<2x8x8xf32>
    %233 = vector.extract_strided_slice %179 {offsets = [0, 0, 24], sizes = [2, 8, 8], strides = [1, 1, 1]} : vector<2x8x32xf32> to vector<2x8x8xf32>
    "tpu.trace_start"() <{level = 10 : i32, message = "bqd,bkd->bqk"}> : () -> ()
    %cst_76 = arith.constant dense<0.000000e+00> : vector<2x8x8xf32>
    %234 = tpu.matmul %231, %232, %cst_76 {dimension_numbers = #tpu.dot_dimension_numbers<[2], [2], [1], [1], [0, 0, 0, 1, 1, 1], [0], [0]>} : vector<2x8x8xf32>, vector<2x8x8xf32>, vector<2x8x8xf32> -> vector<2x8x8xf32>
    "tpu.trace_stop"() : () -> ()
    %cst_77 = arith.constant 0.353553385 : f32
    %235 = vector.broadcast %cst_77 : f32 to vector<2x8x8xf32>
    %236 = arith.mulf %234, %235 : vector<2x8x8xf32>
    %cst_78 = arith.constant dense<0xFF800000> : vector<2x8xf32>
    %237 = vector.multi_reduction <maximumf>, %236, %cst_78 [2] : vector<2x8x8xf32> to vector<2x8xf32>
    %238 = vector.shape_cast %237 : vector<2x8xf32> to vector<2x8x1xf32>
    %239 = vector.broadcast %238 : vector<2x8x1xf32> to vector<2x8x8xf32>
    %240 = arith.subf %236, %239 : vector<2x8x8xf32>
    %241 = math.exp %240 : vector<2x8x8xf32>
    %cst_79 = arith.constant dense<0.000000e+00> : vector<2x8xf32>
    %242 = vector.multi_reduction <add>, %241, %cst_79 [2] : vector<2x8x8xf32> to vector<2x8xf32>
    %243 = vector.shape_cast %242 : vector<2x8xf32> to vector<2x8x1xf32>
    "tpu.trace_start"() <{level = 10 : i32, message = "bqk,bkd->bqd"}> : () -> ()
    %cst_80 = arith.constant dense<0.000000e+00> : vector<2x8x8xf32>
    %244 = tpu.matmul %241, %233, %cst_80 {dimension_numbers = #tpu.dot_dimension_numbers<[2], [1], [1], [2], [0, 0, 0, 1, 1, 2], [0], [0]>} : vector<2x8x8xf32>, vector<2x8x8xf32>, vector<2x8x8xf32> -> vector<2x8x8xf32>
    "tpu.trace_stop"() : () -> ()
    %245 = tpu.reciprocal %243 {approx = true} : vector<2x8x1xf32> -> vector<2x8x1xf32>
    %246 = vector.broadcast %245 : vector<2x8x1xf32> to vector<2x8x8xf32>
    %247 = arith.mulf %244, %246 : vector<2x8x8xf32>
    %248 = tpu.concatenate %196, %213, %230, %247 in 2 : vector<2x8x8xf32>, vector<2x8x8xf32>, vector<2x8x8xf32>, vector<2x8x8xf32> -> vector<2x8x32xf32>
    %249 = vector.shape_cast %248 : vector<2x8x32xf32> to vector<16x32xf32>
    %c0_81 = arith.constant 0 : index
    %c0_82 = arith.constant 0 : index
    %250 = vector.load %arg13[%c0_81, %c0_82] : memref<32x32xf32, #tpu.memory_space<vmem>>, vector<32x32xf32>
    %cst_83 = arith.constant dense<0.000000e+00> : vector<16x32xf32>
    %251 = tpu.matmul %249, %250, %cst_83 {dimension_numbers = #tpu.dot_dimension_numbers<[1], [0], [0], [1], [0, 0, 1, 1], [], []>} : vector<16x32xf32>, vector<32x32xf32>, vector<16x32xf32> -> vector<16x32xf32>
    %252 = vector.broadcast %3 : vector<1x32xf32> to vector<16x32xf32>
    %253 = arith.addf %251, %252 : vector<16x32xf32>
    %254 = arith.addf %168, %253 : vector<16x32xf32>
    %cst_84 = arith.constant dense<0.000000e+00> : vector<16xf32>
    %255 = vector.multi_reduction <add>, %254, %cst_84 [1] : vector<16x32xf32> to vector<16xf32>
    %256 = vector.shape_cast %255 : vector<16xf32> to vector<16x1xf32>
    %cst_85 = arith.constant 3.200000e+01 : f32
    %257 = vector.broadcast %cst_85 : f32 to vector<16x1xf32>
    %258 = arith.divf %256, %257 : vector<16x1xf32>
    %259 = vector.broadcast %258 : vector<16x1xf32> to vector<16x32xf32>
    %260 = arith.subf %254, %259 : vector<16x32xf32>
    %261 = arith.mulf %260, %260 : vector<16x32xf32>
    %cst_86 = arith.constant dense<0.000000e+00> : vector<16xf32>
    %262 = vector.multi_reduction <add>, %261, %cst_86 [1] : vector<16x32xf32> to vector<16xf32>
    %263 = vector.shape_cast %262 : vector<16xf32> to vector<16x1xf32>
    %cst_87 = arith.constant 3.200000e+01 : f32
    %264 = vector.broadcast %cst_87 : f32 to vector<16x1xf32>
    %265 = arith.divf %263, %264 : vector<16x1xf32>
    %266 = vector.broadcast %258 : vector<16x1xf32> to vector<16x32xf32>
    %267 = arith.subf %254, %266 : vector<16x32xf32>
    %cst_88 = arith.constant 9.99999974E-6 : f32
    %268 = vector.broadcast %cst_88 : f32 to vector<16x1xf32>
    %269 = arith.addf %265, %268 : vector<16x1xf32>
    %270 = math.rsqrt %269 : vector<16x1xf32>
    %271 = vector.broadcast %270 : vector<16x1xf32> to vector<16x32xf32>
    %272 = arith.mulf %267, %271 : vector<16x32xf32>
    %273 = vector.broadcast %8 : vector<1x32xf32> to vector<16x32xf32>
    %274 = arith.mulf %272, %273 : vector<16x32xf32>
    %275 = vector.broadcast %9 : vector<1x32xf32> to vector<16x32xf32>
    %276 = arith.addf %274, %275 : vector<16x32xf32>
    %277 = vector.shape_cast %276 : vector<16x32xf32> to vector<2x8x32xf32>
    %cst_89 = arith.constant dense<0.000000e+00> : vector<2x32xf32>
    %278 = vector.multi_reduction <add>, %277, %cst_89 [1] : vector<2x8x32xf32> to vector<2x32xf32>
    %cst_90 = arith.constant 8.000000e+00 : f32
    %279 = vector.broadcast %cst_90 : f32 to vector<2x32xf32>
    %280 = arith.divf %278, %279 : vector<2x32xf32>
    %c0_91 = arith.constant 0 : index
    %c0_92 = arith.constant 0 : index
    %281 = vector.load %arg5[%c0_91, %c0_92] : memref<32x64xf32, #tpu.memory_space<vmem>>, vector<32x64xf32>
    %cst_93 = arith.constant dense<0.000000e+00> : vector<2x64xf32>
    %282 = tpu.matmul %280, %281, %cst_93 {dimension_numbers = #tpu.dot_dimension_numbers<[1], [0], [0], [1], [0, 0, 1, 1], [], []>} : vector<2x32xf32>, vector<32x64xf32>, vector<2x64xf32> -> vector<2x64xf32>
    %283 = vector.broadcast %12 : vector<1x64xf32> to vector<2x64xf32>
    %284 = arith.addf %282, %283 : vector<2x64xf32>
    %cst_94 = arith.constant 5.000000e-01 : f32
    %285 = vector.broadcast %cst_94 : f32 to vector<2x64xf32>
    %286 = arith.mulf %285, %284 : vector<2x64xf32>
    %cst_95 = arith.constant 1.41421354 : f32
    %287 = vector.broadcast %cst_95 : f32 to vector<2x64xf32>
    %288 = arith.divf %284, %287 : vector<2x64xf32>
    %289 = math.erf %288 : vector<2x64xf32>
    %cst_96 = arith.constant 1.000000e+00 : f32
    %290 = vector.broadcast %cst_96 : f32 to vector<2x64xf32>
    %291 = arith.addf %290, %289 : vector<2x64xf32>
    %292 = arith.mulf %286, %291 : vector<2x64xf32>
    %c0_97 = arith.constant 0 : index
    %c0_98 = arith.constant 0 : index
    %293 = vector.load %arg6[%c0_97, %c0_98] : memref<64x128xf32, #tpu.memory_space<vmem>>, vector<64x128xf32>
    %cst_99 = arith.constant dense<0.000000e+00> : vector<2x128xf32>
    %294 = tpu.matmul %292, %293, %cst_99 {dimension_numbers = #tpu.dot_dimension_numbers<[1], [0], [0], [1], [0, 0, 1, 1], [], []>} : vector<2x64xf32>, vector<64x128xf32>, vector<2x128xf32> -> vector<2x128xf32>
    %c0_100 = arith.constant 0 : index
    %c0_101 = arith.constant 0 : index
    %295 = vector.load %arg7[%c0_100, %c0_101] : memref<1x128xf32, #tpu.memory_space<vmem>>, vector<1x128xf32>
    %296 = vector.broadcast %295 : vector<1x128xf32> to vector<2x128xf32>
    %297 = arith.addf %294, %296 : vector<2x128xf32>
    %c0_102 = arith.constant 0 : index
    %c0_103 = arith.constant 0 : index
    %c0_104 = arith.constant 0 : index
    %298 = vector.load %arg16[%c0_102, %c0_103, %c0_104] : memref<1x2x128xf32, #tpu.memory_space<vmem>>, vector<1x2x128xf32>
    %299 = vector.shape_cast %298 : vector<1x2x128xf32> to vector<2x128xf32>
    %300 = vector.shape_cast %297 : vector<2x128xf32> to vector<1x2x128xf32>
    tpu.vector_store %arg16[%c0_102, %c0_103, %c0_104], %300 {strides = array<i32>} : memref<1x2x128xf32, #tpu.memory_space<vmem>>, vector<1x2x128xf32>,
    return
  }
  func.func @transform_0(%arg0: i32) -> (i32, i32, i32) {
    %c0_i32 = arith.constant 0 : i32
    %c0_i32_0 = arith.constant 0 : i32
    %c0_i32_1 = arith.constant 0 : i32
    return %arg0, %c0_i32, %c0_i32_0 : i32, i32, i32
  }
  func.func @transform_1(%arg0: i32) -> (i32, i32, i32) {
    %c0_i32 = arith.constant 0 : i32
    %c0_i32_0 = arith.constant 0 : i32
    %c0_i32_1 = arith.constant 0 : i32
    return %arg0, %c0_i32, %c0_i32_0 : i32, i32, i32
  }
  func.func @transform_2(%arg0: i32) -> (i32, i32) {
    %c0_i32 = arith.constant 0 : i32
    %c0_i32_0 = arith.constant 0 : i32
    %c0_i32_1 = arith.constant 0 : i32
    return %c0_i32, %c0_i32_0 : i32, i32
  }
  func.func @transform_3(%arg0: i32) -> (i32, i32) {
    %c0_i32 = arith.constant 0 : i32
    %c0_i32_0 = arith.constant 0 : i32
    %c0_i32_1 = arith.constant 0 : i32
    return %c0_i32, %c0_i32_0 : i32, i32
  }
  func.func @transform_4(%arg0: i32) -> (i32, i32) {
    %c0_i32 = arith.constant 0 : i32
    %c0_i32_0 = arith.constant 0 : i32
    %c0_i32_1 = arith.constant 0 : i32
    return %c0_i32, %c0_i32_0 : i32, i32
  }
  func.func @transform_5(%arg0: i32) -> (i32, i32) {
    %c0_i32 = arith.constant 0 : i32
    %c0_i32_0 = arith.constant 0 : i32
    %c0_i32_1 = arith.constant 0 : i32
    return %c0_i32, %c0_i32_0 : i32, i32
  }
  func.func @transform_6(%arg0: i32) -> (i32, i32) {
    %c0_i32 = arith.constant 0 : i32
    %c0_i32_0 = arith.constant 0 : i32
    %c0_i32_1 = arith.constant 0 : i32
    return %c0_i32, %c0_i32_0 : i32, i32
  }
  func.func @transform_7(%arg0: i32) -> (i32, i32) {
    %c0_i32 = arith.constant 0 : i32
    %c0_i32_0 = arith.constant 0 : i32
    %c0_i32_1 = arith.constant 0 : i32
    return %c0_i32, %c0_i32_0 : i32, i32
  }
  func.func @transform_8(%arg0: i32) -> (i32, i32) {
    %c0_i32 = arith.constant 0 : i32
    %c0_i32_0 = arith.constant 0 : i32
    %c0_i32_1 = arith.constant 0 : i32
    return %c0_i32, %c0_i32_0 : i32, i32
  }
  func.func @transform_9(%arg0: i32) -> (i32, i32) {
    %c0_i32 = arith.constant 0 : i32
    %c0_i32_0 = arith.constant 0 : i32
    %c0_i32_1 = arith.constant 0 : i32
    return %c0_i32, %c0_i32_0 : i32, i32
  }
  func.func @transform_10(%arg0: i32) -> (i32, i32) {
    %c0_i32 = arith.constant 0 : i32
    %c0_i32_0 = arith.constant 0 : i32
    %c0_i32_1 = arith.constant 0 : i32
    return %c0_i32, %c0_i32_0 : i32, i32
  }
  func.func @transform_11(%arg0: i32) -> (i32, i32) {
    %c0_i32 = arith.constant 0 : i32
    %c0_i32_0 = arith.constant 0 : i32
    %c0_i32_1 = arith.constant 0 : i32
    return %c0_i32, %c0_i32_0 : i32, i32
  }
  func.func @transform_12(%arg0: i32) -> (i32, i32) {
    %c0_i32 = arith.constant 0 : i32
    %c0_i32_0 = arith.constant 0 : i32
    %c0_i32_1 = arith.constant 0 : i32
    return %c0_i32, %c0_i32_0 : i32, i32
  }
  func.func @transform_13(%arg0: i32) -> (i32, i32) {
    %c0_i32 = arith.constant 0 : i32
    %c0_i32_0 = arith.constant 0 : i32
    %c0_i32_1 = arith.constant 0 : i32
    return %c0_i32, %c0_i32_0 : i32, i32
  }
  func.func @transform_14(%arg0: i32) -> (i32, i32) {
    %c0_i32 = arith.constant 0 : i32
    %c0_i32_0 = arith.constant 0 : i32
    %c0_i32_1 = arith.constant 0 : i32
    return %c0_i32, %c0_i32_0 : i32, i32
  }
  func.func @transform_15(%arg0: i32) -> (i32, i32, i32) {
    %c0_i32 = arith.constant 0 : i32
    %c0_i32_0 = arith.constant 0 : i32
    %c0_i32_1 = arith.constant 0 : i32
    return %arg0, %c0_i32, %c0_i32_0 : i32, i32, i32
  }
}

</mosaic_0001>

<llo_original>
// kernel: tpu_custom_call.1
$region0: #{tpu_custom_call.1}
  #allocation0 [shape = 'u32[]', space=smem, size = 0x4, offset = 0x4, fixed_abs, tag = 'smem constant byte address 0x4 - core index']
  #allocation1 [shape = 'u32[144,128]{1,0:T(1,128)}', space=vmem, size = 0x12000, scoped, tag = 'internal scratch']
  %s0 = inlined_call_operand.vmem [shape: f32[4,8,32], index: 0, kind: input, shape index: {}]
  %s1 = inlined_call_operand.vmem [shape: f32[4,16,32], index: 1, kind: input, shape index: {}]
  %s2 = inlined_call_operand.hbm [shape: f32[32,64], index: 2, kind: input, shape index: {}]
  %s3 = inlined_call_operand.vmem [shape: f32[64,32], index: 3, kind: input, shape index: {}]
  %s4 = inlined_call_operand.hbm [shape: f32[32,64], index: 4, kind: input, shape index: {}]
  %s5 = inlined_call_operand.hbm [shape: f32[64,128], index: 5, kind: input, shape index: {}]
  %s6 = inlined_call_operand.vmem [shape: f32[1,128], index: 6, kind: input, shape index: {}]
  %s7 = inlined_call_operand.hbm [shape: f32[32,96], index: 7, kind: input, shape index: {}]
  %s8 = inlined_call_operand.hbm [shape: f32[1,96], index: 8, kind: input, shape index: {}]
  %s9 = inlined_call_operand.vmem [shape: f32[32,32], index: 9, kind: input, shape index: {}]
  %s10 = inlined_call_operand.hbm [shape: f32[32,96], index: 10, kind: input, shape index: {}]
  %s11 = inlined_call_operand.hbm [shape: f32[1,96], index: 11, kind: input, shape index: {}]
  %s12 = inlined_call_operand.hbm [shape: f32[32,32], index: 12, kind: input, shape index: {}]
  %s13 = inlined_call_operand.vmem [shape: f32[9,32], index: 13, kind: input, shape index: {}]
  %s14 = inlined_call_operand.vmem [shape: f32[2,64], index: 14, kind: input, shape index: {}]
  %s15 = inlined_call_operand.hbm [shape: f32[2,2,128], index: 15, kind: output, shape index: {}]
  %s16 = sld [smem:[#allocation0]]
  $region125: #{tpu_custom_call.1} parent=0
    _
  %s18 = ssub.s32 1, %s16
  %s19 = scalar_select 0, %s18, %s16
  $region1: #{tpu_custom_call.1} parent=0
    #allocation2 [shape = 'u8[16384]{0}', space=vmem, size = 0x4000, scoped, tag = 'input window, operand 2, single buffered']
    #allocation3 [shape = 's32[2]{0}', space=sflag, size = 0x8, scoped, tag = 'scoped memory for tpu_custom_call.1']
    #allocation4 [shape = 's32[2]{0}', space=sflag, size = 0x8, scoped, tag = 'scoped memory for tpu_custom_call.1']
    #allocation5 [shape = 'u8[16384]{0}', space=vmem, size = 0x4000, scoped, tag = 'input window, operand 4, single buffered']
    #allocation6 [shape = 's32[1]{0}', space=sflag, size = 0x4, scoped, tag = 'scoped memory for tpu_custom_call.1']
    #allocation7 [shape = 'u8[32768]{0}', space=vmem, size = 0x8000, scoped, tag = 'input window, operand 5, single buffered']
    #allocation8 [shape = 'u8[16384]{0}', space=vmem, size = 0x4000, scoped, tag = 'input window, operand 7, single buffered']
    #allocation9 [shape = 's32[1]{0}', space=sflag, size = 0x4, scoped, tag = 'scoped memory for tpu_custom_call.1']
    #allocation10 [shape = 'u8[512]{0}', space=vmem, size = 0x400, scoped, tag = 'input window, operand 8, single buffered']
    #allocation11 [shape = 'u8[16384]{0}', space=vmem, size = 0x4000, scoped, tag = 'input window, operand 10, single buffered']
    #allocation12 [shape = 's32[1]{0}', space=sflag, size = 0x4, scoped, tag = 'scoped memory for tpu_custom_call.1']
    #allocation13 [shape = 'u8[512]{0}', space=vmem, size = 0x400, scoped, tag = 'input window, operand 11, single buffered']
    #allocation14 [shape = 'u8[16384]{0}', space=vmem, size = 0x4000, scoped, tag = 'input window, operand 12, single buffered']
    #allocation15 [shape = 's32[1]{0}', space=sflag, size = 0x4, scoped, tag = 'scoped memory for tpu_custom_call.1']
    #allocation16 [shape = 'u8[2048]{0}', space=vmem, size = 0x800, scoped, tag = 'output window, operand 0']
    %20 = vsyncpa [#allocation3], 0
    %21 = vsyncpa [#allocation6], 0
    %22 = vsyncpa [#allocation9], 0
    %23 = vsyncpa [#allocation12], 0
    %24 = vsyncpa [#allocation15], 0
    %25 = vsyncpa [#allocation4], 0
    %s26 = scalar_lea.sflag [#allocation4], 1
    %27 = vsyncpa %s26, 0
    loop: start=0, step=1, limit=4
    $region2: #{tpu_custom_call.1} parent=1 // loop_pre_header
      _
    $region3: #{tpu_custom_call.1} parent=1 // loop_header
      %s29 = sphi 0, %s33
      %p30 = scmp.ge.s32.totalorder %s29, 4
      %s39 = sphi 0, %s41
      %s42 = sphi 0, %s39
      %s43 = sphi 0, %s42
      %s59 = sphi 0, %s43
      %s65 = sphi 0, %s67
      %s68 = sphi 0, %s65
      %s69 = sphi 0, %s68
      %s85 = sphi 0, %s69
      %s89 = sphi 0, %s89
      %s91 = sphi 0, %s89
      %s92 = sphi 0, %s91
      %s106 = sphi 0, %s92
      %s110 = sphi 0, %s110
      %s112 = sphi 0, %s110
      %s113 = sphi 0, %s112
      %s127 = sphi 0, %s113
      %s131 = sphi 0, %s131
      %s133 = sphi 0, %s131
      %s134 = sphi 0, %s133
      %s148 = sphi 0, %s134
      %s152 = sphi 0, %s152
      %s154 = sphi 0, %s152
      %s155 = sphi 0, %s154
      %s169 = sphi 0, %s155
      %s173 = sphi 0, %s173
      %s175 = sphi 0, %s173
      %s176 = sphi 0, %s175
      %s190 = sphi 0, %s176
      %s194 = sphi 0, %s194
      %s196 = sphi 0, %s194
      %s197 = sphi 0, %s196
      %s211 = sphi 0, %s197
      %s215 = sphi 0, %s215
      %s217 = sphi 0, %s215
      %s218 = sphi 0, %s217
      %s232 = sphi 0, %s218
      %s236 = sphi 0, %s236
      %s238 = sphi 0, %s236
      %s239 = sphi 0, %s238
      %s253 = sphi 0, %s239
      %s257 = sphi 0, %s257
      %s259 = sphi 0, %s257
      %s260 = sphi 0, %s259
      %s274 = sphi 0, %s260
      %s278 = sphi 0, %s278
      %s280 = sphi 0, %s278
      %s281 = sphi 0, %s280
      %s295 = sphi 0, %s281
      %s299 = sphi 0, %s299
      %s301 = sphi 0, %s299
      %s302 = sphi 0, %s301
      %s316 = sphi 0, %s302
      %s320 = sphi 0, %s320
      %s322 = sphi 0, %s320
      %s323 = sphi 0, %s322
      %s337 = sphi 0, %s323
      %s341 = sphi 0, %s341
      %s343 = sphi 0, %s341
      %s344 = sphi 0, %s343
      %s358 = sphi 0, %s344
      %s364 = sphi 0, %s366
      %s367 = sphi 0, %s364
      %s368 = sphi 0, %s367
      %s384 = sphi 0, %s368
    $region4: #{tpu_custom_call.1} parent=1 // loop_header_branch
      %32 = sbr.rel (%p30) target = $region8
    $region5: #{tpu_custom_call.1} parent=1 // loop_body
      %s34 = ssub.s32 %s29, 1
      %s35 = ssub.s32 %s29, 2
      %s36 = sadd.s32 %s29, 1
      %s37 = ssub.s32 %s29, %s36
      %p38 = scmp.eq.s32.totalorder %s37, 0
      %s40 = sadd.s32 %s39, 1
      %s41 = scalar_select %p38, %s39, %s40
      %p44 = pneg %p38
      %p45 = scmp.eq.s32.totalorder %s29, 1
      %p46 = por %p44, %p45
      %p47 = scmp.ne.s32.totalorder %s39, %s42
      %p48 = scmp.eq.s32.totalorder %s29, 0
      %p49 = por %p47, %p48
      %p50 = scmp.ne.s32.totalorder %s39, %s42
      %p51 = scmp.eq.s32.totalorder %s34, 1
      %p52 = por %p50, %p51
      %p53 = scmp.ne.s32.totalorder %s42, %s43
      %p54 = scmp.eq.s32.totalorder %s34, 0
      %p55 = por %p53, %p54
      %p56 = scmp.ne.s32.totalorder %s42, %s43
      %p57 = scmp.eq.s32.totalorder %s35, 1
      %p58 = por %p56, %p57
      %p60 = scmp.ne.s32.totalorder %s43, %s59
      %p61 = scmp.eq.s32.totalorder %s35, 0
      %p62 = por %p60, %p61
      %s63 = ssub.s32 %s29, %s36
      %p64 = scmp.eq.s32.totalorder %s63, 0
      %s66 = sadd.s32 %s65, 1
      %s67 = scalar_select %p64, %s65, %s66
      %p70 = pneg %p64
      %p71 = scmp.eq.s32.totalorder %s29, 1
      %p72 = por %p70, %p71
      %p73 = scmp.ne.s32.totalorder %s65, %s68
      %p74 = scmp.eq.s32.totalorder %s29, 0
      %p75 = por %p73, %p74
      %p76 = scmp.ne.s32.totalorder %s65, %s68
      %p77 = scmp.eq.s32.totalorder %s34, 1
      %p78 = por %p76, %p77
      %p79 = scmp.ne.s32.totalorder %s68, %s69
      %p80 = scmp.eq.s32.totalorder %s34, 0
      %p81 = por %p79, %p80
      %p82 = scmp.ne.s32.totalorder %s68, %s69
      %p83 = scmp.eq.s32.totalorder %s35, 1
      %p84 = por %p82, %p83
      %p86 = scmp.ne.s32.totalorder %s69, %s85
      %p87 = scmp.eq.s32.totalorder %s35, 0
      %p88 = por %p86, %p87
      %s90 = sadd.s32 %s89, 1
      %p93 = scmp.eq.s32.totalorder %s29, 1
      %p94 = scmp.ne.s32.totalorder %s89, %s91
      %p95 = scmp.eq.s32.totalorder %s29, 0
      %p96 = por %p94, %p95
      %p97 = scmp.ne.s32.totalorder %s89, %s91
      %p98 = scmp.eq.s32.totalorder %s34, 1
      %p99 = por %p97, %p98
      %p100 = scmp.ne.s32.totalorder %s91, %s92
      %p101 = scmp.eq.s32.totalorder %s34, 0
      %p102 = por %p100, %p101
      %p103 = scmp.ne.s32.totalorder %s91, %s92
      %p104 = scmp.eq.s32.totalorder %s35, 1
      %p105 = por %p103, %p104
      %p107 = scmp.ne.s32.totalorder %s92, %s106
      %p108 = scmp.eq.s32.totalorder %s35, 0
      %p109 = por %p107, %p108
      %s111 = sadd.s32 %s110, 1
      %p114 = scmp.eq.s32.totalorder %s29, 1
      %p115 = scmp.ne.s32.totalorder %s110, %s112
      %p116 = scmp.eq.s32.totalorder %s29, 0
      %p117 = por %p115, %p116
      %p118 = scmp.ne.s32.totalorder %s110, %s112
      %p119 = scmp.eq.s32.totalorder %s34, 1
      %p120 = por %p118, %p119
      %p121 = scmp.ne.s32.totalorder %s112, %s113
      %p122 = scmp.eq.s32.totalorder %s34, 0
      %p123 = por %p121, %p122
      %p124 = scmp.ne.s32.totalorder %s112, %s113
      %p125 = scmp.eq.s32.totalorder %s35, 1
      %p126 = por %p124, %p125
      %p128 = scmp.ne.s32.totalorder %s113, %s127
      %p129 = scmp.eq.s32.totalorder %s35, 0
      %p130 = por %p128, %p129
      %s132 = sadd.s32 %s131, 1
      %p135 = scmp.eq.s32.totalorder %s29, 1
      %p136 = scmp.ne.s32.totalorder %s131, %s133
      %p137 = scmp.eq.s32.totalorder %s29, 0
      %p138 = por %p136, %p137
      %p139 = scmp.ne.s32.totalorder %s131, %s133
      %p140 = scmp.eq.s32.totalorder %s34, 1
      %p141 = por %p139, %p140
      %p142 = scmp.ne.s32.totalorder %s133, %s134
      %p143 = scmp.eq.s32.totalorder %s34, 0
      %p144 = por %p142, %p143
      %p145 = scmp.ne.s32.totalorder %s133, %s134
      %p146 = scmp.eq.s32.totalorder %s35, 1
      %p147 = por %p145, %p146
      %p149 = scmp.ne.s32.totalorder %s134, %s148
      %p150 = scmp.eq.s32.totalorder %s35, 0
      %p151 = por %p149, %p150
      %s153 = sadd.s32 %s152, 1
      %p156 = scmp.eq.s32.totalorder %s29, 1
      %p157 = scmp.ne.s32.totalorder %s152, %s154
      %p158 = scmp.eq.s32.totalorder %s29, 0
      %p159 = por %p157, %p158
      %p160 = scmp.ne.s32.totalorder %s152, %s154
      %p161 = scmp.eq.s32.totalorder %s34, 1
      %p162 = por %p160, %p161
      %p163 = scmp.ne.s32.totalorder %s154, %s155
      %p164 = scmp.eq.s32.totalorder %s34, 0
      %p165 = por %p163, %p164
      %p166 = scmp.ne.s32.totalorder %s154, %s155
      %p167 = scmp.eq.s32.totalorder %s35, 1
      %p168 = por %p166, %p167
      %p170 = scmp.ne.s32.totalorder %s155, %s169
      %p171 = scmp.eq.s32.totalorder %s35, 0
      %p172 = por %p170, %p171
      %s174 = sadd.s32 %s173, 1
      %p177 = scmp.eq.s32.totalorder %s29, 1
      %p178 = scmp.ne.s32.totalorder %s173, %s175
      %p179 = scmp.eq.s32.totalorder %s29, 0
      %p180 = por %p178, %p179
      %p181 = scmp.ne.s32.totalorder %s173, %s175
      %p182 = scmp.eq.s32.totalorder %s34, 1
      %p183 = por %p181, %p182
      %p184 = scmp.ne.s32.totalorder %s175, %s176
      %p185 = scmp.eq.s32.totalorder %s34, 0
      %p186 = por %p184, %p185
      %p187 = scmp.ne.s32.totalorder %s175, %s176
      %p188 = scmp.eq.s32.totalorder %s35, 1
      %p189 = por %p187, %p188
      %p191 = scmp.ne.s32.totalorder %s176, %s190
      %p192 = scmp.eq.s32.totalorder %s35, 0
      %p193 = por %p191, %p192
      %s195 = sadd.s32 %s194, 1
      %p198 = scmp.eq.s32.totalorder %s29, 1
      %p199 = scmp.ne.s32.totalorder %s194, %s196
      %p200 = scmp.eq.s32.totalorder %s29, 0
      %p201 = por %p199, %p200
      %p202 = scmp.ne.s32.totalorder %s194, %s196
      %p203 = scmp.eq.s32.totalorder %s34, 1
      %p204 = por %p202, %p203
      %p205 = scmp.ne.s32.totalorder %s196, %s197
      %p206 = scmp.eq.s32.totalorder %s34, 0
      %p207 = por %p205, %p206
      %p208 = scmp.ne.s32.totalorder %s196, %s197
      %p209 = scmp.eq.s32.totalorder %s35, 1
      %p210 = por %p208, %p209
      %p212 = scmp.ne.s32.totalorder %s197, %s211
      %p213 = scmp.eq.s32.totalorder %s35, 0
      %p214 = por %p212, %p213
      %s216 = sadd.s32 %s215, 1
      %p219 = scmp.eq.s32.totalorder %s29, 1
      %p220 = scmp.ne.s32.totalorder %s215, %s217
      %p221 = scmp.eq.s32.totalorder %s29, 0
      %p222 = por %p220, %p221
      %p223 = scmp.ne.s32.totalorder %s215, %s217
      %p224 = scmp.eq.s32.totalorder %s34, 1
      %p225 = por %p223, %p224
      %p226 = scmp.ne.s32.totalorder %s217, %s218
      %p227 = scmp.eq.s32.totalorder %s34, 0
      %p228 = por %p226, %p227
      %p229 = scmp.ne.s32.totalorder %s217, %s218
      %p230 = scmp.eq.s32.totalorder %s35, 1
      %p231 = por %p229, %p230
      %p233 = scmp.ne.s32.totalorder %s218, %s232
      %p234 = scmp.eq.s32.totalorder %s35, 0
      %p235 = por %p233, %p234
      %s237 = sadd.s32 %s236, 1
      %p240 = scmp.eq.s32.totalorder %s29, 1
      %p241 = scmp.ne.s32.totalorder %s236, %s238
      %p242 = scmp.eq.s32.totalorder %s29, 0
      %p243 = por %p241, %p242
      %p244 = scmp.ne.s32.totalorder %s236, %s238
      %p245 = scmp.eq.s32.totalorder %s34, 1
      %p246 = por %p244, %p245
      %p247 = scmp.ne.s32.totalorder %s238, %s239
      %p248 = scmp.eq.s32.totalorder %s34, 0
      %p249 = por %p247, %p248
      %p250 = scmp.ne.s32.totalorder %s238, %s239
      %p251 = scmp.eq.s32.totalorder %s35, 1
      %p252 = por %p250, %p251
      %p254 = scmp.ne.s32.totalorder %s239, %s253
      %p255 = scmp.eq.s32.totalorder %s35, 0
      %p256 = por %p254, %p255
      %s258 = sadd.s32 %s257, 1
      %p261 = scmp.eq.s32.totalorder %s29, 1
      %p262 = scmp.ne.s32.totalorder %s257, %s259
      %p263 = scmp.eq.s32.totalorder %s29, 0
      %p264 = por %p262, %p263
      %p265 = scmp.ne.s32.totalorder %s257, %s259
      %p266 = scmp.eq.s32.totalorder %s34, 1
      %p267 = por %p265, %p266
      %p268 = scmp.ne.s32.totalorder %s259, %s260
      %p269 = scmp.eq.s32.totalorder %s34, 0
      %p270 = por %p268, %p269
      %p271 = scmp.ne.s32.totalorder %s259, %s260
      %p272 = scmp.eq.s32.totalorder %s35, 1
      %p273 = por %p271, %p272
      %p275 = scmp.ne.s32.totalorder %s260, %s274
      %p276 = scmp.eq.s32.totalorder %s35, 0
      %p277 = por %p275, %p276
      %s279 = sadd.s32 %s278, 1
      %p282 = scmp.eq.s32.totalorder %s29, 1
      %p283 = scmp.ne.s32.totalorder %s278, %s280
      %p284 = scmp.eq.s32.totalorder %s29, 0
      %p285 = por %p283, %p284
      %p286 = scmp.ne.s32.totalorder %s278, %s280
      %p287 = scmp.eq.s32.totalorder %s34, 1
      %p288 = por %p286, %p287
      %p289 = scmp.ne.s32.totalorder %s280, %s281
      %p290 = scmp.eq.s32.totalorder %s34, 0
      %p291 = por %p289, %p290
      %p292 = scmp.ne.s32.totalorder %s280, %s281
      %p293 = scmp.eq.s32.totalorder %s35, 1
      %p294 = por %p292, %p293
      %p296 = scmp.ne.s32.totalorder %s281, %s295
      %p297 = scmp.eq.s32.totalorder %s35, 0
      %p298 = por %p296, %p297
      %s300 = sadd.s32 %s299, 1
      %p303 = scmp.eq.s32.totalorder %s29, 1
      %p304 = scmp.ne.s32.totalorder %s299, %s301
      %p305 = scmp.eq.s32.totalorder %s29, 0
      %p306 = por %p304, %p305
      %p307 = scmp.ne.s32.totalorder %s299, %s301
      %p308 = scmp.eq.s32.totalorder %s34, 1
      %p309 = por %p307, %p308
      %p310 = scmp.ne.s32.totalorder %s301, %s302
      %p311 = scmp.eq.s32.totalorder %s34, 0
      %p312 = por %p310, %p311
      %p313 = scmp.ne.s32.totalorder %s301, %s302
      %p314 = scmp.eq.s32.totalorder %s35, 1
      %p315 = por %p313, %p314
      %p317 = scmp.ne.s32.totalorder %s302, %s316
      %p318 = scmp.eq.s32.totalorder %s35, 0
      %p319 = por %p317, %p318
      %s321 = sadd.s32 %s320, 1
      %p324 = scmp.eq.s32.totalorder %s29, 1
      %p325 = scmp.ne.s32.totalorder %s320, %s322
      %p326 = scmp.eq.s32.totalorder %s29, 0
      %p327 = por %p325, %p326
      %p328 = scmp.ne.s32.totalorder %s320, %s322
      %p329 = scmp.eq.s32.totalorder %s34, 1
      %p330 = por %p328, %p329
      %p331 = scmp.ne.s32.totalorder %s322, %s323
      %p332 = scmp.eq.s32.totalorder %s34, 0
      %p333 = por %p331, %p332
      %p334 = scmp.ne.s32.totalorder %s322, %s323
      %p335 = scmp.eq.s32.totalorder %s35, 1
      %p336 = por %p334, %p335
      %p338 = scmp.ne.s32.totalorder %s323, %s337
      %p339 = scmp.eq.s32.totalorder %s35, 0
      %p340 = por %p338, %p339
      %s342 = sadd.s32 %s341, 1
      %p345 = scmp.eq.s32.totalorder %s29, 1
      %p346 = scmp.ne.s32.totalorder %s341, %s343
      %p347 = scmp.eq.s32.totalorder %s29, 0
      %p348 = por %p346, %p347
      %p349 = scmp.ne.s32.totalorder %s341, %s343
      %p350 = scmp.eq.s32.totalorder %s34, 1
      %p351 = por %p349, %p350
      %p352 = scmp.ne.s32.totalorder %s343, %s344
      %p353 = scmp.eq.s32.totalorder %s34, 0
      %p354 = por %p352, %p353
      %p355 = scmp.ne.s32.totalorder %s343, %s344
      %p356 = scmp.eq.s32.totalorder %s35, 1
      %p357 = por %p355, %p356
      %p359 = scmp.ne.s32.totalorder %s344, %s358
      %p360 = scmp.eq.s32.totalorder %s35, 0
      %p361 = por %p359, %p360
      %s362 = ssub.s32 %s29, %s36
      %p363 = scmp.eq.s32.totalorder %s362, 0
      %s365 = sadd.s32 %s364, 1
      %s366 = scalar_select %p363, %s364, %s365
      %p369 = pneg %p363
      %p370 = scmp.eq.s32.totalorder %s29, 1
      %p371 = por %p369, %p370
      %p372 = scmp.ne.s32.totalorder %s364, %s367
      %p373 = scmp.eq.s32.totalorder %s29, 0
      %p374 = por %p372, %p373
      %p375 = scmp.ne.s32.totalorder %s364, %s367
      %p376 = scmp.eq.s32.totalorder %s34, 1
      %p377 = por %p375, %p376
      %p378 = scmp.ne.s32.totalorder %s367, %s368
      %p379 = scmp.eq.s32.totalorder %s34, 0
      %p380 = por %p378, %p379
      %p381 = scmp.ne.s32.totalorder %s367, %s368
      %p382 = scmp.eq.s32.totalorder %s35, 1
      %p383 = por %p381, %p382
      %p385 = scmp.ne.s32.totalorder %s368, %s384
      %p386 = scmp.eq.s32.totalorder %s35, 0
      %p387 = por %p385, %p386
      %p388 = scmp.le.s32.totalorder 1, %s29
      %p389 = scmp.lt.s32.totalorder %s29, 3
      %p390 = pnand %p388, %p389
      %p391 = pneg %p390
      // Predicated region
      $region9: #{tpu_custom_call.1} parent=5 // pred_check
        _
      $region10: #{tpu_custom_call.1} parent=5 // pred_check_branch
        %393 = sbr.rel (%p390) target = $region12
      $region11: #{tpu_custom_call.1} parent=5 // pred_region
        %s394 = ssub.s32 %s29, 1
        // Predicated region
        $region13: #{tpu_custom_call.1} parent=11 // pred_check
          %p395 = pneg %p102
        $region14: #{tpu_custom_call.1} parent=11 // pred_check_branch
          %397 = sbr.rel (%p395) target = $region16
        $region15: #{tpu_custom_call.1} parent=11 // pred_region
          %s399 = ssub.s32 512, 512
          %400 = vsyncadd [#allocation3], %s399
          %s401 = sshll.u32 [#allocation2], 4
          %s402 = int_to_ptr.vmem [resolvable:$true] %s401
          %407 = dma.hbm_to_vmem [thread:$0]  %s2, 512, %s402, [#allocation3], 128, 128, 8
        $region16: #{tpu_custom_call.1} parent=11 // pred_fallthru
          _
        // Predicated region
        $region17: #{tpu_custom_call.1} parent=11 // pred_check
          %p408 = pneg %p123
        $region18: #{tpu_custom_call.1} parent=11 // pred_check_branch
          %410 = sbr.rel (%p408) target = $region20
        $region19: #{tpu_custom_call.1} parent=11 // pred_region
          _
        $region20: #{tpu_custom_call.1} parent=11 // pred_fallthru
          _
        // Predicated region
        $region21: #{tpu_custom_call.1} parent=11 // pred_check
          %p411 = pneg %p144
        $region22: #{tpu_custom_call.1} parent=11 // pred_check_branch
          %413 = sbr.rel (%p411) target = $region24
        $region23: #{tpu_custom_call.1} parent=11 // pred_region
          %s415 = ssub.s32 512, 512
          %416 = vsyncadd [#allocation6], %s415
          %s417 = sshll.u32 [#allocation5], 4
          %s418 = int_to_ptr.vmem [resolvable:$true] %s417
          %423 = dma.hbm_to_vmem [thread:$0]  %s4, 512, %s418, [#allocation6], 128, 128, 8
        $region24: #{tpu_custom_call.1} parent=11 // pred_fallthru
          _
        // Predicated region
        $region25: #{tpu_custom_call.1} parent=11 // pred_check
          %p424 = pneg %p165
        $region26: #{tpu_custom_call.1} parent=11 // pred_check_branch
          %426 = sbr.rel (%p424) target = $region28
        $region27: #{tpu_custom_call.1} parent=11 // pred_region
          %s428 = ssub.s32 1024, 1024
          %429 = vsyncadd [#allocation6], %s428
          %s430 = sshll.u32 [#allocation7], 4
          %s431 = int_to_ptr.vmem [resolvable:$true] %s430
          %436 = dma.hbm_to_vmem [thread:$0]  %s5, 1024, %s431, [#allocation6], 128, 128, 8
        $region28: #{tpu_custom_call.1} parent=11 // pred_fallthru
          _
        // Predicated region
        $region29: #{tpu_custom_call.1} parent=11 // pred_check
          %p437 = pneg %p186
        $region30: #{tpu_custom_call.1} parent=11 // pred_check_branch
          %439 = sbr.rel (%p437) target = $region32
        $region31: #{tpu_custom_call.1} parent=11 // pred_region
          _
        $region32: #{tpu_custom_call.1} parent=11 // pred_fallthru
          _
        // Predicated region
        $region33: #{tpu_custom_call.1} parent=11 // pred_check
          %p440 = pneg %p207
        $region34: #{tpu_custom_call.1} parent=11 // pred_check_branch
          %442 = sbr.rel (%p440) target = $region36
        $region35: #{tpu_custom_call.1} parent=11 // pred_region
          %s444 = ssub.s32 512, 512
          %445 = vsyncadd [#allocation9], %s444
          %s446 = sshll.u32 [#allocation8], 4
          %s447 = int_to_ptr.vmem [resolvable:$true] %s446
          %452 = dma.hbm_to_vmem [thread:$0]  %s7, 512, %s447, [#allocation9], 128, 128, 8
        $region36: #{tpu_custom_call.1} parent=11 // pred_fallthru
          _
        // Predicated region
        $region37: #{tpu_custom_call.1} parent=11 // pred_check
          %p453 = pneg %p228
        $region38: #{tpu_custom_call.1} parent=11 // pred_check_branch
          %455 = sbr.rel (%p453) target = $region40
        $region39: #{tpu_custom_call.1} parent=11 // pred_region
          %s457 = ssub.s32 16, 16
          %458 = vsyncadd [#allocation9], %s457
          %s460 = sshll.u32 [#allocation10], 4
          %s461 = int_to_ptr.vmem [resolvable:$true] %s460
          %463 = dma.hbm_to_vmem [thread:$0]  %s8, 16, %s461, [#allocation9]
        $region40: #{tpu_custom_call.1} parent=11 // pred_fallthru
          _
        // Predicated region
        $region41: #{tpu_custom_call.1} parent=11 // pred_check
          %p464 = pneg %p249
        $region42: #{tpu_custom_call.1} parent=11 // pred_check_branch
          %466 = sbr.rel (%p464) target = $region44
        $region43: #{tpu_custom_call.1} parent=11 // pred_region
          _
        $region44: #{tpu_custom_call.1} parent=11 // pred_fallthru
          _
        // Predicated region
        $region45: #{tpu_custom_call.1} parent=11 // pred_check
          %p467 = pneg %p270
        $region46: #{tpu_custom_call.1} parent=11 // pred_check_branch
          %469 = sbr.rel (%p467) target = $region48
        $region47: #{tpu_custom_call.1} parent=11 // pred_region
          %s471 = ssub.s32 512, 512
          %472 = vsyncadd [#allocation12], %s471
          %s473 = sshll.u32 [#allocation11], 4
          %s474 = int_to_ptr.vmem [resolvable:$true] %s473
          %479 = dma.hbm_to_vmem [thread:$0]  %s10, 512, %s474, [#allocation12], 128, 128, 8
        $region48: #{tpu_custom_call.1} parent=11 // pred_fallthru
          _
        // Predicated region
        $region49: #{tpu_custom_call.1} parent=11 // pred_check
          %p480 = pneg %p291
        $region50: #{tpu_custom_call.1} parent=11 // pred_check_branch
          %482 = sbr.rel (%p480) target = $region52
        $region51: #{tpu_custom_call.1} parent=11 // pred_region
          %s484 = ssub.s32 16, 16
          %485 = vsyncadd [#allocation12], %s484
          %s487 = sshll.u32 [#allocation13], 4
          %s488 = int_to_ptr.vmem [resolvable:$true] %s487
          %490 = dma.hbm_to_vmem [thread:$0]  %s11, 16, %s488, [#allocation12]
        $region52: #{tpu_custom_call.1} parent=11 // pred_fallthru
          _
        // Predicated region
        $region53: #{tpu_custom_call.1} parent=11 // pred_check
          %p491 = pneg %p312
        $region54: #{tpu_custom_call.1} parent=11 // pred_check_branch
          %493 = sbr.rel (%p491) target = $region56
        $region55: #{tpu_custom_call.1} parent=11 // pred_region
          %s495 = ssub.s32 512, 512
          %496 = vsyncadd [#allocation15], %s495
          %s497 = sshll.u32 [#allocation14], 4
          %s498 = int_to_ptr.vmem [resolvable:$true] %s497
          %503 = dma.hbm_to_vmem [thread:$0]  %s12, 512, %s498, [#allocation15], 128, 128, 8
        $region56: #{tpu_custom_call.1} parent=11 // pred_fallthru
          _
        // Predicated region
        $region57: #{tpu_custom_call.1} parent=11 // pred_check
          %p504 = pneg %p333
        $region58: #{tpu_custom_call.1} parent=11 // pred_check_branch
          %506 = sbr.rel (%p504) target = $region60
        $region59: #{tpu_custom_call.1} parent=11 // pred_region
          _
        $region60: #{tpu_custom_call.1} parent=11 // pred_fallthru
          _
        // Predicated region
        $region61: #{tpu_custom_call.1} parent=11 // pred_check
          %p507 = pneg %p354
        $region62: #{tpu_custom_call.1} parent=11 // pred_check_branch
          %509 = sbr.rel (%p507) target = $region64
        $region63: #{tpu_custom_call.1} parent=11 // pred_region
          _
        $region64: #{tpu_custom_call.1} parent=11 // pred_fallthru
          _
      $region12: #{tpu_custom_call.1} parent=5 // pred_fallthru
        _
      %p510 = scmp.lt.s32.totalorder %s29, 2
      // Predicated region
      $region65: #{tpu_custom_call.1} parent=5 // pred_check
        %p511 = pneg %p510
      $region66: #{tpu_custom_call.1} parent=5 // pred_check_branch
        %513 = sbr.rel (%p511) target = $region68
      $region67: #{tpu_custom_call.1} parent=5 // pred_region
        // Predicated region
        $region69: #{tpu_custom_call.1} parent=67 // pred_check
          %p514 = pneg %p49
        $region70: #{tpu_custom_call.1} parent=67 // pred_check_branch
          %516 = sbr.rel (%p514) target = $region72
        $region71: #{tpu_custom_call.1} parent=67 // pred_region
          %s517 = smul.u32 2, %s29
          %p518 = scmp.lt.s32.totalorder %s517, 3
          %s519 = scalar_select %p518, %s517, 3
          %s520 = smul.addr %s519, 8
          %s521 = scalar_lea.vmem %s0, %s520
          %s522 = smul.u32 2, %s29
        $region72: #{tpu_custom_call.1} parent=67 // pred_fallthru
          _
        // Predicated region
        $region73: #{tpu_custom_call.1} parent=67 // pred_check
          %p523 = pneg %p75
        $region74: #{tpu_custom_call.1} parent=67 // pred_check_branch
          %525 = sbr.rel (%p523) target = $region76
        $region75: #{tpu_custom_call.1} parent=67 // pred_region
          %s526 = smul.u32 2, %s29
          %p527 = scmp.lt.s32.totalorder %s526, 3
          %s528 = scalar_select %p527, %s526, 3
          %s529 = smul.addr %s528, 2
          %s530 = smul.addr %s529, 8
          %s531 = scalar_lea.vmem %s1, %s530
          %s532 = smul.u32 2, %s29
        $region76: #{tpu_custom_call.1} parent=67 // pred_fallthru
          _
      $region68: #{tpu_custom_call.1} parent=5 // pred_fallthru
        _
      %p533 = scmp.le.s32.totalorder 1, %s29
      %p534 = scmp.lt.s32.totalorder %s29, 3
      %p535 = pnand %p533, %p534
      %p536 = pneg %p535
      // Predicated region
      $region77: #{tpu_custom_call.1} parent=5 // pred_check
        _
      $region78: #{tpu_custom_call.1} parent=5 // pred_check_branch
        %538 = sbr.rel (%p535) target = $region80
      $region79: #{tpu_custom_call.1} parent=5 // pred_region
        %s539 = ssub.s32 %s29, 1
        // Predicated region
        $region81: #{tpu_custom_call.1} parent=79 // pred_check
          %p540 = pneg %p102
        $region82: #{tpu_custom_call.1} parent=79 // pred_check_branch
          %542 = sbr.rel (%p540) target = $region84
        $region83: #{tpu_custom_call.1} parent=79 // pred_region
          %543 = dma.done [#allocation3], 512
        $region84: #{tpu_custom_call.1} parent=79 // pred_fallthru
          _
        // Predicated region
        $region85: #{tpu_custom_call.1} parent=79 // pred_check
          %p544 = pneg %p144
        $region86: #{tpu_custom_call.1} parent=79 // pred_check_branch
          %546 = sbr.rel (%p544) target = $region88
        $region87: #{tpu_custom_call.1} parent=79 // pred_region
          %547 = dma.done [#allocation6], 512
        $region88: #{tpu_custom_call.1} parent=79 // pred_fallthru
          _
        // Predicated region
        $region89: #{tpu_custom_call.1} parent=79 // pred_check
          %p548 = pneg %p165
        $region90: #{tpu_custom_call.1} parent=79 // pred_check_branch
          %550 = sbr.rel (%p548) target = $region92
        $region91: #{tpu_custom_call.1} parent=79 // pred_region
          %551 = dma.done [#allocation6], 1024
        $region92: #{tpu_custom_call.1} parent=79 // pred_fallthru
          _
        // Predicated region
        $region93: #{tpu_custom_call.1} parent=79 // pred_check
          %p552 = pneg %p207
        $region94: #{tpu_custom_call.1} parent=79 // pred_check_branch
          %554 = sbr.rel (%p552) target = $region96
        $region95: #{tpu_custom_call.1} parent=79 // pred_region
          %555 = dma.done [#allocation9], 512
        $region96: #{tpu_custom_call.1} parent=79 // pred_fallthru
          _
        // Predicated region
        $region97: #{tpu_custom_call.1} parent=79 // pred_check
          %p556 = pneg %p228
        $region98: #{tpu_custom_call.1} parent=79 // pred_check_branch
          %558 = sbr.rel (%p556) target = $region100
        $region99: #{tpu_custom_call.1} parent=79 // pred_region
          %559 = dma.done [#allocation9], 16
        $region100: #{tpu_custom_call.1} parent=79 // pred_fallthru
          _
        // Predicated region
        $region101: #{tpu_custom_call.1} parent=79 // pred_check
          %p560 = pneg %p270
        $region102: #{tpu_custom_call.1} parent=79 // pred_check_branch
          %562 = sbr.rel (%p560) target = $region104
        $region103: #{tpu_custom_call.1} parent=79 // pred_region
          %563 = dma.done [#allocation12], 512
        $region104: #{tpu_custom_call.1} parent=79 // pred_fallthru
          _
        // Predicated region
        $region105: #{tpu_custom_call.1} parent=79 // pred_check
          %p564 = pneg %p291
        $region106: #{tpu_custom_call.1} parent=79 // pred_check_branch
          %566 = sbr.rel (%p564) target = $region108
        $region107: #{tpu_custom_call.1} parent=79 // pred_region
          %567 = dma.done [#allocation12], 16
        $region108: #{tpu_custom_call.1} parent=79 // pred_fallthru
          _
        // Predicated region
        $region109: #{tpu_custom_call.1} parent=79 // pred_check
          %p568 = pneg %p312
        $region110: #{tpu_custom_call.1} parent=79 // pred_check_branch
          %570 = sbr.rel (%p568) target = $region112
        $region111: #{tpu_custom_call.1} parent=79 // pred_region
          %571 = dma.done [#allocation15], 512
        $region112: #{tpu_custom_call.1} parent=79 // pred_fallthru
          _
        %s572 = smul.u32 2, %s34
        %p573 = scmp.lt.s32.totalorder %s572, 3
        %s574 = scalar_select %p573, %s572, 3
        %s575 = smul.addr %s574, 8
        %s576 = scalar_lea.vmem %s0, %s575
        %p577 = pneg %p55
        %p578 = pneg %p52
        %s579 = smul.u32 2, %s34
        %p580 = scmp.lt.s32.totalorder %s579, 3
        %s581 = scalar_select %p580, %s579, 3
        %s582 = smul.addr %s581, 2
        %s583 = smul.addr %s582, 8
        %s584 = scalar_lea.vmem %s1, %s583
        %p585 = pneg %p81
        %p586 = pneg %p78
        %p587 = pneg %p102
        %p588 = pneg %p99
        %p589 = pneg %p123
        %p590 = pneg %p120
        %p591 = pneg %p144
        %p592 = pneg %p141
        %p593 = pneg %p165
        %p594 = pneg %p162
        %p595 = pneg %p186
        %p596 = pneg %p183
        %p597 = pneg %p207
        %p598 = pneg %p204
        %p599 = pneg %p228
        %p600 = pneg %p225
        %p601 = pneg %p249
        %p602 = pneg %p246
        %p603 = pneg %p270
        %p604 = pneg %p267
        %p605 = pneg %p291
        %p606 = pneg %p288
        %p607 = pneg %p312
        %p608 = pneg %p309
        %p609 = pneg %p333
        %p610 = pneg %p330
        %p611 = pneg %p354
        %p612 = pneg %p351
        %p613 = pneg %p380
        %p614 = pneg %p377
        %s615 = sand.u32 %s367, 1
        %s616 = scalar_lea.sflag [#allocation4], %s615
        %s617 = sand.u32 %s367, 1
        %s618 = smul.addr %s617, 2
        %s619 = scalar_lea.vmem [#allocation16], %s618
        %s620 = smul.u32 2, %s34
        %p621 = scmp.lt.s32.totalorder %s620, 3
        %s622 = scalar_select %p621, %s620, 3
        %s623 = smul.addr %s622, 8
        %s624 = scalar_lea.vmem %s0, %s623
        %s625 = smul.u32 2, %s34
        %s626 = smul.u32 2, %s34
        %p627 = scmp.lt.s32.totalorder %s626, 3
        %s628 = scalar_select %p627, %s626, 3
        %s629 = smul.addr %s628, 2
        %s630 = smul.addr %s629, 8
        %s631 = scalar_lea.vmem %s1, %s630
        %s632 = smul.u32 2, %s34
        %v633 = vld [vmem:[%s13] sm:$0xff]
        %v634 = vld [vmem:[%s13 + $0x8] sm:$0x1]
        %v635 = vld [vmem:[%s14] sm:$0x3]
        %v636 = vld [vmem:[%s624] sm:$0xff]
        %v637 = vld [vmem:[%s624 + $0x8] sm:$0xff]
        %v638 = vld [vmem:[%s631] sm:$0xff]
        %v639 = vld [vmem:[%s631 + $0x8] sm:$0xff]
        %v640 = vld [vmem:[%s631 + $0x10] sm:$0xff]
        %v641 = vld [vmem:[%s631 + $0x18] sm:$0xff]
        %v642 = vld [vmem:[#allocation2] sm:$0xff]
        %v643 = vld [vmem:[#allocation2 + $0x8] sm:$0xff]
        %v644 = vld [vmem:[#allocation2 + $0x10] sm:$0xff]
        %v645 = vld [vmem:[#allocation2 + $0x18] sm:$0xff]
        %v646 = vlaneseq
        %v647 = vshrl.u32 %v646, 7
        %v648 = vsub.s32 0, %v647
        %v649 = vrot.slane %v635, %v648
        %vm650 = vcmask 261120
        %v652 = vsel %vm650, %v636, 0
        %v655 = vsel %vm650, %v637, 0
        %657 = vmatprep.subr.mxu0 0.0
        %658 = vmatpush1.msra.mxu0 %v642
        %659 = vmatprep.subr.mxu0 0.0
        %660 = vmatpush1.msra.mxu0 %v643
        %661 = vmatprep.subr.mxu0 0.0
        %662 = vmatpush1.msra.mxu0 %v644
        %663 = vmatprep.subr.mxu0 0.0
        %664 = vmatpush1.msra.mxu0 %v645
        %665 = vmatprep.subr.mxu0 0.0
        %666 = vmatpush1.msra.mxu0 0.0
        %667 = vmatprep.subr.mxu0 0.0
        %668 = vmatpush1.msra.mxu0 0.0
        %669 = vmatprep.subr.mxu0 0.0
        %670 = vmatpush1.msra.mxu0 0.0
        %671 = vmatprep.subr.mxu0 0.0
        %672 = vmatpush1.msra.mxu0 0.0
        %673 = vmatprep.subr.mxu0 0.0
        %674 = vmatpush1.msra.mxu0 0.0
        %675 = vmatprep.subr.mxu0 0.0
        %676 = vmatpush1.msra.mxu0 0.0
        %677 = vmatprep.subr.mxu0 0.0
        %678 = vmatpush1.msra.mxu0 0.0
        %679 = vmatprep.subr.mxu0 0.0
        %680 = vmatpush1.msra.mxu0 0.0
        %681 = vmatprep.subr.mxu0 0.0
        %682 = vmatpush1.msra.mxu0 0.0
        %683 = vmatprep.subr.mxu0 0.0
        %684 = vmatpush1.msra.mxu0 0.0
        %685 = vmatprep.subr.mxu0 0.0
        %686 = vmatpush1.msra.mxu0 0.0
        %687 = vmatprep.subr.mxu0 0.0
        %688 = vmatpush1.msra.mxu0 0.0
        %689 = vmatprep.subr.mxu0 0.0
        %690 = vmatpush1.msra.mxu0 0.0
        %691 = vmatprep.subr.mxu0 0.0
        %692 = vmatpush1.msra.mxu0 0.0
        %693 = vmatprep.subr.mxu0 0.0
        %694 = vmatpush1.msra.mxu0 0.0
        %695 = vmatprep.subr.mxu0 0.0
        %696 = vmatpush1.msra.mxu0 0.0
        %697 = vmatprep.subr.mxu0 0.0
        %698 = vmatpush1.msra.mxu0 0.0
        %699 = vmatprep.subr.mxu0 0.0
        %700 = vmatpush1.msra.mxu0 0.0
        %701 = vmatprep.subr.mxu0 0.0
        %702 = vmatpush1.msra.mxu0 0.0
        %703 = vmatprep.subr.mxu0 0.0
        %704 = vmatpush1.msra.mxu0 0.0
        %705 = vmatprep.subr.mxu0 0.0
        %706 = vmatpush1.msra.mxu0 0.0
        %707 = vmatprep.subr.mxu0 0.0
        %708 = vmatpush1.msra.mxu0 0.0
        %709 = vmatprep.subr.mxu0 0.0
        %710 = vmatpush1.msra.mxu0 0.0
        %711 = vmatprep.subr.mxu0 0.0
        %712 = vmatpush1.msra.mxu0 0.0
        %713 = vmatprep.subr.mxu0 0.0
        %714 = vmatpush1.msra.mxu0 0.0
        %715 = vmatprep.subr.mxu0 0.0
        %716 = vmatpush1.msra.mxu0 0.0
        %717 = vmatprep.subr.mxu0 0.0
        %718 = vmatpush1.msra.mxu0 0.0
        %719 = vmatprep.subr.mxu0 0.0
        %720 = vmatpush1.msra.mxu0 0.0
        %721 = vmatprep.mubr.f32.mxu0 0.0
        %722 = vmatmul.mubr.f32.gmra.mrb[0].mxu0 %v652
        %v723 = vpop.f32.mrb[0].mxu0
        %v724 = vadd.f32 %v649, %v723
        %v725 = vpop.f32.mrb[0].mxu0
        %726 = vmatprep.mubr.f32.mxu0 0.0
        %727 = vmatmul.mubr.f32.gmra.mrb[0].mxu0 %v655
        %v728 = vpop.f32.mrb[0].mxu0
        %v729 = vadd.f32 %v649, %v728
        %v730 = vpop.f32.mrb[0].mxu0
        %731 = vdwg.mxu0
        %v732 = vmul.f32 %v724, 0.5
        %v733 = vmul.f32 %v729, 0.5
        %v734 = vrcp.pop 1.4142135
        %v735 = vmul.f32 %v724, %v734
        %v736 = vmul.f32 %v729, %v734
        %v737 = verf.f32.pop %v735
        %v738 = verf.f32.pop %v736
        %v739 = vadd.f32 %v737, 1.0
        %v740 = vadd.f32 %v738, 1.0
        %v741 = vmul.f32 %v732, %v739
        %v742 = vmul.f32 %v733, %v740
        %v743 = vld [vmem:[%s3] sm:$0xff]
        %v744 = vld [vmem:[%s3 + $0x8] sm:$0xff]
        %v745 = vld [vmem:[%s3 + $0x10] sm:$0xff]
        %v746 = vld [vmem:[%s3 + $0x18] sm:$0xff]
        %v747 = vld [vmem:[%s3 + $0x20] sm:$0xff]
        %v748 = vld [vmem:[%s3 + $0x28] sm:$0xff]
        %v749 = vld [vmem:[%s3 + $0x30] sm:$0xff]
        %v750 = vld [vmem:[%s3 + $0x38] sm:$0xff]
        %v751 = vlaneseq
        %v752 = vshrl.u32 %v751, 7
        %v753 = vsub.s32 0, %v752
        %v754 = vrot.slane %v633, %v753
        %vm755 = vcmask 523264
        %v757 = vsel %vm755, %v741, 0
        %v760 = vsel %vm755, %v742, 0
        %762 = vmatprep.subr.mxu0 0.0
        %763 = vmatpush1.msra.mxu0 %v743
        %764 = vmatprep.subr.mxu0 0.0
        %765 = vmatpush1.msra.mxu0 %v744
        %766 = vmatprep.subr.mxu0 0.0
        %767 = vmatpush1.msra.mxu0 %v745
        %768 = vmatprep.subr.mxu0 0.0
        %769 = vmatpush1.msra.mxu0 %v746
        %770 = vmatprep.subr.mxu0 0.0
        %771 = vmatpush1.msra.mxu0 %v747
        %772 = vmatprep.subr.mxu0 0.0
        %773 = vmatpush1.msra.mxu0 %v748
        %774 = vmatprep.subr.mxu0 0.0
        %775 = vmatpush1.msra.mxu0 %v749
        %776 = vmatprep.subr.mxu0 0.0
        %777 = vmatpush1.msra.mxu0 %v750
        %778 = vmatprep.subr.mxu0 0.0
        %779 = vmatpush1.msra.mxu0 0.0
        %780 = vmatprep.subr.mxu0 0.0
        %781 = vmatpush1.msra.mxu0 0.0
        %782 = vmatprep.subr.mxu0 0.0
        %783 = vmatpush1.msra.mxu0 0.0
        %784 = vmatprep.subr.mxu0 0.0
        %785 = vmatpush1.msra.mxu0 0.0
        %786 = vmatprep.subr.mxu0 0.0
        %787 = vmatpush1.msra.mxu0 0.0
        %788 = vmatprep.subr.mxu0 0.0
        %789 = vmatpush1.msra.mxu0 0.0
        %790 = vmatprep.subr.mxu0 0.0
        %791 = vmatpush1.msra.mxu0 0.0
        %792 = vmatprep.subr.mxu0 0.0
        %793 = vmatpush1.msra.mxu0 0.0
        %794 = vmatprep.subr.mxu0 0.0
        %795 = vmatpush1.msra.mxu0 0.0
        %796 = vmatprep.subr.mxu0 0.0
        %797 = vmatpush1.msra.mxu0 0.0
        %798 = vmatprep.subr.mxu0 0.0
        %799 = vmatpush1.msra.mxu0 0.0
        %800 = vmatprep.subr.mxu0 0.0
        %801 = vmatpush1.msra.mxu0 0.0
        %802 = vmatprep.subr.mxu0 0.0
        %803 = vmatpush1.msra.mxu0 0.0
        %804 = vmatprep.subr.mxu0 0.0
        %805 = vmatpush1.msra.mxu0 0.0
        %806 = vmatprep.subr.mxu0 0.0
        %807 = vmatpush1.msra.mxu0 0.0
        %808 = vmatprep.subr.mxu0 0.0
        %809 = vmatpush1.msra.mxu0 0.0
        %810 = vmatprep.subr.mxu0 0.0
        %811 = vmatpush1.msra.mxu0 0.0
        %812 = vmatprep.subr.mxu0 0.0
        %813 = vmatpush1.msra.mxu0 0.0
        %814 = vmatprep.subr.mxu0 0.0
        %815 = vmatpush1.msra.mxu0 0.0
        %816 = vmatprep.subr.mxu0 0.0
        %817 = vmatpush1.msra.mxu0 0.0
        %818 = vmatprep.subr.mxu0 0.0
        %819 = vmatpush1.msra.mxu0 0.0
        %820 = vmatprep.subr.mxu0 0.0
        %821 = vmatpush1.msra.mxu0 0.0
        %822 = vmatprep.subr.mxu0 0.0
        %823 = vmatpush1.msra.mxu0 0.0
        %824 = vmatprep.subr.mxu0 0.0
        %825 = vmatpush1.msra.mxu0 0.0
        %826 = vmatprep.mubr.f32.mxu0 0.0
        %827 = vmatmul.mubr.f32.gmra.mrb[0].mxu0 %v757
        %v828 = vpop.f32.mrb[0].mxu0
        %v829 = vadd.f32 %v754, %v828
        %v830 = vpop.f32.mrb[0].mxu0
        %831 = vmatprep.mubr.f32.mxu0 0.0
        %832 = vmatmul.mubr.f32.gmra.mrb[0].mxu0 %v760
        %v833 = vpop.f32.mrb[0].mxu0
        %v834 = vadd.f32 %v754, %v833
        %v835 = vpop.f32.mrb[0].mxu0
        %836 = vdwg.mxu0
        %v837 = vsel %vm650, %v829, 0.0
        %838 = vadd.xlane.f32.xlu0 %v837
        %v839 = vpop.xlane.xlu0 %838
        %v840 = vsel %vm650, %v834, 0.0
        %841 = vadd.xlane.f32.xlu0 %v840
        %v842 = vpop.xlane.xlu0 %841
        %v843 = vrcp.pop 32.0
        %v844 = vmul.f32 %v839, %v843
        %v845 = vmul.f32 %v842, %v843
        %v846 = vsub.f32 %v829, %v844
        %v847 = vsub.f32 %v834, %v845
        %v848 = vmul.f32 %v846, %v846
        %v849 = vmul.f32 %v847, %v847
        %v850 = vsel %vm650, %v848, 0.0
        %851 = vadd.xlane.f32.xlu0 %v850
        %v852 = vpop.xlane.xlu0 %851
        %v853 = vsel %vm650, %v849, 0.0
        %854 = vadd.xlane.f32.xlu0 %v853
        %v855 = vpop.xlane.xlu0 %854
        %v856 = vmul.f32 %v852, %v843
        %v857 = vmul.f32 %v855, %v843
        %v858 = vadd.f32 %v856, 1e-05
        %v859 = vadd.f32 %v857, 1e-05
        %v860 = vrsqrt.pop %v858
        %v861 = vrsqrt.pop %v859
        %v862 = vmul.f32 %v846, %v860
        %v863 = vmul.f32 %v847, %v861
        %v864 = vlaneseq
        %v865 = vshrl.u32 %v864, 7
        %v866 = vsub.s32 3, %v865
        %v867 = vrot.slane %v633, %v866
        %v868 = vmul.f32 %v862, %v867
        %v869 = vmul.f32 %v863, %v867
        %v870 = vlaneseq
        %v871 = vshrl.u32 %v870, 7
        %v872 = vsub.s32 4, %v871
        %v873 = vrot.slane %v633, %v872
        %v874 = vadd.f32 %v868, %v873
        %v875 = vadd.f32 %v869, %v873
        %v876 = vld [vmem:[#allocation8] sm:$0xff]
        %v877 = vld [vmem:[#allocation8 + $0x8] sm:$0xff]
        %v878 = vld [vmem:[#allocation8 + $0x10] sm:$0xff]
        %v879 = vld [vmem:[#allocation8 + $0x18] sm:$0xff]
        %v880 = vld [vmem:[#allocation10] sm:$0x1]
        %v882 = vlaneseq
        %v883 = vshrl.u32 %v882, 7
        %v884 = vsub.s32 0, %v883
        %v885 = vrot.slane %v880, %v884
        %v888 = vsel %vm650, %v874, 0
        %v891 = vsel %vm650, %v875, 0
        %893 = vmatprep.subr.mxu0 0.0
        %894 = vmatpush1.msra.mxu0 %v876
        %895 = vmatprep.subr.mxu0 0.0
        %896 = vmatpush1.msra.mxu0 %v877
        %897 = vmatprep.subr.mxu0 0.0
        %898 = vmatpush1.msra.mxu0 %v878
        %899 = vmatprep.subr.mxu0 0.0
        %900 = vmatpush1.msra.mxu0 %v879
        %901 = vmatprep.subr.mxu0 0.0
        %902 = vmatpush1.msra.mxu0 0.0
        %903 = vmatprep.subr.mxu0 0.0
        %904 = vmatpush1.msra.mxu0 0.0
        %905 = vmatprep.subr.mxu0 0.0
        %906 = vmatpush1.msra.mxu0 0.0
        %907 = vmatprep.subr.mxu0 0.0
        %908 = vmatpush1.msra.mxu0 0.0
        %909 = vmatprep.subr.mxu0 0.0
        %910 = vmatpush1.msra.mxu0 0.0
        %911 = vmatprep.subr.mxu0 0.0
        %912 = vmatpush1.msra.mxu0 0.0
        %913 = vmatprep.subr.mxu0 0.0
        %914 = vmatpush1.msra.mxu0 0.0
        %915 = vmatprep.subr.mxu0 0.0
        %916 = vmatpush1.msra.mxu0 0.0
        %917 = vmatprep.subr.mxu0 0.0
        %918 = vmatpush1.msra.mxu0 0.0
        %919 = vmatprep.subr.mxu0 0.0
        %920 = vmatpush1.msra.mxu0 0.0
        %921 = vmatprep.subr.mxu0 0.0
        %922 = vmatpush1.msra.mxu0 0.0
        %923 = vmatprep.subr.mxu0 0.0
        %924 = vmatpush1.msra.mxu0 0.0
        %925 = vmatprep.subr.mxu0 0.0
        %926 = vmatpush1.msra.mxu0 0.0
        %927 = vmatprep.subr.mxu0 0.0
        %928 = vmatpush1.msra.mxu0 0.0
        %929 = vmatprep.subr.mxu0 0.0
        %930 = vmatpush1.msra.mxu0 0.0
        %931 = vmatprep.subr.mxu0 0.0
        %932 = vmatpush1.msra.mxu0 0.0
        %933 = vmatprep.subr.mxu0 0.0
        %934 = vmatpush1.msra.mxu0 0.0
        %935 = vmatprep.subr.mxu0 0.0
        %936 = vmatpush1.msra.mxu0 0.0
        %937 = vmatprep.subr.mxu0 0.0
        %938 = vmatpush1.msra.mxu0 0.0
        %939 = vmatprep.subr.mxu0 0.0
        %940 = vmatpush1.msra.mxu0 0.0
        %941 = vmatprep.subr.mxu0 0.0
        %942 = vmatpush1.msra.mxu0 0.0
        %943 = vmatprep.subr.mxu0 0.0
        %944 = vmatpush1.msra.mxu0 0.0
        %945 = vmatprep.subr.mxu0 0.0
        %946 = vmatpush1.msra.mxu0 0.0
        %947 = vmatprep.subr.mxu0 0.0
        %948 = vmatpush1.msra.mxu0 0.0
        %949 = vmatprep.subr.mxu0 0.0
        %950 = vmatpush1.msra.mxu0 0.0
        %951 = vmatprep.subr.mxu0 0.0
        %952 = vmatpush1.msra.mxu0 0.0
        %953 = vmatprep.subr.mxu0 0.0
        %954 = vmatpush1.msra.mxu0 0.0
        %955 = vmatprep.subr.mxu0 0.0
        %956 = vmatpush1.msra.mxu0 0.0
        %957 = vmatprep.mubr.f32.mxu0 0.0
        %958 = vmatmul.mubr.f32.gmra.mrb[0].mxu0 %v888
        %v959 = vpop.f32.mrb[0].mxu0
        %v960 = vadd.f32 %v885, %v959
        %v961 = vpop.f32.mrb[0].mxu0
        %962 = vmatprep.mubr.f32.mxu0 0.0
        %963 = vmatmul.mubr.f32.gmra.mrb[0].mxu0 %v891
        %v964 = vpop.f32.mrb[0].mxu0
        %v965 = vadd.f32 %v885, %v964
        %v966 = vpop.f32.mrb[0].mxu0
        %967 = vdwg.mxu0
        %972 = vrot.lane.b32.xlu0 %v876, 96
        %v973 = vpop.permute.xlu0 %972
        %974 = vrot.lane.b32.xlu0 %v877, 96
        %v975 = vpop.permute.xlu0 %974
        %976 = vrot.lane.b32.xlu0 %v878, 96
        %v977 = vpop.permute.xlu0 %976
        %978 = vrot.lane.b32.xlu0 %v879, 96
        %v979 = vpop.permute.xlu0 %978
        %984 = vrot.lane.b32.xlu0 %v885, 96
        %v985 = vpop.permute.xlu0 %984
        %v988 = vsel %vm650, %v638, 0
        %v991 = vsel %vm650, %v639, 0
        %v994 = vsel %vm650, %v640, 0
        %v997 = vsel %vm650, %v641, 0
        %999 = vmatprep.subr.mxu0 0.0
        %1000 = vmatpush1.msra.mxu0 %v973
        %1001 = vmatprep.subr.mxu0 0.0
        %1002 = vmatpush1.msra.mxu0 %v975
        %1003 = vmatprep.subr.mxu0 0.0
        %1004 = vmatpush1.msra.mxu0 %v977
        %1005 = vmatprep.subr.mxu0 0.0
        %1006 = vmatpush1.msra.mxu0 %v979
        %1007 = vmatprep.subr.mxu0 0.0
        %1008 = vmatpush1.msra.mxu0 0.0
        %1009 = vmatprep.subr.mxu0 0.0
        %1010 = vmatpush1.msra.mxu0 0.0
        %1011 = vmatprep.subr.mxu0 0.0
        %1012 = vmatpush1.msra.mxu0 0.0
        %1013 = vmatprep.subr.mxu0 0.0
        %1014 = vmatpush1.msra.mxu0 0.0
        %1015 = vmatprep.subr.mxu0 0.0
        %1016 = vmatpush1.msra.mxu0 0.0
        %1017 = vmatprep.subr.mxu0 0.0
        %1018 = vmatpush1.msra.mxu0 0.0
        %1019 = vmatprep.subr.mxu0 0.0
        %1020 = vmatpush1.msra.mxu0 0.0
        %1021 = vmatprep.subr.mxu0 0.0
        %1022 = vmatpush1.msra.mxu0 0.0
        %1023 = vmatprep.subr.mxu0 0.0
        %1024 = vmatpush1.msra.mxu0 0.0
        %1025 = vmatprep.subr.mxu0 0.0
        %1026 = vmatpush1.msra.mxu0 0.0
        %1027 = vmatprep.subr.mxu0 0.0
        %1028 = vmatpush1.msra.mxu0 0.0
        %1029 = vmatprep.subr.mxu0 0.0
        %1030 = vmatpush1.msra.mxu0 0.0
        %1031 = vmatprep.subr.mxu0 0.0
        %1032 = vmatpush1.msra.mxu0 0.0
        %1033 = vmatprep.subr.mxu0 0.0
        %1034 = vmatpush1.msra.mxu0 0.0
        %1035 = vmatprep.subr.mxu0 0.0
        %1036 = vmatpush1.msra.mxu0 0.0
        %1037 = vmatprep.subr.mxu0 0.0
        %1038 = vmatpush1.msra.mxu0 0.0
        %1039 = vmatprep.subr.mxu0 0.0
        %1040 = vmatpush1.msra.mxu0 0.0
        %1041 = vmatprep.subr.mxu0 0.0
        %1042 = vmatpush1.msra.mxu0 0.0
        %1043 = vmatprep.subr.mxu0 0.0
        %1044 = vmatpush1.msra.mxu0 0.0
        %1045 = vmatprep.subr.mxu0 0.0
        %1046 = vmatpush1.msra.mxu0 0.0
        %1047 = vmatprep.subr.mxu0 0.0
        %1048 = vmatpush1.msra.mxu0 0.0
        %1049 = vmatprep.subr.mxu0 0.0
        %1050 = vmatpush1.msra.mxu0 0.0
        %1051 = vmatprep.subr.mxu0 0.0
        %1052 = vmatpush1.msra.mxu0 0.0
        %1053 = vmatprep.subr.mxu0 0.0
        %1054 = vmatpush1.msra.mxu0 0.0
        %1055 = vmatprep.subr.mxu0 0.0
        %1056 = vmatpush1.msra.mxu0 0.0
        %1057 = vmatprep.subr.mxu0 0.0
        %1058 = vmatpush1.msra.mxu0 0.0
        %1059 = vmatprep.subr.mxu0 0.0
        %1060 = vmatpush1.msra.mxu0 0.0
        %1061 = vmatprep.subr.mxu0 0.0
        %1062 = vmatpush1.msra.mxu0 0.0
        %1063 = vmatprep.mubr.f32.mxu0 0.0
        %1064 = vmatmul.mubr.f32.gmra.mrb[0].mxu0 %v988
        %v1065 = vpop.f32.mrb[0].mxu0
        %v1066 = vadd.f32 %v985, %v1065
        %v1067 = vpop.f32.mrb[0].mxu0
        %1068 = vmatprep.mubr.f32.mxu0 0.0
        %1069 = vmatmul.mubr.f32.gmra.mrb[0].mxu0 %v991
        %v1070 = vpop.f32.mrb[0].mxu0
        %v1071 = vadd.f32 %v985, %v1070
        %v1072 = vpop.f32.mrb[0].mxu0
        %1073 = vmatprep.mubr.f32.mxu0 0.0
        %1074 = vmatmul.mubr.f32.gmra.mrb[0].mxu0 %v994
        %v1075 = vpop.f32.mrb[0].mxu0
        %v1076 = vadd.f32 %v985, %v1075
        %v1077 = vpop.f32.mrb[0].mxu0
        %1078 = vmatprep.mubr.f32.mxu0 0.0
        %1079 = vmatmul.mubr.f32.gmra.mrb[0].mxu0 %v997
        %v1080 = vpop.f32.mrb[0].mxu0
        %v1081 = vadd.f32 %v985, %v1080
        %v1082 = vpop.f32.mrb[0].mxu0
        %1083 = vdwg.mxu0
        %vm1084 = vcmask 64512
        %v1086 = vsel %vm1084, %v960, 0
        %v1089 = vsel %vm1084, %v1066, 0
        %v1092 = vsel %vm1084, %v1071, 0
        %1094 = vmatprep.subr.mxu0 0.0
        %1095 = vmatpush1.xpose.msra.mxu0 %v1089
        %1096 = vmatprep.subr.mxu0 0.0
        %1097 = vmatpush1.xpose.msra.mxu0 %v1092
        %1098 = vmatprep.subr.mxu0 0.0
        %1099 = vmatpush1.xpose.msra.mxu0 0.0
        %1100 = vmatprep.subr.mxu0 0.0
        %1101 = vmatpush1.xpose.msra.mxu0 0.0
        %1102 = vmatprep.subr.mxu0 0.0
        %1103 = vmatpush1.xpose.msra.mxu0 0.0
        %1104 = vmatprep.subr.mxu0 0.0
        %1105 = vmatpush1.xpose.msra.mxu0 0.0
        %1106 = vmatprep.subr.mxu0 0.0
        %1107 = vmatpush1.xpose.msra.mxu0 0.0
        %1108 = vmatprep.subr.mxu0 0.0
        %1109 = vmatpush1.xpose.msra.mxu0 0.0
        %1110 = vmatprep.subr.mxu0 0.0
        %1111 = vmatpush1.xpose.msra.mxu0 0.0
        %1112 = vmatprep.subr.mxu0 0.0
        %1113 = vmatpush1.xpose.msra.mxu0 0.0
        %1114 = vmatprep.subr.mxu0 0.0
        %1115 = vmatpush1.xpose.msra.mxu0 0.0
        %1116 = vmatprep.subr.mxu0 0.0
        %1117 = vmatpush1.xpose.msra.mxu0 0.0
        %1118 = vmatprep.subr.mxu0 0.0
        %1119 = vmatpush1.xpose.msra.mxu0 0.0
        %1120 = vmatprep.subr.mxu0 0.0
        %1121 = vmatpush1.xpose.msra.mxu0 0.0
        %1122 = vmatprep.subr.mxu0 0.0
        %1123 = vmatpush1.xpose.msra.mxu0 0.0
        %1124 = vmatprep.subr.mxu0 0.0
        %1125 = vmatpush1.xpose.msra.mxu0 0.0
        %1126 = vmatprep.subr.mxu0 0.0
        %1127 = vmatpush1.xpose.msra.mxu0 0.0
        %1128 = vmatprep.subr.mxu0 0.0
        %1129 = vmatpush1.xpose.msra.mxu0 0.0
        %1130 = vmatprep.subr.mxu0 0.0
        %1131 = vmatpush1.xpose.msra.mxu0 0.0
        %1132 = vmatprep.subr.mxu0 0.0
        %1133 = vmatpush1.xpose.msra.mxu0 0.0
        %1134 = vmatprep.subr.mxu0 0.0
        %1135 = vmatpush1.xpose.msra.mxu0 0.0
        %1136 = vmatprep.subr.mxu0 0.0
        %1137 = vmatpush1.xpose.msra.mxu0 0.0
        %1138 = vmatprep.subr.mxu0 0.0
        %1139 = vmatpush1.xpose.msra.mxu0 0.0
        %1140 = vmatprep.subr.mxu0 0.0
        %1141 = vmatpush1.xpose.msra.mxu0 0.0
        %1142 = vmatprep.subr.mxu0 0.0
        %1143 = vmatpush1.xpose.msra.mxu0 0.0
        %1144 = vmatprep.subr.mxu0 0.0
        %1145 = vmatpush1.xpose.msra.mxu0 0.0
        %1146 = vmatprep.subr.mxu0 0.0
        %1147 = vmatpush1.xpose.msra.mxu0 0.0
        %1148 = vmatprep.subr.mxu0 0.0
        %1149 = vmatpush1.xpose.msra.mxu0 0.0
        %1150 = vmatprep.subr.mxu0 0.0
        %1151 = vmatpush1.xpose.msra.mxu0 0.0
        %1152 = vmatprep.subr.mxu0 0.0
        %1153 = vmatpush1.xpose.msra.mxu0 0.0
        %1154 = vmatprep.subr.mxu0 0.0
        %1155 = vmatpush1.xpose.msra.mxu0 0.0
        %1156 = vmatprep.subr.mxu0 0.0
        %1157 = vmatpush1.xpose.msra.mxu0 0.0
        %1158 = vmatprep.mubr.f32.mxu0 0.0
        %1159 = vmatmul.mubr.f32.gmra.mrb[0].mxu0 %v1086
        %v1160 = vpop.f32.mrb[0].mxu0
        %v1161 = vadd.f32 0.0, %v1160
        %v1162 = vpop.f32.mrb[0].mxu0
        %1163 = vdwg.mxu0
        %v1165 = vsel %vm1084, %v965, 0
        %v1168 = vsel %vm1084, %v1076, 0
        %v1171 = vsel %vm1084, %v1081, 0
        %1173 = vmatprep.subr.mxu0 0.0
        %1174 = vmatpush1.xpose.msra.mxu0 %v1168
        %1175 = vmatprep.subr.mxu0 0.0
        %1176 = vmatpush1.xpose.msra.mxu0 %v1171
        %1177 = vmatprep.subr.mxu0 0.0
        %1178 = vmatpush1.xpose.msra.mxu0 0.0
        %1179 = vmatprep.subr.mxu0 0.0
        %1180 = vmatpush1.xpose.msra.mxu0 0.0
        %1181 = vmatprep.subr.mxu0 0.0
        %1182 = vmatpush1.xpose.msra.mxu0 0.0
        %1183 = vmatprep.subr.mxu0 0.0
        %1184 = vmatpush1.xpose.msra.mxu0 0.0
        %1185 = vmatprep.subr.mxu0 0.0
        %1186 = vmatpush1.xpose.msra.mxu0 0.0
        %1187 = vmatprep.subr.mxu0 0.0
        %1188 = vmatpush1.xpose.msra.mxu0 0.0
        %1189 = vmatprep.subr.mxu0 0.0
        %1190 = vmatpush1.xpose.msra.mxu0 0.0
        %1191 = vmatprep.subr.mxu0 0.0
        %1192 = vmatpush1.xpose.msra.mxu0 0.0
        %1193 = vmatprep.subr.mxu0 0.0
        %1194 = vmatpush1.xpose.msra.mxu0 0.0
        %1195 = vmatprep.subr.mxu0 0.0
        %1196 = vmatpush1.xpose.msra.mxu0 0.0
        %1197 = vmatprep.subr.mxu0 0.0
        %1198 = vmatpush1.xpose.msra.mxu0 0.0
        %1199 = vmatprep.subr.mxu0 0.0
        %1200 = vmatpush1.xpose.msra.mxu0 0.0
        %1201 = vmatprep.subr.mxu0 0.0
        %1202 = vmatpush1.xpose.msra.mxu0 0.0
        %1203 = vmatprep.subr.mxu0 0.0
        %1204 = vmatpush1.xpose.msra.mxu0 0.0
        %1205 = vmatprep.subr.mxu0 0.0
        %1206 = vmatpush1.xpose.msra.mxu0 0.0
        %1207 = vmatprep.subr.mxu0 0.0
        %1208 = vmatpush1.xpose.msra.mxu0 0.0
        %1209 = vmatprep.subr.mxu0 0.0
        %1210 = vmatpush1.xpose.msra.mxu0 0.0
        %1211 = vmatprep.subr.mxu0 0.0
        %1212 = vmatpush1.xpose.msra.mxu0 0.0
        %1213 = vmatprep.subr.mxu0 0.0
        %1214 = vmatpush1.xpose.msra.mxu0 0.0
        %1215 = vmatprep.subr.mxu0 0.0
        %1216 = vmatpush1.xpose.msra.mxu0 0.0
        %1217 = vmatprep.subr.mxu0 0.0
        %1218 = vmatpush1.xpose.msra.mxu0 0.0
        %1219 = vmatprep.subr.mxu0 0.0
        %1220 = vmatpush1.xpose.msra.mxu0 0.0
        %1221 = vmatprep.subr.mxu0 0.0
        %1222 = vmatpush1.xpose.msra.mxu0 0.0
        %1223 = vmatprep.subr.mxu0 0.0
        %1224 = vmatpush1.xpose.msra.mxu0 0.0
        %1225 = vmatprep.subr.mxu0 0.0
        %1226 = vmatpush1.xpose.msra.mxu0 0.0
        %1227 = vmatprep.subr.mxu0 0.0
        %1228 = vmatpush1.xpose.msra.mxu0 0.0
        %1229 = vmatprep.subr.mxu0 0.0
        %1230 = vmatpush1.xpose.msra.mxu0 0.0
        %1231 = vmatprep.subr.mxu0 0.0
        %1232 = vmatpush1.xpose.msra.mxu0 0.0
        %1233 = vmatprep.subr.mxu0 0.0
        %1234 = vmatpush1.xpose.msra.mxu0 0.0
        %1235 = vmatprep.subr.mxu0 0.0
        %1236 = vmatpush1.xpose.msra.mxu0 0.0
        %1237 = vmatprep.mubr.f32.mxu0 0.0
        %1238 = vmatmul.mubr.f32.gmra.mrb[0].mxu0 %v1165
        %v1239 = vpop.f32.mrb[0].mxu0
        %v1240 = vadd.f32 0.0, %v1239
        %v1241 = vpop.f32.mrb[0].mxu0
        %1242 = vdwg.mxu0
        %v1243 = vmul.f32 %v1161, 0.35355338
        %v1244 = vmul.f32 %v1240, 0.35355338
        %vm1245 = vcmask 130048
        %v1246 = vsel %vm1245, %v1243, -inf
        %1247 = vmax.xlane.f32.xlu0 %v1246
        %v1248 = vpop.xlane.xlu0 %1247
        %v1249 = vsel %vm1245, %v1244, -inf
        %1250 = vmax.xlane.f32.xlu0 %v1249
        %v1251 = vpop.xlane.xlu0 %1250
        %v1252 = vsub.f32 %v1243, %v1248
        %v1253 = vsub.f32 %v1244, %v1251
        %v1254 = vmul.f32 %v1252, 1.442695
        %v1255 = vpow.pop %v1254
        %v1256 = vmul.f32 %v1253, 1.442695
        %v1257 = vpow.pop %v1256
        %v1258 = vsel %vm1245, %v1255, 0.0
        %1259 = vadd.xlane.f32.xlu0 %v1258
        %v1260 = vpop.xlane.xlu0 %1259
        %v1261 = vsel %vm1245, %v1257, 0.0
        %1262 = vadd.xlane.f32.xlu0 %v1261
        %v1263 = vpop.xlane.xlu0 %1262
        %1264 = vrot.lane.b32.xlu0 %v1066, 96
        %v1265 = vpop.permute.xlu0 %1264
        %1266 = vrot.lane.b32.xlu0 %v1071, 96
        %v1267 = vpop.permute.xlu0 %1266
        %v1271 = vsel %vm1245, %v1255, 0
        %1273 = vmatprep.subr.mxu0 0.0
        %1274 = vmatpush1.msra.mxu0 %v1265
        %1275 = vmatprep.subr.mxu0 0.0
        %1276 = vmatpush1.msra.mxu0 %v1267
        %1277 = vmatprep.subr.mxu0 0.0
        %1278 = vmatpush1.msra.mxu0 0.0
        %1279 = vmatprep.subr.mxu0 0.0
        %1280 = vmatpush1.msra.mxu0 0.0
        %1281 = vmatprep.subr.mxu0 0.0
        %1282 = vmatpush1.msra.mxu0 0.0
        %1283 = vmatprep.subr.mxu0 0.0
        %1284 = vmatpush1.msra.mxu0 0.0
        %1285 = vmatprep.subr.mxu0 0.0
        %1286 = vmatpush1.msra.mxu0 0.0
        %1287 = vmatprep.subr.mxu0 0.0
        %1288 = vmatpush1.msra.mxu0 0.0
        %1289 = vmatprep.subr.mxu0 0.0
        %1290 = vmatpush1.msra.mxu0 0.0
        %1291 = vmatprep.subr.mxu0 0.0
        %1292 = vmatpush1.msra.mxu0 0.0
        %1293 = vmatprep.subr.mxu0 0.0
        %1294 = vmatpush1.msra.mxu0 0.0
        %1295 = vmatprep.subr.mxu0 0.0
        %1296 = vmatpush1.msra.mxu0 0.0
        %1297 = vmatprep.subr.mxu0 0.0
        %1298 = vmatpush1.msra.mxu0 0.0
        %1299 = vmatprep.subr.mxu0 0.0
        %1300 = vmatpush1.msra.mxu0 0.0
        %1301 = vmatprep.subr.mxu0 0.0
        %1302 = vmatpush1.msra.mxu0 0.0
        %1303 = vmatprep.subr.mxu0 0.0
        %1304 = vmatpush1.msra.mxu0 0.0
        %1305 = vmatprep.subr.mxu0 0.0
        %1306 = vmatpush1.msra.mxu0 0.0
        %1307 = vmatprep.subr.mxu0 0.0
        %1308 = vmatpush1.msra.mxu0 0.0
        %1309 = vmatprep.subr.mxu0 0.0
        %1310 = vmatpush1.msra.mxu0 0.0
        %1311 = vmatprep.subr.mxu0 0.0
        %1312 = vmatpush1.msra.mxu0 0.0
        %1313 = vmatprep.subr.mxu0 0.0
        %1314 = vmatpush1.msra.mxu0 0.0
        %1315 = vmatprep.subr.mxu0 0.0
        %1316 = vmatpush1.msra.mxu0 0.0
        %1317 = vmatprep.subr.mxu0 0.0
        %1318 = vmatpush1.msra.mxu0 0.0
        %1319 = vmatprep.subr.mxu0 0.0
        %1320 = vmatpush1.msra.mxu0 0.0
        %1321 = vmatprep.subr.mxu0 0.0
        %1322 = vmatpush1.msra.mxu0 0.0
        %1323 = vmatprep.subr.mxu0 0.0
        %1324 = vmatpush1.msra.mxu0 0.0
        %1325 = vmatprep.subr.mxu0 0.0
        %1326 = vmatpush1.msra.mxu0 0.0
        %1327 = vmatprep.subr.mxu0 0.0
        %1328 = vmatpush1.msra.mxu0 0.0
        %1329 = vmatprep.subr.mxu0 0.0
        %1330 = vmatpush1.msra.mxu0 0.0
        %1331 = vmatprep.subr.mxu0 0.0
        %1332 = vmatpush1.msra.mxu0 0.0
        %1333 = vmatprep.subr.mxu0 0.0
        %1334 = vmatpush1.msra.mxu0 0.0
        %1335 = vmatprep.subr.mxu0 0.0
        %1336 = vmatpush1.msra.mxu0 0.0
        %1337 = vmatprep.mubr.f32.mxu0 0.0
        %1338 = vmatmul.mubr.f32.gmra.mrb[0].mxu0 %v1271
        %v1339 = vpop.f32.mrb[0].mxu0
        %v1340 = vadd.f32 0.0, %v1339
        %v1341 = vpop.f32.mrb[0].mxu0
        %1342 = vdwg.mxu0
        %1343 = vrot.lane.b32.xlu0 %v1076, 96
        %v1344 = vpop.permute.xlu0 %1343
        %1345 = vrot.lane.b32.xlu0 %v1081, 96
        %v1346 = vpop.permute.xlu0 %1345
        %v1350 = vsel %vm1245, %v1257, 0
        %1352 = vmatprep.subr.mxu0 0.0
        %1353 = vmatpush1.msra.mxu0 %v1344
        %1354 = vmatprep.subr.mxu0 0.0
        %1355 = vmatpush1.msra.mxu0 %v1346
        %1356 = vmatprep.subr.mxu0 0.0
        %1357 = vmatpush1.msra.mxu0 0.0
        %1358 = vmatprep.subr.mxu0 0.0
        %1359 = vmatpush1.msra.mxu0 0.0
        %1360 = vmatprep.subr.mxu0 0.0
        %1361 = vmatpush1.msra.mxu0 0.0
        %1362 = vmatprep.subr.mxu0 0.0
        %1363 = vmatpush1.msra.mxu0 0.0
        %1364 = vmatprep.subr.mxu0 0.0
        %1365 = vmatpush1.msra.mxu0 0.0
        %1366 = vmatprep.subr.mxu0 0.0
        %1367 = vmatpush1.msra.mxu0 0.0
        %1368 = vmatprep.subr.mxu0 0.0
        %1369 = vmatpush1.msra.mxu0 0.0
        %1370 = vmatprep.subr.mxu0 0.0
        %1371 = vmatpush1.msra.mxu0 0.0
        %1372 = vmatprep.subr.mxu0 0.0
        %1373 = vmatpush1.msra.mxu0 0.0
        %1374 = vmatprep.subr.mxu0 0.0
        %1375 = vmatpush1.msra.mxu0 0.0
        %1376 = vmatprep.subr.mxu0 0.0
        %1377 = vmatpush1.msra.mxu0 0.0
        %1378 = vmatprep.subr.mxu0 0.0
        %1379 = vmatpush1.msra.mxu0 0.0
        %1380 = vmatprep.subr.mxu0 0.0
        %1381 = vmatpush1.msra.mxu0 0.0
        %1382 = vmatprep.subr.mxu0 0.0
        %1383 = vmatpush1.msra.mxu0 0.0
        %1384 = vmatprep.subr.mxu0 0.0
        %1385 = vmatpush1.msra.mxu0 0.0
        %1386 = vmatprep.subr.mxu0 0.0
        %1387 = vmatpush1.msra.mxu0 0.0
        %1388 = vmatprep.subr.mxu0 0.0
        %1389 = vmatpush1.msra.mxu0 0.0
        %1390 = vmatprep.subr.mxu0 0.0
        %1391 = vmatpush1.msra.mxu0 0.0
        %1392 = vmatprep.subr.mxu0 0.0
        %1393 = vmatpush1.msra.mxu0 0.0
        %1394 = vmatprep.subr.mxu0 0.0
        %1395 = vmatpush1.msra.mxu0 0.0
        %1396 = vmatprep.subr.mxu0 0.0
        %1397 = vmatpush1.msra.mxu0 0.0
        %1398 = vmatprep.subr.mxu0 0.0
        %1399 = vmatpush1.msra.mxu0 0.0
        %1400 = vmatprep.subr.mxu0 0.0
        %1401 = vmatpush1.msra.mxu0 0.0
        %1402 = vmatprep.subr.mxu0 0.0
        %1403 = vmatpush1.msra.mxu0 0.0
        %1404 = vmatprep.subr.mxu0 0.0
        %1405 = vmatpush1.msra.mxu0 0.0
        %1406 = vmatprep.subr.mxu0 0.0
        %1407 = vmatpush1.msra.mxu0 0.0
        %1408 = vmatprep.subr.mxu0 0.0
        %1409 = vmatpush1.msra.mxu0 0.0
        %1410 = vmatprep.subr.mxu0 0.0
        %1411 = vmatpush1.msra.mxu0 0.0
        %1412 = vmatprep.subr.mxu0 0.0
        %1413 = vmatpush1.msra.mxu0 0.0
        %1414 = vmatprep.subr.mxu0 0.0
        %1415 = vmatpush1.msra.mxu0 0.0
        %1416 = vmatprep.mubr.f32.mxu0 0.0
        %1417 = vmatmul.mubr.f32.gmra.mrb[0].mxu0 %v1350
        %v1418 = vpop.f32.mrb[0].mxu0
        %v1419 = vadd.f32 0.0, %v1418
        %v1420 = vpop.f32.mrb[0].mxu0
        %1421 = vdwg.mxu0
        %v1422 = vrcp.pop %v1260
        %v1423 = vrcp.pop %v1263
        %v1424 = vmul.f32 %v1340, %v1422
        %v1425 = vmul.f32 %v1419, %v1423
        %1426 = vrot.lane.b32.xlu0 %v960, 120
        %v1427 = vpop.permute.xlu0 %1426
        %1428 = vrot.lane.b32.xlu0 %v1066, 120
        %v1429 = vpop.permute.xlu0 %1428
        %1430 = vrot.lane.b32.xlu0 %v1071, 120
        %v1431 = vpop.permute.xlu0 %1430
        %v1432 = vsel %vm1084, %v1427, 0
        %v1434 = vsel %vm1084, %v1429, 0
        %v1436 = vsel %vm1084, %v1431, 0
        %1438 = vmatprep.subr.mxu0 0.0
        %1439 = vmatpush1.xpose.msra.mxu0 %v1434
        %1440 = vmatprep.subr.mxu0 0.0
        %1441 = vmatpush1.xpose.msra.mxu0 %v1436
        %1442 = vmatprep.subr.mxu0 0.0
        %1443 = vmatpush1.xpose.msra.mxu0 0.0
        %1444 = vmatprep.subr.mxu0 0.0
        %1445 = vmatpush1.xpose.msra.mxu0 0.0
        %1446 = vmatprep.subr.mxu0 0.0
        %1447 = vmatpush1.xpose.msra.mxu0 0.0
        %1448 = vmatprep.subr.mxu0 0.0
        %1449 = vmatpush1.xpose.msra.mxu0 0.0
        %1450 = vmatprep.subr.mxu0 0.0
        %1451 = vmatpush1.xpose.msra.mxu0 0.0
        %1452 = vmatprep.subr.mxu0 0.0
        %1453 = vmatpush1.xpose.msra.mxu0 0.0
        %1454 = vmatprep.subr.mxu0 0.0
        %1455 = vmatpush1.xpose.msra.mxu0 0.0
        %1456 = vmatprep.subr.mxu0 0.0
        %1457 = vmatpush1.xpose.msra.mxu0 0.0
        %1458 = vmatprep.subr.mxu0 0.0
        %1459 = vmatpush1.xpose.msra.mxu0 0.0
        %1460 = vmatprep.subr.mxu0 0.0
        %1461 = vmatpush1.xpose.msra.mxu0 0.0
        %1462 = vmatprep.subr.mxu0 0.0
        %1463 = vmatpush1.xpose.msra.mxu0 0.0
        %1464 = vmatprep.subr.mxu0 0.0
        %1465 = vmatpush1.xpose.msra.mxu0 0.0
        %1466 = vmatprep.subr.mxu0 0.0
        %1467 = vmatpush1.xpose.msra.mxu0 0.0
        %1468 = vmatprep.subr.mxu0 0.0
        %1469 = vmatpush1.xpose.msra.mxu0 0.0
        %1470 = vmatprep.subr.mxu0 0.0
        %1471 = vmatpush1.xpose.msra.mxu0 0.0
        %1472 = vmatprep.subr.mxu0 0.0
        %1473 = vmatpush1.xpose.msra.mxu0 0.0
        %1474 = vmatprep.subr.mxu0 0.0
        %1475 = vmatpush1.xpose.msra.mxu0 0.0
        %1476 = vmatprep.subr.mxu0 0.0
        %1477 = vmatpush1.xpose.msra.mxu0 0.0
        %1478 = vmatprep.subr.mxu0 0.0
        %1479 = vmatpush1.xpose.msra.mxu0 0.0
        %1480 = vmatprep.subr.mxu0 0.0
        %1481 = vmatpush1.xpose.msra.mxu0 0.0
        %1482 = vmatprep.subr.mxu0 0.0
        %1483 = vmatpush1.xpose.msra.mxu0 0.0
        %1484 = vmatprep.subr.mxu0 0.0
        %1485 = vmatpush1.xpose.msra.mxu0 0.0
        %1486 = vmatprep.subr.mxu0 0.0
        %1487 = vmatpush1.xpose.msra.mxu0 0.0
        %1488 = vmatprep.subr.mxu0 0.0
        %1489 = vmatpush1.xpose.msra.mxu0 0.0
        %1490 = vmatprep.subr.mxu0 0.0
        %1491 = vmatpush1.xpose.msra.mxu0 0.0
        %1492 = vmatprep.subr.mxu0 0.0
        %1493 = vmatpush1.xpose.msra.mxu0 0.0
        %1494 = vmatprep.subr.mxu0 0.0
        %1495 = vmatpush1.xpose.msra.mxu0 0.0
        %1496 = vmatprep.subr.mxu0 0.0
        %1497 = vmatpush1.xpose.msra.mxu0 0.0
        %1498 = vmatprep.subr.mxu0 0.0
        %1499 = vmatpush1.xpose.msra.mxu0 0.0
        %1500 = vmatprep.subr.mxu0 0.0
        %1501 = vmatpush1.xpose.msra.mxu0 0.0
        %1502 = vmatprep.mubr.f32.mxu0 0.0
        %1503 = vmatmul.mubr.f32.gmra.mrb[0].mxu0 %v1432
        %v1504 = vpop.f32.mrb[0].mxu0
        %v1505 = vadd.f32 0.0, %v1504
        %v1506 = vpop.f32.mrb[0].mxu0
        %1507 = vdwg.mxu0
        %1508 = vrot.lane.b32.xlu0 %v965, 120
        %v1509 = vpop.permute.xlu0 %1508
        %1510 = vrot.lane.b32.xlu0 %v1076, 120
        %v1511 = vpop.permute.xlu0 %1510
        %1512 = vrot.lane.b32.xlu0 %v1081, 120
        %v1513 = vpop.permute.xlu0 %1512
        %v1514 = vsel %vm1084, %v1509, 0
        %v1516 = vsel %vm1084, %v1511, 0
        %v1518 = vsel %vm1084, %v1513, 0
        %1520 = vmatprep.subr.mxu0 0.0
        %1521 = vmatpush1.xpose.msra.mxu0 %v1516
        %1522 = vmatprep.subr.mxu0 0.0
        %1523 = vmatpush1.xpose.msra.mxu0 %v1518
        %1524 = vmatprep.subr.mxu0 0.0
        %1525 = vmatpush1.xpose.msra.mxu0 0.0
        %1526 = vmatprep.subr.mxu0 0.0
        %1527 = vmatpush1.xpose.msra.mxu0 0.0
        %1528 = vmatprep.subr.mxu0 0.0
        %1529 = vmatpush1.xpose.msra.mxu0 0.0
        %1530 = vmatprep.subr.mxu0 0.0
        %1531 = vmatpush1.xpose.msra.mxu0 0.0
        %1532 = vmatprep.subr.mxu0 0.0
        %1533 = vmatpush1.xpose.msra.mxu0 0.0
        %1534 = vmatprep.subr.mxu0 0.0
        %1535 = vmatpush1.xpose.msra.mxu0 0.0
        %1536 = vmatprep.subr.mxu0 0.0
        %1537 = vmatpush1.xpose.msra.mxu0 0.0
        %1538 = vmatprep.subr.mxu0 0.0
        %1539 = vmatpush1.xpose.msra.mxu0 0.0
        %1540 = vmatprep.subr.mxu0 0.0
        %1541 = vmatpush1.xpose.msra.mxu0 0.0
        %1542 = vmatprep.subr.mxu0 0.0
        %1543 = vmatpush1.xpose.msra.mxu0 0.0
        %1544 = vmatprep.subr.mxu0 0.0
        %1545 = vmatpush1.xpose.msra.mxu0 0.0
        %1546 = vmatprep.subr.mxu0 0.0
        %1547 = vmatpush1.xpose.msra.mxu0 0.0
        %1548 = vmatprep.subr.mxu0 0.0
        %1549 = vmatpush1.xpose.msra.mxu0 0.0
        %1550 = vmatprep.subr.mxu0 0.0
        %1551 = vmatpush1.xpose.msra.mxu0 0.0
        %1552 = vmatprep.subr.mxu0 0.0
        %1553 = vmatpush1.xpose.msra.mxu0 0.0
        %1554 = vmatprep.subr.mxu0 0.0
        %1555 = vmatpush1.xpose.msra.mxu0 0.0
        %1556 = vmatprep.subr.mxu0 0.0
        %1557 = vmatpush1.xpose.msra.mxu0 0.0
        %1558 = vmatprep.subr.mxu0 0.0
        %1559 = vmatpush1.xpose.msra.mxu0 0.0
        %1560 = vmatprep.subr.mxu0 0.0
        %1561 = vmatpush1.xpose.msra.mxu0 0.0
        %1562 = vmatprep.subr.mxu0 0.0
        %1563 = vmatpush1.xpose.msra.mxu0 0.0
        %1564 = vmatprep.subr.mxu0 0.0
        %1565 = vmatpush1.xpose.msra.mxu0 0.0
        %1566 = vmatprep.subr.mxu0 0.0
        %1567 = vmatpush1.xpose.msra.mxu0 0.0
        %1568 = vmatprep.subr.mxu0 0.0
        %1569 = vmatpush1.xpose.msra.mxu0 0.0
        %1570 = vmatprep.subr.mxu0 0.0
        %1571 = vmatpush1.xpose.msra.mxu0 0.0
        %1572 = vmatprep.subr.mxu0 0.0
        %1573 = vmatpush1.xpose.msra.mxu0 0.0
        %1574 = vmatprep.subr.mxu0 0.0
        %1575 = vmatpush1.xpose.msra.mxu0 0.0
        %1576 = vmatprep.subr.mxu0 0.0
        %1577 = vmatpush1.xpose.msra.mxu0 0.0
        %1578 = vmatprep.subr.mxu0 0.0
        %1579 = vmatpush1.xpose.msra.mxu0 0.0
        %1580 = vmatprep.subr.mxu0 0.0
        %1581 = vmatpush1.xpose.msra.mxu0 0.0
        %1582 = vmatprep.subr.mxu0 0.0
        %1583 = vmatpush1.xpose.msra.mxu0 0.0
        %1584 = vmatprep.mubr.f32.mxu0 0.0
        %1585 = vmatmul.mubr.f32.gmra.mrb[0].mxu0 %v1514
        %v1586 = vpop.f32.mrb[0].mxu0
        %v1587 = vadd.f32 0.0, %v1586
        %v1588 = vpop.f32.mrb[0].mxu0
        %1589 = vdwg.mxu0
        %v1590 = vmul.f32 %v1505, 0.35355338
        %v1591 = vmul.f32 %v1587, 0.35355338
        %v1592 = vsel %vm1245, %v1590, -inf
        %1593 = vmax.xlane.f32.xlu0 %v1592
        %v1594 = vpop.xlane.xlu0 %1593
        %v1595 = vsel %vm1245, %v1591, -inf
        %1596 = vmax.xlane.f32.xlu0 %v1595
        %v1597 = vpop.xlane.xlu0 %1596
        %v1598 = vsub.f32 %v1590, %v1594
        %v1599 = vsub.f32 %v1591, %v1597
        %v1600 = vmul.f32 %v1598, 1.442695
        %v1601 = vpow.pop %v1600
        %v1602 = vmul.f32 %v1599, 1.442695
        %v1603 = vpow.pop %v1602
        %v1604 = vsel %vm1245, %v1601, 0.0
        %1605 = vadd.xlane.f32.xlu0 %v1604
        %v1606 = vpop.xlane.xlu0 %1605
        %v1607 = vsel %vm1245, %v1603, 0.0
        %1608 = vadd.xlane.f32.xlu0 %v1607
        %v1609 = vpop.xlane.xlu0 %1608
        %1610 = vrot.lane.b32.xlu0 %v1066, 88
        %v1611 = vpop.permute.xlu0 %1610
        %1612 = vrot.lane.b32.xlu0 %v1071, 88
        %v1613 = vpop.permute.xlu0 %1612
        %v1617 = vsel %vm1245, %v1601, 0
        %1619 = vmatprep.subr.mxu0 0.0
        %1620 = vmatpush1.msra.mxu0 %v1611
        %1621 = vmatprep.subr.mxu0 0.0
        %1622 = vmatpush1.msra.mxu0 %v1613
        %1623 = vmatprep.subr.mxu0 0.0
        %1624 = vmatpush1.msra.mxu0 0.0
        %1625 = vmatprep.subr.mxu0 0.0
        %1626 = vmatpush1.msra.mxu0 0.0
        %1627 = vmatprep.subr.mxu0 0.0
        %1628 = vmatpush1.msra.mxu0 0.0
        %1629 = vmatprep.subr.mxu0 0.0
        %1630 = vmatpush1.msra.mxu0 0.0
        %1631 = vmatprep.subr.mxu0 0.0
        %1632 = vmatpush1.msra.mxu0 0.0
        %1633 = vmatprep.subr.mxu0 0.0
        %1634 = vmatpush1.msra.mxu0 0.0
        %1635 = vmatprep.subr.mxu0 0.0
        %1636 = vmatpush1.msra.mxu0 0.0
        %1637 = vmatprep.subr.mxu0 0.0
        %1638 = vmatpush1.msra.mxu0 0.0
        %1639 = vmatprep.subr.mxu0 0.0
        %1640 = vmatpush1.msra.mxu0 0.0
        %1641 = vmatprep.subr.mxu0 0.0
        %1642 = vmatpush1.msra.mxu0 0.0
        %1643 = vmatprep.subr.mxu0 0.0
        %1644 = vmatpush1.msra.mxu0 0.0
        %1645 = vmatprep.subr.mxu0 0.0
        %1646 = vmatpush1.msra.mxu0 0.0
        %1647 = vmatprep.subr.mxu0 0.0
        %1648 = vmatpush1.msra.mxu0 0.0
        %1649 = vmatprep.subr.mxu0 0.0
        %1650 = vmatpush1.msra.mxu0 0.0
        %1651 = vmatprep.subr.mxu0 0.0
        %1652 = vmatpush1.msra.mxu0 0.0
        %1653 = vmatprep.subr.mxu0 0.0
        %1654 = vmatpush1.msra.mxu0 0.0
        %1655 = vmatprep.subr.mxu0 0.0
        %1656 = vmatpush1.msra.mxu0 0.0
        %1657 = vmatprep.subr.mxu0 0.0
        %1658 = vmatpush1.msra.mxu0 0.0
        %1659 = vmatprep.subr.mxu0 0.0
        %1660 = vmatpush1.msra.mxu0 0.0
        %1661 = vmatprep.subr.mxu0 0.0
        %1662 = vmatpush1.msra.mxu0 0.0
        %1663 = vmatprep.subr.mxu0 0.0
        %1664 = vmatpush1.msra.mxu0 0.0
        %1665 = vmatprep.subr.mxu0 0.0
        %1666 = vmatpush1.msra.mxu0 0.0
        %1667 = vmatprep.subr.mxu0 0.0
        %1668 = vmatpush1.msra.mxu0 0.0
        %1669 = vmatprep.subr.mxu0 0.0
        %1670 = vmatpush1.msra.mxu0 0.0
        %1671 = vmatprep.subr.mxu0 0.0
        %1672 = vmatpush1.msra.mxu0 0.0
        %1673 = vmatprep.subr.mxu0 0.0
        %1674 = vmatpush1.msra.mxu0 0.0
        %1675 = vmatprep.subr.mxu0 0.0
        %1676 = vmatpush1.msra.mxu0 0.0
        %1677 = vmatprep.subr.mxu0 0.0
        %1678 = vmatpush1.msra.mxu0 0.0
        %1679 = vmatprep.subr.mxu0 0.0
        %1680 = vmatpush1.msra.mxu0 0.0
        %1681 = vmatprep.subr.mxu0 0.0
        %1682 = vmatpush1.msra.mxu0 0.0
        %1683 = vmatprep.mubr.f32.mxu0 0.0
        %1684 = vmatmul.mubr.f32.gmra.mrb[0].mxu0 %v1617
        %v1685 = vpop.f32.mrb[0].mxu0
        %v1686 = vadd.f32 0.0, %v1685
        %v1687 = vpop.f32.mrb[0].mxu0
        %1688 = vdwg.mxu0
        %1689 = vrot.lane.b32.xlu0 %v1076, 88
        %v1690 = vpop.permute.xlu0 %1689
        %1691 = vrot.lane.b32.xlu0 %v1081, 88
        %v1692 = vpop.permute.xlu0 %1691
        %v1696 = vsel %vm1245, %v1603, 0
        %1698 = vmatprep.subr.mxu0 0.0
        %1699 = vmatpush1.msra.mxu0 %v1690
        %1700 = vmatprep.subr.mxu0 0.0
        %1701 = vmatpush1.msra.mxu0 %v1692
        %1702 = vmatprep.subr.mxu0 0.0
        %1703 = vmatpush1.msra.mxu0 0.0
        %1704 = vmatprep.subr.mxu0 0.0
        %1705 = vmatpush1.msra.mxu0 0.0
        %1706 = vmatprep.subr.mxu0 0.0
        %1707 = vmatpush1.msra.mxu0 0.0
        %1708 = vmatprep.subr.mxu0 0.0
        %1709 = vmatpush1.msra.mxu0 0.0
        %1710 = vmatprep.subr.mxu0 0.0
        %1711 = vmatpush1.msra.mxu0 0.0
        %1712 = vmatprep.subr.mxu0 0.0
        %1713 = vmatpush1.msra.mxu0 0.0
        %1714 = vmatprep.subr.mxu0 0.0
        %1715 = vmatpush1.msra.mxu0 0.0
        %1716 = vmatprep.subr.mxu0 0.0
        %1717 = vmatpush1.msra.mxu0 0.0
        %1718 = vmatprep.subr.mxu0 0.0
        %1719 = vmatpush1.msra.mxu0 0.0
        %1720 = vmatprep.subr.mxu0 0.0
        %1721 = vmatpush1.msra.mxu0 0.0
        %1722 = vmatprep.subr.mxu0 0.0
        %1723 = vmatpush1.msra.mxu0 0.0
        %1724 = vmatprep.subr.mxu0 0.0
        %1725 = vmatpush1.msra.mxu0 0.0
        %1726 = vmatprep.subr.mxu0 0.0
        %1727 = vmatpush1.msra.mxu0 0.0
        %1728 = vmatprep.subr.mxu0 0.0
        %1729 = vmatpush1.msra.mxu0 0.0
        %1730 = vmatprep.subr.mxu0 0.0
        %1731 = vmatpush1.msra.mxu0 0.0
        %1732 = vmatprep.subr.mxu0 0.0
        %1733 = vmatpush1.msra.mxu0 0.0
        %1734 = vmatprep.subr.mxu0 0.0
        %1735 = vmatpush1.msra.mxu0 0.0
        %1736 = vmatprep.subr.mxu0 0.0
        %1737 = vmatpush1.msra.mxu0 0.0
        %1738 = vmatprep.subr.mxu0 0.0
        %1739 = vmatpush1.msra.mxu0 0.0
        %1740 = vmatprep.subr.mxu0 0.0
        %1741 = vmatpush1.msra.mxu0 0.0
        %1742 = vmatprep.subr.mxu0 0.0
        %1743 = vmatpush1.msra.mxu0 0.0
        %1744 = vmatprep.subr.mxu0 0.0
        %1745 = vmatpush1.msra.mxu0 0.0
        %1746 = vmatprep.subr.mxu0 0.0
        %1747 = vmatpush1.msra.mxu0 0.0
        %1748 = vmatprep.subr.mxu0 0.0
        %1749 = vmatpush1.msra.mxu0 0.0
        %1750 = vmatprep.subr.mxu0 0.0
        %1751 = vmatpush1.msra.mxu0 0.0
        %1752 = vmatprep.subr.mxu0 0.0
        %1753 = vmatpush1.msra.mxu0 0.0
        %1754 = vmatprep.subr.mxu0 0.0
        %1755 = vmatpush1.msra.mxu0 0.0
        %1756 = vmatprep.subr.mxu0 0.0
        %1757 = vmatpush1.msra.mxu0 0.0
        %1758 = vmatprep.subr.mxu0 0.0
        %1759 = vmatpush1.msra.mxu0 0.0
        %1760 = vmatprep.subr.mxu0 0.0
        %1761 = vmatpush1.msra.mxu0 0.0
        %1762 = vmatprep.mubr.f32.mxu0 0.0
        %1763 = vmatmul.mubr.f32.gmra.mrb[0].mxu0 %v1696
        %v1764 = vpop.f32.mrb[0].mxu0
        %v1765 = vadd.f32 0.0, %v1764
        %v1766 = vpop.f32.mrb[0].mxu0
        %1767 = vdwg.mxu0
        %v1768 = vrcp.pop %v1606
        %v1769 = vrcp.pop %v1609
        %v1770 = vmul.f32 %v1686, %v1768
        %v1771 = vmul.f32 %v1765, %v1769
        %1772 = vrot.lane.b32.xlu0 %v960, 112
        %v1773 = vpop.permute.xlu0 %1772
        %1774 = vrot.lane.b32.xlu0 %v1066, 112
        %v1775 = vpop.permute.xlu0 %1774
        %1776 = vrot.lane.b32.xlu0 %v1071, 112
        %v1777 = vpop.permute.xlu0 %1776
        %v1778 = vsel %vm1084, %v1773, 0
        %v1780 = vsel %vm1084, %v1775, 0
        %v1782 = vsel %vm1084, %v1777, 0
        %1784 = vmatprep.subr.mxu0 0.0
        %1785 = vmatpush1.xpose.msra.mxu0 %v1780
        %1786 = vmatprep.subr.mxu0 0.0
        %1787 = vmatpush1.xpose.msra.mxu0 %v1782
        %1788 = vmatprep.subr.mxu0 0.0
        %1789 = vmatpush1.xpose.msra.mxu0 0.0
        %1790 = vmatprep.subr.mxu0 0.0
        %1791 = vmatpush1.xpose.msra.mxu0 0.0
        %1792 = vmatprep.subr.mxu0 0.0
        %1793 = vmatpush1.xpose.msra.mxu0 0.0
        %1794 = vmatprep.subr.mxu0 0.0
        %1795 = vmatpush1.xpose.msra.mxu0 0.0
        %1796 = vmatprep.subr.mxu0 0.0
        %1797 = vmatpush1.xpose.msra.mxu0 0.0
        %1798 = vmatprep.subr.mxu0 0.0
        %1799 = vmatpush1.xpose.msra.mxu0 0.0
        %1800 = vmatprep.subr.mxu0 0.0
        %1801 = vmatpush1.xpose.msra.mxu0 0.0
        %1802 = vmatprep.subr.mxu0 0.0
        %1803 = vmatpush1.xpose.msra.mxu0 0.0
        %1804 = vmatprep.subr.mxu0 0.0
        %1805 = vmatpush1.xpose.msra.mxu0 0.0
        %1806 = vmatprep.subr.mxu0 0.0
        %1807 = vmatpush1.xpose.msra.mxu0 0.0
        %1808 = vmatprep.subr.mxu0 0.0
        %1809 = vmatpush1.xpose.msra.mxu0 0.0
        %1810 = vmatprep.subr.mxu0 0.0
        %1811 = vmatpush1.xpose.msra.mxu0 0.0
        %1812 = vmatprep.subr.mxu0 0.0
        %1813 = vmatpush1.xpose.msra.mxu0 0.0
        %1814 = vmatprep.subr.mxu0 0.0
        %1815 = vmatpush1.xpose.msra.mxu0 0.0
        %1816 = vmatprep.subr.mxu0 0.0
        %1817 = vmatpush1.xpose.msra.mxu0 0.0
        %1818 = vmatprep.subr.mxu0 0.0
        %1819 = vmatpush1.xpose.msra.mxu0 0.0
        %1820 = vmatprep.subr.mxu0 0.0
        %1821 = vmatpush1.xpose.msra.mxu0 0.0
        %1822 = vmatprep.subr.mxu0 0.0
        %1823 = vmatpush1.xpose.msra.mxu0 0.0
        %1824 = vmatprep.subr.mxu0 0.0
        %1825 = vmatpush1.xpose.msra.mxu0 0.0
        %1826 = vmatprep.subr.mxu0 0.0
        %1827 = vmatpush1.xpose.msra.mxu0 0.0
        %1828 = vmatprep.subr.mxu0 0.0
        %1829 = vmatpush1.xpose.msra.mxu0 0.0
        %1830 = vmatprep.subr.mxu0 0.0
        %1831 = vmatpush1.xpose.msra.mxu0 0.0
        %1832 = vmatprep.subr.mxu0 0.0
        %1833 = vmatpush1.xpose.msra.mxu0 0.0
        %1834 = vmatprep.subr.mxu0 0.0
        %1835 = vmatpush1.xpose.msra.mxu0 0.0
        %1836 = vmatprep.subr.mxu0 0.0
        %1837 = vmatpush1.xpose.msra.mxu0 0.0
        %1838 = vmatprep.subr.mxu0 0.0
        %1839 = vmatpush1.xpose.msra.mxu0 0.0
        %1840 = vmatprep.subr.mxu0 0.0
        %1841 = vmatpush1.xpose.msra.mxu0 0.0
        %1842 = vmatprep.subr.mxu0 0.0
        %1843 = vmatpush1.xpose.msra.mxu0 0.0
        %1844 = vmatprep.subr.mxu0 0.0
        %1845 = vmatpush1.xpose.msra.mxu0 0.0
        %1846 = vmatprep.subr.mxu0 0.0
        %1847 = vmatpush1.xpose.msra.mxu0 0.0
        %1848 = vmatprep.mubr.f32.mxu0 0.0
        %1849 = vmatmul.mubr.f32.gmra.mrb[0].mxu0 %v1778
        %v1850 = vpop.f32.mrb[0].mxu0
        %v1851 = vadd.f32 0.0, %v1850
        %v1852 = vpop.f32.mrb[0].mxu0
        %1853 = vdwg.mxu0
        %1854 = vrot.lane.b32.xlu0 %v965, 112
        %v1855 = vpop.permute.xlu0 %1854
        %1856 = vrot.lane.b32.xlu0 %v1076, 112
        %v1857 = vpop.permute.xlu0 %1856
        %1858 = vrot.lane.b32.xlu0 %v1081, 112
        %v1859 = vpop.permute.xlu0 %1858
        %v1860 = vsel %vm1084, %v1855, 0
        %v1862 = vsel %vm1084, %v1857, 0
        %v1864 = vsel %vm1084, %v1859, 0
        %1866 = vmatprep.subr.mxu0 0.0
        %1867 = vmatpush1.xpose.msra.mxu0 %v1862
        %1868 = vmatprep.subr.mxu0 0.0
        %1869 = vmatpush1.xpose.msra.mxu0 %v1864
        %1870 = vmatprep.subr.mxu0 0.0
        %1871 = vmatpush1.xpose.msra.mxu0 0.0
        %1872 = vmatprep.subr.mxu0 0.0
        %1873 = vmatpush1.xpose.msra.mxu0 0.0
        %1874 = vmatprep.subr.mxu0 0.0
        %1875 = vmatpush1.xpose.msra.mxu0 0.0
        %1876 = vmatprep.subr.mxu0 0.0
        %1877 = vmatpush1.xpose.msra.mxu0 0.0
        %1878 = vmatprep.subr.mxu0 0.0
        %1879 = vmatpush1.xpose.msra.mxu0 0.0
        %1880 = vmatprep.subr.mxu0 0.0
        %1881 = vmatpush1.xpose.msra.mxu0 0.0
        %1882 = vmatprep.subr.mxu0 0.0
        %1883 = vmatpush1.xpose.msra.mxu0 0.0
        %1884 = vmatprep.subr.mxu0 0.0
        %1885 = vmatpush1.xpose.msra.mxu0 0.0
        %1886 = vmatprep.subr.mxu0 0.0
        %1887 = vmatpush1.xpose.msra.mxu0 0.0
        %1888 = vmatprep.subr.mxu0 0.0
        %1889 = vmatpush1.xpose.msra.mxu0 0.0
        %1890 = vmatprep.subr.mxu0 0.0
        %1891 = vmatpush1.xpose.msra.mxu0 0.0
        %1892 = vmatprep.subr.mxu0 0.0
        %1893 = vmatpush1.xpose.msra.mxu0 0.0
        %1894 = vmatprep.subr.mxu0 0.0
        %1895 = vmatpush1.xpose.msra.mxu0 0.0
        %1896 = vmatprep.subr.mxu0 0.0
        %1897 = vmatpush1.xpose.msra.mxu0 0.0
        %1898 = vmatprep.subr.mxu0 0.0
        %1899 = vmatpush1.xpose.msra.mxu0 0.0
        %1900 = vmatprep.subr.mxu0 0.0
        %1901 = vmatpush1.xpose.msra.mxu0 0.0
        %1902 = vmatprep.subr.mxu0 0.0
        %1903 = vmatpush1.xpose.msra.mxu0 0.0
        %1904 = vmatprep.subr.mxu0 0.0
        %1905 = vmatpush1.xpose.msra.mxu0 0.0
        %1906 = vmatprep.subr.mxu0 0.0
        %1907 = vmatpush1.xpose.msra.mxu0 0.0
        %1908 = vmatprep.subr.mxu0 0.0
        %1909 = vmatpush1.xpose.msra.mxu0 0.0
        %1910 = vmatprep.subr.mxu0 0.0
        %1911 = vmatpush1.xpose.msra.mxu0 0.0
        %1912 = vmatprep.subr.mxu0 0.0
        %1913 = vmatpush1.xpose.msra.mxu0 0.0
        %1914 = vmatprep.subr.mxu0 0.0
        %1915 = vmatpush1.xpose.msra.mxu0 0.0
        %1916 = vmatprep.subr.mxu0 0.0
        %1917 = vmatpush1.xpose.msra.mxu0 0.0
        %1918 = vmatprep.subr.mxu0 0.0
        %1919 = vmatpush1.xpose.msra.mxu0 0.0
        %1920 = vmatprep.subr.mxu0 0.0
        %1921 = vmatpush1.xpose.msra.mxu0 0.0
        %1922 = vmatprep.subr.mxu0 0.0
        %1923 = vmatpush1.xpose.msra.mxu0 0.0
        %1924 = vmatprep.subr.mxu0 0.0
        %1925 = vmatpush1.xpose.msra.mxu0 0.0
        %1926 = vmatprep.subr.mxu0 0.0
        %1927 = vmatpush1.xpose.msra.mxu0 0.0
        %1928 = vmatprep.subr.mxu0 0.0
        %1929 = vmatpush1.xpose.msra.mxu0 0.0
        %1930 = vmatprep.mubr.f32.mxu0 0.0
        %1931 = vmatmul.mubr.f32.gmra.mrb[0].mxu0 %v1860
        %v1932 = vpop.f32.mrb[0].mxu0
        %v1933 = vadd.f32 0.0, %v1932
        %v1934 = vpop.f32.mrb[0].mxu0
        %1935 = vdwg.mxu0
        %v1936 = vmul.f32 %v1851, 0.35355338
        %v1937 = vmul.f32 %v1933, 0.35355338
        %v1938 = vsel %vm1245, %v1936, -inf
        %1939 = vmax.xlane.f32.xlu0 %v1938
        %v1940 = vpop.xlane.xlu0 %1939
        %v1941 = vsel %vm1245, %v1937, -inf
        %1942 = vmax.xlane.f32.xlu0 %v1941
        %v1943 = vpop.xlane.xlu0 %1942
        %v1944 = vsub.f32 %v1936, %v1940
        %v1945 = vsub.f32 %v1937, %v1943
        %v1946 = vmul.f32 %v1944, 1.442695
        %v1947 = vpow.pop %v1946
        %v1948 = vmul.f32 %v1945, 1.442695
        %v1949 = vpow.pop %v1948
        %v1950 = vsel %vm1245, %v1947, 0.0
        %1951 = vadd.xlane.f32.xlu0 %v1950
        %v1952 = vpop.xlane.xlu0 %1951
        %v1953 = vsel %vm1245, %v1949, 0.0
        %1954 = vadd.xlane.f32.xlu0 %v1953
        %v1955 = vpop.xlane.xlu0 %1954
        %1956 = vrot.lane.b32.xlu0 %v1066, 80
        %v1957 = vpop.permute.xlu0 %1956
        %1958 = vrot.lane.b32.xlu0 %v1071, 80
        %v1959 = vpop.permute.xlu0 %1958
        %v1963 = vsel %vm1245, %v1947, 0
        %1965 = vmatprep.subr.mxu0 0.0
        %1966 = vmatpush1.msra.mxu0 %v1957
        %1967 = vmatprep.subr.mxu0 0.0
        %1968 = vmatpush1.msra.mxu0 %v1959
        %1969 = vmatprep.subr.mxu0 0.0
        %1970 = vmatpush1.msra.mxu0 0.0
        %1971 = vmatprep.subr.mxu0 0.0
        %1972 = vmatpush1.msra.mxu0 0.0
        %1973 = vmatprep.subr.mxu0 0.0
        %1974 = vmatpush1.msra.mxu0 0.0
        %1975 = vmatprep.subr.mxu0 0.0
        %1976 = vmatpush1.msra.mxu0 0.0
        %1977 = vmatprep.subr.mxu0 0.0
        %1978 = vmatpush1.msra.mxu0 0.0
        %1979 = vmatprep.subr.mxu0 0.0
        %1980 = vmatpush1.msra.mxu0 0.0
        %1981 = vmatprep.subr.mxu0 0.0
        %1982 = vmatpush1.msra.mxu0 0.0
        %1983 = vmatprep.subr.mxu0 0.0
        %1984 = vmatpush1.msra.mxu0 0.0
        %1985 = vmatprep.subr.mxu0 0.0
        %1986 = vmatpush1.msra.mxu0 0.0
        %1987 = vmatprep.subr.mxu0 0.0
        %1988 = vmatpush1.msra.mxu0 0.0
        %1989 = vmatprep.subr.mxu0 0.0
        %1990 = vmatpush1.msra.mxu0 0.0
        %1991 = vmatprep.subr.mxu0 0.0
        %1992 = vmatpush1.msra.mxu0 0.0
        %1993 = vmatprep.subr.mxu0 0.0
        %1994 = vmatpush1.msra.mxu0 0.0
        %1995 = vmatprep.subr.mxu0 0.0
        %1996 = vmatpush1.msra.mxu0 0.0
        %1997 = vmatprep.subr.mxu0 0.0
        %1998 = vmatpush1.msra.mxu0 0.0
        %1999 = vmatprep.subr.mxu0 0.0
        %2000 = vmatpush1.msra.mxu0 0.0
        %2001 = vmatprep.subr.mxu0 0.0
        %2002 = vmatpush1.msra.mxu0 0.0
        %2003 = vmatprep.subr.mxu0 0.0
        %2004 = vmatpush1.msra.mxu0 0.0
        %2005 = vmatprep.subr.mxu0 0.0
        %2006 = vmatpush1.msra.mxu0 0.0
        %2007 = vmatprep.subr.mxu0 0.0
        %2008 = vmatpush1.msra.mxu0 0.0
        %2009 = vmatprep.subr.mxu0 0.0
        %2010 = vmatpush1.msra.mxu0 0.0
        %2011 = vmatprep.subr.mxu0 0.0
        %2012 = vmatpush1.msra.mxu0 0.0
        %2013 = vmatprep.subr.mxu0 0.0
        %2014 = vmatpush1.msra.mxu0 0.0
        %2015 = vmatprep.subr.mxu0 0.0
        %2016 = vmatpush1.msra.mxu0 0.0
        %2017 = vmatprep.subr.mxu0 0.0
        %2018 = vmatpush1.msra.mxu0 0.0
        %2019 = vmatprep.subr.mxu0 0.0
        %2020 = vmatpush1.msra.mxu0 0.0
        %2021 = vmatprep.subr.mxu0 0.0
        %2022 = vmatpush1.msra.mxu0 0.0
        %2023 = vmatprep.subr.mxu0 0.0
        %2024 = vmatpush1.msra.mxu0 0.0
        %2025 = vmatprep.subr.mxu0 0.0
        %2026 = vmatpush1.msra.mxu0 0.0
        %2027 = vmatprep.subr.mxu0 0.0
        %2028 = vmatpush1.msra.mxu0 0.0
        %2029 = vmatprep.mubr.f32.mxu0 0.0
        %2030 = vmatmul.mubr.f32.gmra.mrb[0].mxu0 %v1963
        %v2031 = vpop.f32.mrb[0].mxu0
        %v2032 = vadd.f32 0.0, %v2031
        %v2033 = vpop.f32.mrb[0].mxu0
        %2034 = vdwg.mxu0
        %2035 = vrot.lane.b32.xlu0 %v1076, 80
        %v2036 = vpop.permute.xlu0 %2035
        %2037 = vrot.lane.b32.xlu0 %v1081, 80
        %v2038 = vpop.permute.xlu0 %2037
        %v2042 = vsel %vm1245, %v1949, 0
        %2044 = vmatprep.subr.mxu0 0.0
        %2045 = vmatpush1.msra.mxu0 %v2036
        %2046 = vmatprep.subr.mxu0 0.0
        %2047 = vmatpush1.msra.mxu0 %v2038
        %2048 = vmatprep.subr.mxu0 0.0
        %2049 = vmatpush1.msra.mxu0 0.0
        %2050 = vmatprep.subr.mxu0 0.0
        %2051 = vmatpush1.msra.mxu0 0.0
        %2052 = vmatprep.subr.mxu0 0.0
        %2053 = vmatpush1.msra.mxu0 0.0
        %2054 = vmatprep.subr.mxu0 0.0
        %2055 = vmatpush1.msra.mxu0 0.0
        %2056 = vmatprep.subr.mxu0 0.0
        %2057 = vmatpush1.msra.mxu0 0.0
        %2058 = vmatprep.subr.mxu0 0.0
        %2059 = vmatpush1.msra.mxu0 0.0
        %2060 = vmatprep.subr.mxu0 0.0
        %2061 = vmatpush1.msra.mxu0 0.0
        %2062 = vmatprep.subr.mxu0 0.0
        %2063 = vmatpush1.msra.mxu0 0.0
        %2064 = vmatprep.subr.mxu0 0.0
        %2065 = vmatpush1.msra.mxu0 0.0
        %2066 = vmatprep.subr.mxu0 0.0
        %2067 = vmatpush1.msra.mxu0 0.0
        %2068 = vmatprep.subr.mxu0 0.0
        %2069 = vmatpush1.msra.mxu0 0.0
        %2070 = vmatprep.subr.mxu0 0.0
        %2071 = vmatpush1.msra.mxu0 0.0
        %2072 = vmatprep.subr.mxu0 0.0
        %2073 = vmatpush1.msra.mxu0 0.0
        %2074 = vmatprep.subr.mxu0 0.0
        %2075 = vmatpush1.msra.mxu0 0.0
        %2076 = vmatprep.subr.mxu0 0.0
        %2077 = vmatpush1.msra.mxu0 0.0
        %2078 = vmatprep.subr.mxu0 0.0
        %2079 = vmatpush1.msra.mxu0 0.0
        %2080 = vmatprep.subr.mxu0 0.0
        %2081 = vmatpush1.msra.mxu0 0.0
        %2082 = vmatprep.subr.mxu0 0.0
        %2083 = vmatpush1.msra.mxu0 0.0
        %2084 = vmatprep.subr.mxu0 0.0
        %2085 = vmatpush1.msra.mxu0 0.0
        %2086 = vmatprep.subr.mxu0 0.0
        %2087 = vmatpush1.msra.mxu0 0.0
        %2088 = vmatprep.subr.mxu0 0.0
        %2089 = vmatpush1.msra.mxu0 0.0
        %2090 = vmatprep.subr.mxu0 0.0
        %2091 = vmatpush1.msra.mxu0 0.0
        %2092 = vmatprep.subr.mxu0 0.0
        %2093 = vmatpush1.msra.mxu0 0.0
        %2094 = vmatprep.subr.mxu0 0.0
        %2095 = vmatpush1.msra.mxu0 0.0
        %2096 = vmatprep.subr.mxu0 0.0
        %2097 = vmatpush1.msra.mxu0 0.0
        %2098 = vmatprep.subr.mxu0 0.0
        %2099 = vmatpush1.msra.mxu0 0.0
        %2100 = vmatprep.subr.mxu0 0.0
        %2101 = vmatpush1.msra.mxu0 0.0
        %2102 = vmatprep.subr.mxu0 0.0
        %2103 = vmatpush1.msra.mxu0 0.0
        %2104 = vmatprep.subr.mxu0 0.0
        %2105 = vmatpush1.msra.mxu0 0.0
        %2106 = vmatprep.subr.mxu0 0.0
        %2107 = vmatpush1.msra.mxu0 0.0
        %2108 = vmatprep.mubr.f32.mxu0 0.0
        %2109 = vmatmul.mubr.f32.gmra.mrb[0].mxu0 %v2042
        %v2110 = vpop.f32.mrb[0].mxu0
        %v2111 = vadd.f32 0.0, %v2110
        %v2112 = vpop.f32.mrb[0].mxu0
        %2113 = vdwg.mxu0
        %v2114 = vrcp.pop %v1952
        %v2115 = vrcp.pop %v1955
        %v2116 = vmul.f32 %v2032, %v2114
        %v2117 = vmul.f32 %v2111, %v2115
        %2118 = vrot.lane.b32.xlu0 %v960, 104
        %v2119 = vpop.permute.xlu0 %2118
        %2120 = vrot.lane.b32.xlu0 %v1066, 104
        %v2121 = vpop.permute.xlu0 %2120
        %2122 = vrot.lane.b32.xlu0 %v1071, 104
        %v2123 = vpop.permute.xlu0 %2122
        %v2124 = vsel %vm1084, %v2119, 0
        %v2126 = vsel %vm1084, %v2121, 0
        %v2128 = vsel %vm1084, %v2123, 0
        %2130 = vmatprep.subr.mxu0 0.0
        %2131 = vmatpush1.xpose.msra.mxu0 %v2126
        %2132 = vmatprep.subr.mxu0 0.0
        %2133 = vmatpush1.xpose.msra.mxu0 %v2128
        %2134 = vmatprep.subr.mxu0 0.0
        %2135 = vmatpush1.xpose.msra.mxu0 0.0
        %2136 = vmatprep.subr.mxu0 0.0
        %2137 = vmatpush1.xpose.msra.mxu0 0.0
        %2138 = vmatprep.subr.mxu0 0.0
        %2139 = vmatpush1.xpose.msra.mxu0 0.0
        %2140 = vmatprep.subr.mxu0 0.0
        %2141 = vmatpush1.xpose.msra.mxu0 0.0
        %2142 = vmatprep.subr.mxu0 0.0
        %2143 = vmatpush1.xpose.msra.mxu0 0.0
        %2144 = vmatprep.subr.mxu0 0.0
        %2145 = vmatpush1.xpose.msra.mxu0 0.0
        %2146 = vmatprep.subr.mxu0 0.0
        %2147 = vmatpush1.xpose.msra.mxu0 0.0
        %2148 = vmatprep.subr.mxu0 0.0
        %2149 = vmatpush1.xpose.msra.mxu0 0.0
        %2150 = vmatprep.subr.mxu0 0.0
        %2151 = vmatpush1.xpose.msra.mxu0 0.0
        %2152 = vmatprep.subr.mxu0 0.0
        %2153 = vmatpush1.xpose.msra.mxu0 0.0
        %2154 = vmatprep.subr.mxu0 0.0
        %2155 = vmatpush1.xpose.msra.mxu0 0.0
        %2156 = vmatprep.subr.mxu0 0.0
        %2157 = vmatpush1.xpose.msra.mxu0 0.0
        %2158 = vmatprep.subr.mxu0 0.0
        %2159 = vmatpush1.xpose.msra.mxu0 0.0
        %2160 = vmatprep.subr.mxu0 0.0
        %2161 = vmatpush1.xpose.msra.mxu0 0.0
        %2162 = vmatprep.subr.mxu0 0.0
        %2163 = vmatpush1.xpose.msra.mxu0 0.0
        %2164 = vmatprep.subr.mxu0 0.0
        %2165 = vmatpush1.xpose.msra.mxu0 0.0
        %2166 = vmatprep.subr.mxu0 0.0
        %2167 = vmatpush1.xpose.msra.mxu0 0.0
        %2168 = vmatprep.subr.mxu0 0.0
        %2169 = vmatpush1.xpose.msra.mxu0 0.0
        %2170 = vmatprep.subr.mxu0 0.0
        %2171 = vmatpush1.xpose.msra.mxu0 0.0
        %2172 = vmatprep.subr.mxu0 0.0
        %2173 = vmatpush1.xpose.msra.mxu0 0.0
        %2174 = vmatprep.subr.mxu0 0.0
        %2175 = vmatpush1.xpose.msra.mxu0 0.0
        %2176 = vmatprep.subr.mxu0 0.0
        %2177 = vmatpush1.xpose.msra.mxu0 0.0
        %2178 = vmatprep.subr.mxu0 0.0
        %2179 = vmatpush1.xpose.msra.mxu0 0.0
        %2180 = vmatprep.subr.mxu0 0.0
        %2181 = vmatpush1.xpose.msra.mxu0 0.0
        %2182 = vmatprep.subr.mxu0 0.0
        %2183 = vmatpush1.xpose.msra.mxu0 0.0
        %2184 = vmatprep.subr.mxu0 0.0
        %2185 = vmatpush1.xpose.msra.mxu0 0.0
        %2186 = vmatprep.subr.mxu0 0.0
        %2187 = vmatpush1.xpose.msra.mxu0 0.0
        %2188 = vmatprep.subr.mxu0 0.0
        %2189 = vmatpush1.xpose.msra.mxu0 0.0
        %2190 = vmatprep.subr.mxu0 0.0
        %2191 = vmatpush1.xpose.msra.mxu0 0.0
        %2192 = vmatprep.subr.mxu0 0.0
        %2193 = vmatpush1.xpose.msra.mxu0 0.0
        %2194 = vmatprep.mubr.f32.mxu0 0.0
        %2195 = vmatmul.mubr.f32.gmra.mrb[0].mxu0 %v2124
        %v2196 = vpop.f32.mrb[0].mxu0
        %v2197 = vadd.f32 0.0, %v2196
        %v2198 = vpop.f32.mrb[0].mxu0
        %2199 = vdwg.mxu0
        %2200 = vrot.lane.b32.xlu0 %v965, 104
        %v2201 = vpop.permute.xlu0 %2200
        %2202 = vrot.lane.b32.xlu0 %v1076, 104
        %v2203 = vpop.permute.xlu0 %2202
        %2204 = vrot.lane.b32.xlu0 %v1081, 104
        %v2205 = vpop.permute.xlu0 %2204
        %v2206 = vsel %vm1084, %v2201, 0
        %v2208 = vsel %vm1084, %v2203, 0
        %v2210 = vsel %vm1084, %v2205, 0
        %2212 = vmatprep.subr.mxu0 0.0
        %2213 = vmatpush1.xpose.msra.mxu0 %v2208
        %2214 = vmatprep.subr.mxu0 0.0
        %2215 = vmatpush1.xpose.msra.mxu0 %v2210
        %2216 = vmatprep.subr.mxu0 0.0
        %2217 = vmatpush1.xpose.msra.mxu0 0.0
        %2218 = vmatprep.subr.mxu0 0.0
        %2219 = vmatpush1.xpose.msra.mxu0 0.0
        %2220 = vmatprep.subr.mxu0 0.0
        %2221 = vmatpush1.xpose.msra.mxu0 0.0
        %2222 = vmatprep.subr.mxu0 0.0
        %2223 = vmatpush1.xpose.msra.mxu0 0.0
        %2224 = vmatprep.subr.mxu0 0.0
        %2225 = vmatpush1.xpose.msra.mxu0 0.0
        %2226 = vmatprep.subr.mxu0 0.0
        %2227 = vmatpush1.xpose.msra.mxu0 0.0
        %2228 = vmatprep.subr.mxu0 0.0
        %2229 = vmatpush1.xpose.msra.mxu0 0.0
        %2230 = vmatprep.subr.mxu0 0.0
        %2231 = vmatpush1.xpose.msra.mxu0 0.0
        %2232 = vmatprep.subr.mxu0 0.0
        %2233 = vmatpush1.xpose.msra.mxu0 0.0
        %2234 = vmatprep.subr.mxu0 0.0
        %2235 = vmatpush1.xpose.msra.mxu0 0.0
        %2236 = vmatprep.subr.mxu0 0.0
        %2237 = vmatpush1.xpose.msra.mxu0 0.0
        %2238 = vmatprep.subr.mxu0 0.0
        %2239 = vmatpush1.xpose.msra.mxu0 0.0
        %2240 = vmatprep.subr.mxu0 0.0
        %2241 = vmatpush1.xpose.msra.mxu0 0.0
        %2242 = vmatprep.subr.mxu0 0.0
        %2243 = vmatpush1.xpose.msra.mxu0 0.0
        %2244 = vmatprep.subr.mxu0 0.0
        %2245 = vmatpush1.xpose.msra.mxu0 0.0
        %2246 = vmatprep.subr.mxu0 0.0
        %2247 = vmatpush1.xpose.msra.mxu0 0.0
        %2248 = vmatprep.subr.mxu0 0.0
        %2249 = vmatpush1.xpose.msra.mxu0 0.0
        %2250 = vmatprep.subr.mxu0 0.0
        %2251 = vmatpush1.xpose.msra.mxu0 0.0
        %2252 = vmatprep.subr.mxu0 0.0
        %2253 = vmatpush1.xpose.msra.mxu0 0.0
        %2254 = vmatprep.subr.mxu0 0.0
        %2255 = vmatpush1.xpose.msra.mxu0 0.0
        %2256 = vmatprep.subr.mxu0 0.0
        %2257 = vmatpush1.xpose.msra.mxu0 0.0
        %2258 = vmatprep.subr.mxu0 0.0
        %2259 = vmatpush1.xpose.msra.mxu0 0.0
        %2260 = vmatprep.subr.mxu0 0.0
        %2261 = vmatpush1.xpose.msra.mxu0 0.0
        %2262 = vmatprep.subr.mxu0 0.0
        %2263 = vmatpush1.xpose.msra.mxu0 0.0
        %2264 = vmatprep.subr.mxu0 0.0
        %2265 = vmatpush1.xpose.msra.mxu0 0.0
        %2266 = vmatprep.subr.mxu0 0.0
        %2267 = vmatpush1.xpose.msra.mxu0 0.0
        %2268 = vmatprep.subr.mxu0 0.0
        %2269 = vmatpush1.xpose.msra.mxu0 0.0
        %2270 = vmatprep.subr.mxu0 0.0
        %2271 = vmatpush1.xpose.msra.mxu0 0.0
        %2272 = vmatprep.subr.mxu0 0.0
        %2273 = vmatpush1.xpose.msra.mxu0 0.0
        %2274 = vmatprep.subr.mxu0 0.0
        %2275 = vmatpush1.xpose.msra.mxu0 0.0
        %2276 = vmatprep.mubr.f32.mxu0 0.0
        %2277 = vmatmul.mubr.f32.gmra.mrb[0].mxu0 %v2206
        %v2278 = vpop.f32.mrb[0].mxu0
        %v2279 = vadd.f32 0.0, %v2278
        %v2280 = vpop.f32.mrb[0].mxu0
        %2281 = vdwg.mxu0
        %v2282 = vmul.f32 %v2197, 0.35355338
        %v2283 = vmul.f32 %v2279, 0.35355338
        %v2284 = vsel %vm1245, %v2282, -inf
        %2285 = vmax.xlane.f32.xlu0 %v2284
        %v2286 = vpop.xlane.xlu0 %2285
        %v2287 = vsel %vm1245, %v2283, -inf
        %2288 = vmax.xlane.f32.xlu0 %v2287
        %v2289 = vpop.xlane.xlu0 %2288
        %v2290 = vsub.f32 %v2282, %v2286
        %v2291 = vsub.f32 %v2283, %v2289
        %v2292 = vmul.f32 %v2290, 1.442695
        %v2293 = vpow.pop %v2292
        %v2294 = vmul.f32 %v2291, 1.442695
        %v2295 = vpow.pop %v2294
        %v2296 = vsel %vm1245, %v2293, 0.0
        %2297 = vadd.xlane.f32.xlu0 %v2296
        %v2298 = vpop.xlane.xlu0 %2297
        %v2299 = vsel %vm1245, %v2295, 0.0
        %2300 = vadd.xlane.f32.xlu0 %v2299
        %v2301 = vpop.xlane.xlu0 %2300
        %2302 = vrot.lane.b32.xlu0 %v1066, 72
        %v2303 = vpop.permute.xlu0 %2302
        %2304 = vrot.lane.b32.xlu0 %v1071, 72
        %v2305 = vpop.permute.xlu0 %2304
        %v2309 = vsel %vm1245, %v2293, 0
        %2311 = vmatprep.subr.mxu0 0.0
        %2312 = vmatpush1.msra.mxu0 %v2303
        %2313 = vmatprep.subr.mxu0 0.0
        %2314 = vmatpush1.msra.mxu0 %v2305
        %2315 = vmatprep.subr.mxu0 0.0
        %2316 = vmatpush1.msra.mxu0 0.0
        %2317 = vmatprep.subr.mxu0 0.0
        %2318 = vmatpush1.msra.mxu0 0.0
        %2319 = vmatprep.subr.mxu0 0.0
        %2320 = vmatpush1.msra.mxu0 0.0
        %2321 = vmatprep.subr.mxu0 0.0
        %2322 = vmatpush1.msra.mxu0 0.0
        %2323 = vmatprep.subr.mxu0 0.0
        %2324 = vmatpush1.msra.mxu0 0.0
        %2325 = vmatprep.subr.mxu0 0.0
        %2326 = vmatpush1.msra.mxu0 0.0
        %2327 = vmatprep.subr.mxu0 0.0
        %2328 = vmatpush1.msra.mxu0 0.0
        %2329 = vmatprep.subr.mxu0 0.0
        %2330 = vmatpush1.msra.mxu0 0.0
        %2331 = vmatprep.subr.mxu0 0.0
        %2332 = vmatpush1.msra.mxu0 0.0
        %2333 = vmatprep.subr.mxu0 0.0
        %2334 = vmatpush1.msra.mxu0 0.0
        %2335 = vmatprep.subr.mxu0 0.0
        %2336 = vmatpush1.msra.mxu0 0.0
        %2337 = vmatprep.subr.mxu0 0.0
        %2338 = vmatpush1.msra.mxu0 0.0
        %2339 = vmatprep.subr.mxu0 0.0
        %2340 = vmatpush1.msra.mxu0 0.0
        %2341 = vmatprep.subr.mxu0 0.0
        %2342 = vmatpush1.msra.mxu0 0.0
        %2343 = vmatprep.subr.mxu0 0.0
        %2344 = vmatpush1.msra.mxu0 0.0
        %2345 = vmatprep.subr.mxu0 0.0
        %2346 = vmatpush1.msra.mxu0 0.0
        %2347 = vmatprep.subr.mxu0 0.0
        %2348 = vmatpush1.msra.mxu0 0.0
        %2349 = vmatprep.subr.mxu0 0.0
        %2350 = vmatpush1.msra.mxu0 0.0
        %2351 = vmatprep.subr.mxu0 0.0
        %2352 = vmatpush1.msra.mxu0 0.0
        %2353 = vmatprep.subr.mxu0 0.0
        %2354 = vmatpush1.msra.mxu0 0.0
        %2355 = vmatprep.subr.mxu0 0.0
        %2356 = vmatpush1.msra.mxu0 0.0
        %2357 = vmatprep.subr.mxu0 0.0
        %2358 = vmatpush1.msra.mxu0 0.0
        %2359 = vmatprep.subr.mxu0 0.0
        %2360 = vmatpush1.msra.mxu0 0.0
        %2361 = vmatprep.subr.mxu0 0.0
        %2362 = vmatpush1.msra.mxu0 0.0
        %2363 = vmatprep.subr.mxu0 0.0
        %2364 = vmatpush1.msra.mxu0 0.0
        %2365 = vmatprep.subr.mxu0 0.0
        %2366 = vmatpush1.msra.mxu0 0.0
        %2367 = vmatprep.subr.mxu0 0.0
        %2368 = vmatpush1.msra.mxu0 0.0
        %2369 = vmatprep.subr.mxu0 0.0
        %2370 = vmatpush1.msra.mxu0 0.0
        %2371 = vmatprep.subr.mxu0 0.0
        %2372 = vmatpush1.msra.mxu0 0.0
        %2373 = vmatprep.subr.mxu0 0.0
        %2374 = vmatpush1.msra.mxu0 0.0
        %2375 = vmatprep.mubr.f32.mxu0 0.0
        %2376 = vmatmul.mubr.f32.gmra.mrb[0].mxu0 %v2309
        %v2377 = vpop.f32.mrb[0].mxu0
        %v2378 = vadd.f32 0.0, %v2377
        %v2379 = vpop.f32.mrb[0].mxu0
        %2380 = vdwg.mxu0
        %2381 = vrot.lane.b32.xlu0 %v1076, 72
        %v2382 = vpop.permute.xlu0 %2381
        %2383 = vrot.lane.b32.xlu0 %v1081, 72
        %v2384 = vpop.permute.xlu0 %2383
        %v2388 = vsel %vm1245, %v2295, 0
        %2390 = vmatprep.subr.mxu0 0.0
        %2391 = vmatpush1.msra.mxu0 %v2382
        %2392 = vmatprep.subr.mxu0 0.0
        %2393 = vmatpush1.msra.mxu0 %v2384
        %2394 = vmatprep.subr.mxu0 0.0
        %2395 = vmatpush1.msra.mxu0 0.0
        %2396 = vmatprep.subr.mxu0 0.0
        %2397 = vmatpush1.msra.mxu0 0.0
        %2398 = vmatprep.subr.mxu0 0.0
        %2399 = vmatpush1.msra.mxu0 0.0
        %2400 = vmatprep.subr.mxu0 0.0
        %2401 = vmatpush1.msra.mxu0 0.0
        %2402 = vmatprep.subr.mxu0 0.0
        %2403 = vmatpush1.msra.mxu0 0.0
        %2404 = vmatprep.subr.mxu0 0.0
        %2405 = vmatpush1.msra.mxu0 0.0
        %2406 = vmatprep.subr.mxu0 0.0
        %2407 = vmatpush1.msra.mxu0 0.0
        %2408 = vmatprep.subr.mxu0 0.0
        %2409 = vmatpush1.msra.mxu0 0.0
        %2410 = vmatprep.subr.mxu0 0.0
        %2411 = vmatpush1.msra.mxu0 0.0
        %2412 = vmatprep.subr.mxu0 0.0
        %2413 = vmatpush1.msra.mxu0 0.0
        %2414 = vmatprep.subr.mxu0 0.0
        %2415 = vmatpush1.msra.mxu0 0.0
        %2416 = vmatprep.subr.mxu0 0.0
        %2417 = vmatpush1.msra.mxu0 0.0
        %2418 = vmatprep.subr.mxu0 0.0
        %2419 = vmatpush1.msra.mxu0 0.0
        %2420 = vmatprep.subr.mxu0 0.0
        %2421 = vmatpush1.msra.mxu0 0.0
        %2422 = vmatprep.subr.mxu0 0.0
        %2423 = vmatpush1.msra.mxu0 0.0
        %2424 = vmatprep.subr.mxu0 0.0
        %2425 = vmatpush1.msra.mxu0 0.0
        %2426 = vmatprep.subr.mxu0 0.0
        %2427 = vmatpush1.msra.mxu0 0.0
        %2428 = vmatprep.subr.mxu0 0.0
        %2429 = vmatpush1.msra.mxu0 0.0
        %2430 = vmatprep.subr.mxu0 0.0
        %2431 = vmatpush1.msra.mxu0 0.0
        %2432 = vmatprep.subr.mxu0 0.0
        %2433 = vmatpush1.msra.mxu0 0.0
        %2434 = vmatprep.subr.mxu0 0.0
        %2435 = vmatpush1.msra.mxu0 0.0
        %2436 = vmatprep.subr.mxu0 0.0
        %2437 = vmatpush1.msra.mxu0 0.0
        %2438 = vmatprep.subr.mxu0 0.0
        %2439 = vmatpush1.msra.mxu0 0.0
        %2440 = vmatprep.subr.mxu0 0.0
        %2441 = vmatpush1.msra.mxu0 0.0
        %2442 = vmatprep.subr.mxu0 0.0
        %2443 = vmatpush1.msra.mxu0 0.0
        %2444 = vmatprep.subr.mxu0 0.0
        %2445 = vmatpush1.msra.mxu0 0.0
        %2446 = vmatprep.subr.mxu0 0.0
        %2447 = vmatpush1.msra.mxu0 0.0
        %2448 = vmatprep.subr.mxu0 0.0
        %2449 = vmatpush1.msra.mxu0 0.0
        %2450 = vmatprep.subr.mxu0 0.0
        %2451 = vmatpush1.msra.mxu0 0.0
        %2452 = vmatprep.subr.mxu0 0.0
        %2453 = vmatpush1.msra.mxu0 0.0
        %2454 = vmatprep.mubr.f32.mxu0 0.0
        %2455 = vmatmul.mubr.f32.gmra.mrb[0].mxu0 %v2388
        %v2456 = vpop.f32.mrb[0].mxu0
        %v2457 = vadd.f32 0.0, %v2456
        %v2458 = vpop.f32.mrb[0].mxu0
        %2459 = vdwg.mxu0
        %v2460 = vrcp.pop %v2298
        %v2461 = vrcp.pop %v2301
        %v2462 = vmul.f32 %v2378, %v2460
        %v2463 = vmul.f32 %v2457, %v2461
        %2466 = vrot.lane.b32.xlu0 %v1770, 8
        %v2467 = vpop.permute.xlu0 %2466
        %2468 = vrot.lane.b32.xlu0 %v1771, 8
        %v2469 = vpop.permute.xlu0 %2468
        %2474 = vrot.lane.b32.xlu0 %v2116, 16
        %v2475 = vpop.permute.xlu0 %2474
        %2476 = vrot.lane.b32.xlu0 %v2117, 16
        %v2477 = vpop.permute.xlu0 %2476
        %2482 = vrot.lane.b32.xlu0 %v2462, 24
        %v2483 = vpop.permute.xlu0 %2482
        %2484 = vrot.lane.b32.xlu0 %v2463, 24
        %v2485 = vpop.permute.xlu0 %2484
        %v2488 = vsel %vm1084, %v1424, %v2467
        %v2489 = vsel %vm1084, %v1425, %v2469
        %v2490 = vsel %vm1245, %v2488, %v2475
        %v2491 = vsel %vm1245, %v2489, %v2477
        %vm2492 = vcmask 195584
        %v2493 = vsel %vm2492, %v2490, %v2483
        %v2494 = vsel %vm2492, %v2491, %v2485
        %v2495 = vld [vmem:[%s9] sm:$0xff]
        %v2496 = vld [vmem:[%s9 + $0x8] sm:$0xff]
        %v2497 = vld [vmem:[%s9 + $0x10] sm:$0xff]
        %v2498 = vld [vmem:[%s9 + $0x18] sm:$0xff]
        %v2499 = vlaneseq
        %v2500 = vshrl.u32 %v2499, 7
        %v2501 = vsub.s32 1, %v2500
        %v2502 = vrot.slane %v633, %v2501
        %v2504 = vsel %vm650, %v2493, 0
        %v2507 = vsel %vm650, %v2494, 0
        %2509 = vmatprep.subr.mxu0 0.0
        %2510 = vmatpush1.msra.mxu0 %v2495
        %2511 = vmatprep.subr.mxu0 0.0
        %2512 = vmatpush1.msra.mxu0 %v2496
        %2513 = vmatprep.subr.mxu0 0.0
        %2514 = vmatpush1.msra.mxu0 %v2497
        %2515 = vmatprep.subr.mxu0 0.0
        %2516 = vmatpush1.msra.mxu0 %v2498
        %2517 = vmatprep.subr.mxu0 0.0
        %2518 = vmatpush1.msra.mxu0 0.0
        %2519 = vmatprep.subr.mxu0 0.0
        %2520 = vmatpush1.msra.mxu0 0.0
        %2521 = vmatprep.subr.mxu0 0.0
        %2522 = vmatpush1.msra.mxu0 0.0
        %2523 = vmatprep.subr.mxu0 0.0
        %2524 = vmatpush1.msra.mxu0 0.0
        %2525 = vmatprep.subr.mxu0 0.0
        %2526 = vmatpush1.msra.mxu0 0.0
        %2527 = vmatprep.subr.mxu0 0.0
        %2528 = vmatpush1.msra.mxu0 0.0
        %2529 = vmatprep.subr.mxu0 0.0
        %2530 = vmatpush1.msra.mxu0 0.0
        %2531 = vmatprep.subr.mxu0 0.0
        %2532 = vmatpush1.msra.mxu0 0.0
        %2533 = vmatprep.subr.mxu0 0.0
        %2534 = vmatpush1.msra.mxu0 0.0
        %2535 = vmatprep.subr.mxu0 0.0
        %2536 = vmatpush1.msra.mxu0 0.0
        %2537 = vmatprep.subr.mxu0 0.0
        %2538 = vmatpush1.msra.mxu0 0.0
        %2539 = vmatprep.subr.mxu0 0.0
        %2540 = vmatpush1.msra.mxu0 0.0
        %2541 = vmatprep.subr.mxu0 0.0
        %2542 = vmatpush1.msra.mxu0 0.0
        %2543 = vmatprep.subr.mxu0 0.0
        %2544 = vmatpush1.msra.mxu0 0.0
        %2545 = vmatprep.subr.mxu0 0.0
        %2546 = vmatpush1.msra.mxu0 0.0
        %2547 = vmatprep.subr.mxu0 0.0
        %2548 = vmatpush1.msra.mxu0 0.0
        %2549 = vmatprep.subr.mxu0 0.0
        %2550 = vmatpush1.msra.mxu0 0.0
        %2551 = vmatprep.subr.mxu0 0.0
        %2552 = vmatpush1.msra.mxu0 0.0
        %2553 = vmatprep.subr.mxu0 0.0
        %2554 = vmatpush1.msra.mxu0 0.0
        %2555 = vmatprep.subr.mxu0 0.0
        %2556 = vmatpush1.msra.mxu0 0.0
        %2557 = vmatprep.subr.mxu0 0.0
        %2558 = vmatpush1.msra.mxu0 0.0
        %2559 = vmatprep.subr.mxu0 0.0
        %2560 = vmatpush1.msra.mxu0 0.0
        %2561 = vmatprep.subr.mxu0 0.0
        %2562 = vmatpush1.msra.mxu0 0.0
        %2563 = vmatprep.subr.mxu0 0.0
        %2564 = vmatpush1.msra.mxu0 0.0
        %2565 = vmatprep.subr.mxu0 0.0
        %2566 = vmatpush1.msra.mxu0 0.0
        %2567 = vmatprep.subr.mxu0 0.0
        %2568 = vmatpush1.msra.mxu0 0.0
        %2569 = vmatprep.subr.mxu0 0.0
        %2570 = vmatpush1.msra.mxu0 0.0
        %2571 = vmatprep.subr.mxu0 0.0
        %2572 = vmatpush1.msra.mxu0 0.0
        %2573 = vmatprep.mubr.f32.mxu0 0.0
        %2574 = vmatmul.mubr.f32.gmra.mrb[0].mxu0 %v2504
        %v2575 = vpop.f32.mrb[0].mxu0
        %v2576 = vadd.f32 %v2502, %v2575
        %v2577 = vpop.f32.mrb[0].mxu0
        %2578 = vmatprep.mubr.f32.mxu0 0.0
        %2579 = vmatmul.mubr.f32.gmra.mrb[0].mxu0 %v2507
        %v2580 = vpop.f32.mrb[0].mxu0
        %v2581 = vadd.f32 %v2502, %v2580
        %v2582 = vpop.f32.mrb[0].mxu0
        %2583 = vdwg.mxu0
        %v2584 = vadd.f32 %v874, %v2576
        %v2585 = vadd.f32 %v875, %v2581
        %v2586 = vsel %vm650, %v2584, 0.0
        %2587 = vadd.xlane.f32.xlu0 %v2586
        %v2588 = vpop.xlane.xlu0 %2587
        %v2589 = vsel %vm650, %v2585, 0.0
        %2590 = vadd.xlane.f32.xlu0 %v2589
        %v2591 = vpop.xlane.xlu0 %2590
        %v2592 = vmul.f32 %v2588, %v843
        %v2593 = vmul.f32 %v2591, %v843
        %v2594 = vsub.f32 %v2584, %v2592
        %v2595 = vsub.f32 %v2585, %v2593
        %v2596 = vmul.f32 %v2594, %v2594
        %v2597 = vmul.f32 %v2595, %v2595
        %v2598 = vsel %vm650, %v2596, 0.0
        %2599 = vadd.xlane.f32.xlu0 %v2598
        %v2600 = vpop.xlane.xlu0 %2599
        %v2601 = vsel %vm650, %v2597, 0.0
        %2602 = vadd.xlane.f32.xlu0 %v2601
        %v2603 = vpop.xlane.xlu0 %2602
        %v2604 = vmul.f32 %v2600, %v843
        %v2605 = vmul.f32 %v2603, %v843
        %v2606 = vadd.f32 %v2604, 1e-05
        %v2607 = vadd.f32 %v2605, 1e-05
        %v2608 = vrsqrt.pop %v2606
        %v2609 = vrsqrt.pop %v2607
        %v2610 = vmul.f32 %v2594, %v2608
        %v2611 = vmul.f32 %v2595, %v2609
        %v2612 = vlaneseq
        %v2613 = vshrl.u32 %v2612, 7
        %v2614 = vsub.s32 5, %v2613
        %v2615 = vrot.slane %v633, %v2614
        %v2616 = vmul.f32 %v2610, %v2615
        %v2617 = vmul.f32 %v2611, %v2615
        %v2618 = vlaneseq
        %v2619 = vshrl.u32 %v2618, 7
        %v2620 = vsub.s32 6, %v2619
        %v2621 = vrot.slane %v633, %v2620
        %v2622 = vadd.f32 %v2616, %v2621
        %v2623 = vadd.f32 %v2617, %v2621
        %v2624 = vld [vmem:[#allocation11] sm:$0xff]
        %v2625 = vld [vmem:[#allocation11 + $0x8] sm:$0xff]
        %v2626 = vld [vmem:[#allocation11 + $0x10] sm:$0xff]
        %v2627 = vld [vmem:[#allocation11 + $0x18] sm:$0xff]
        %v2628 = vld [vmem:[#allocation13] sm:$0x1]
        %v2630 = vlaneseq
        %v2631 = vshrl.u32 %v2630, 7
        %v2632 = vsub.s32 0, %v2631
        %v2633 = vrot.slane %v2628, %v2632
        %v2636 = vsel %vm650, %v2622, 0
        %v2639 = vsel %vm650, %v2623, 0
        %2641 = vmatprep.subr.mxu0 0.0
        %2642 = vmatpush1.msra.mxu0 %v2624
        %2643 = vmatprep.subr.mxu0 0.0
        %2644 = vmatpush1.msra.mxu0 %v2625
        %2645 = vmatprep.subr.mxu0 0.0
        %2646 = vmatpush1.msra.mxu0 %v2626
        %2647 = vmatprep.subr.mxu0 0.0
        %2648 = vmatpush1.msra.mxu0 %v2627
        %2649 = vmatprep.subr.mxu0 0.0
        %2650 = vmatpush1.msra.mxu0 0.0
        %2651 = vmatprep.subr.mxu0 0.0
        %2652 = vmatpush1.msra.mxu0 0.0
        %2653 = vmatprep.subr.mxu0 0.0
        %2654 = vmatpush1.msra.mxu0 0.0
        %2655 = vmatprep.subr.mxu0 0.0
        %2656 = vmatpush1.msra.mxu0 0.0
        %2657 = vmatprep.subr.mxu0 0.0
        %2658 = vmatpush1.msra.mxu0 0.0
        %2659 = vmatprep.subr.mxu0 0.0
        %2660 = vmatpush1.msra.mxu0 0.0
        %2661 = vmatprep.subr.mxu0 0.0
        %2662 = vmatpush1.msra.mxu0 0.0
        %2663 = vmatprep.subr.mxu0 0.0
        %2664 = vmatpush1.msra.mxu0 0.0
        %2665 = vmatprep.subr.mxu0 0.0
        %2666 = vmatpush1.msra.mxu0 0.0
        %2667 = vmatprep.subr.mxu0 0.0
        %2668 = vmatpush1.msra.mxu0 0.0
        %2669 = vmatprep.subr.mxu0 0.0
        %2670 = vmatpush1.msra.mxu0 0.0
        %2671 = vmatprep.subr.mxu0 0.0
        %2672 = vmatpush1.msra.mxu0 0.0
        %2673 = vmatprep.subr.mxu0 0.0
        %2674 = vmatpush1.msra.mxu0 0.0
        %2675 = vmatprep.subr.mxu0 0.0
        %2676 = vmatpush1.msra.mxu0 0.0
        %2677 = vmatprep.subr.mxu0 0.0
        %2678 = vmatpush1.msra.mxu0 0.0
        %2679 = vmatprep.subr.mxu0 0.0
        %2680 = vmatpush1.msra.mxu0 0.0
        %2681 = vmatprep.subr.mxu0 0.0
        %2682 = vmatpush1.msra.mxu0 0.0
        %2683 = vmatprep.subr.mxu0 0.0
        %2684 = vmatpush1.msra.mxu0 0.0
        %2685 = vmatprep.subr.mxu0 0.0
        %2686 = vmatpush1.msra.mxu0 0.0
        %2687 = vmatprep.subr.mxu0 0.0
        %2688 = vmatpush1.msra.mxu0 0.0
        %2689 = vmatprep.subr.mxu0 0.0
        %2690 = vmatpush1.msra.mxu0 0.0
        %2691 = vmatprep.subr.mxu0 0.0
        %2692 = vmatpush1.msra.mxu0 0.0
        %2693 = vmatprep.subr.mxu0 0.0
        %2694 = vmatpush1.msra.mxu0 0.0
        %2695 = vmatprep.subr.mxu0 0.0
        %2696 = vmatpush1.msra.mxu0 0.0
        %2697 = vmatprep.subr.mxu0 0.0
        %2698 = vmatpush1.msra.mxu0 0.0
        %2699 = vmatprep.subr.mxu0 0.0
        %2700 = vmatpush1.msra.mxu0 0.0
        %2701 = vmatprep.subr.mxu0 0.0
        %2702 = vmatpush1.msra.mxu0 0.0
        %2703 = vmatprep.subr.mxu0 0.0
        %2704 = vmatpush1.msra.mxu0 0.0
        %2705 = vmatprep.mubr.f32.mxu0 0.0
        %2706 = vmatmul.mubr.f32.gmra.mrb[0].mxu0 %v2636
        %v2707 = vpop.f32.mrb[0].mxu0
        %v2708 = vadd.f32 %v2633, %v2707
        %v2709 = vpop.f32.mrb[0].mxu0
        %2710 = vmatprep.mubr.f32.mxu0 0.0
        %2711 = vmatmul.mubr.f32.gmra.mrb[0].mxu0 %v2639
        %v2712 = vpop.f32.mrb[0].mxu0
        %v2713 = vadd.f32 %v2633, %v2712
        %v2714 = vpop.f32.mrb[0].mxu0
        %2715 = vdwg.mxu0
        %2717 = vrot.lane.b32.xlu0 %v2708, 96
        %v2718 = vpop.permute.xlu0 %2717
        %v2719 = vsel %vm1084, %v2708, 0
        %v2721 = vsel %vm1084, %v2718, 0
        %2723 = vmatprep.subr.mxu0 0.0
        %2724 = vmatpush1.xpose.msra.mxu0 %v2721
        %2725 = vmatprep.subr.mxu0 0.0
        %2726 = vmatpush1.xpose.msra.mxu0 0.0
        %2727 = vmatprep.subr.mxu0 0.0
        %2728 = vmatpush1.xpose.msra.mxu0 0.0
        %2729 = vmatprep.subr.mxu0 0.0
        %2730 = vmatpush1.xpose.msra.mxu0 0.0
        %2731 = vmatprep.subr.mxu0 0.0
        %2732 = vmatpush1.xpose.msra.mxu0 0.0
        %2733 = vmatprep.subr.mxu0 0.0
        %2734 = vmatpush1.xpose.msra.mxu0 0.0
        %2735 = vmatprep.subr.mxu0 0.0
        %2736 = vmatpush1.xpose.msra.mxu0 0.0
        %2737 = vmatprep.subr.mxu0 0.0
        %2738 = vmatpush1.xpose.msra.mxu0 0.0
        %2739 = vmatprep.subr.mxu0 0.0
        %2740 = vmatpush1.xpose.msra.mxu0 0.0
        %2741 = vmatprep.subr.mxu0 0.0
        %2742 = vmatpush1.xpose.msra.mxu0 0.0
        %2743 = vmatprep.subr.mxu0 0.0
        %2744 = vmatpush1.xpose.msra.mxu0 0.0
        %2745 = vmatprep.subr.mxu0 0.0
        %2746 = vmatpush1.xpose.msra.mxu0 0.0
        %2747 = vmatprep.subr.mxu0 0.0
        %2748 = vmatpush1.xpose.msra.mxu0 0.0
        %2749 = vmatprep.subr.mxu0 0.0
        %2750 = vmatpush1.xpose.msra.mxu0 0.0
        %2751 = vmatprep.subr.mxu0 0.0
        %2752 = vmatpush1.xpose.msra.mxu0 0.0
        %2753 = vmatprep.subr.mxu0 0.0
        %2754 = vmatpush1.xpose.msra.mxu0 0.0
        %2755 = vmatprep.subr.mxu0 0.0
        %2756 = vmatpush1.xpose.msra.mxu0 0.0
        %2757 = vmatprep.subr.mxu0 0.0
        %2758 = vmatpush1.xpose.msra.mxu0 0.0
        %2759 = vmatprep.subr.mxu0 0.0
        %2760 = vmatpush1.xpose.msra.mxu0 0.0
        %2761 = vmatprep.subr.mxu0 0.0
        %2762 = vmatpush1.xpose.msra.mxu0 0.0
        %2763 = vmatprep.subr.mxu0 0.0
        %2764 = vmatpush1.xpose.msra.mxu0 0.0
        %2765 = vmatprep.subr.mxu0 0.0
        %2766 = vmatpush1.xpose.msra.mxu0 0.0
        %2767 = vmatprep.subr.mxu0 0.0
        %2768 = vmatpush1.xpose.msra.mxu0 0.0
        %2769 = vmatprep.subr.mxu0 0.0
        %2770 = vmatpush1.xpose.msra.mxu0 0.0
        %2771 = vmatprep.subr.mxu0 0.0
        %2772 = vmatpush1.xpose.msra.mxu0 0.0
        %2773 = vmatprep.subr.mxu0 0.0
        %2774 = vmatpush1.xpose.msra.mxu0 0.0
        %2775 = vmatprep.subr.mxu0 0.0
        %2776 = vmatpush1.xpose.msra.mxu0 0.0
        %2777 = vmatprep.subr.mxu0 0.0
        %2778 = vmatpush1.xpose.msra.mxu0 0.0
        %2779 = vmatprep.subr.mxu0 0.0
        %2780 = vmatpush1.xpose.msra.mxu0 0.0
        %2781 = vmatprep.subr.mxu0 0.0
        %2782 = vmatpush1.xpose.msra.mxu0 0.0
        %2783 = vmatprep.subr.mxu0 0.0
        %2784 = vmatpush1.xpose.msra.mxu0 0.0
        %2785 = vmatprep.subr.mxu0 0.0
        %2786 = vmatpush1.xpose.msra.mxu0 0.0
        %2787 = vmatprep.mubr.f32.mxu0 0.0
        %2788 = vmatmul.mubr.f32.gmra.mrb[0].mxu0 %v2719
        %v2789 = vpop.f32.mrb[0].mxu0
        %v2790 = vadd.f32 0.0, %v2789
        %v2791 = vpop.f32.mrb[0].mxu0
        %2792 = vdwg.mxu0
        %2794 = vrot.lane.b32.xlu0 %v2713, 96
        %v2795 = vpop.permute.xlu0 %2794
        %v2796 = vsel %vm1084, %v2713, 0
        %v2798 = vsel %vm1084, %v2795, 0
        %2800 = vmatprep.subr.mxu0 0.0
        %2801 = vmatpush1.xpose.msra.mxu0 %v2798
        %2802 = vmatprep.subr.mxu0 0.0
        %2803 = vmatpush1.xpose.msra.mxu0 0.0
        %2804 = vmatprep.subr.mxu0 0.0
        %2805 = vmatpush1.xpose.msra.mxu0 0.0
        %2806 = vmatprep.subr.mxu0 0.0
        %2807 = vmatpush1.xpose.msra.mxu0 0.0
        %2808 = vmatprep.subr.mxu0 0.0
        %2809 = vmatpush1.xpose.msra.mxu0 0.0
        %2810 = vmatprep.subr.mxu0 0.0
        %2811 = vmatpush1.xpose.msra.mxu0 0.0
        %2812 = vmatprep.subr.mxu0 0.0
        %2813 = vmatpush1.xpose.msra.mxu0 0.0
        %2814 = vmatprep.subr.mxu0 0.0
        %2815 = vmatpush1.xpose.msra.mxu0 0.0
        %2816 = vmatprep.subr.mxu0 0.0
        %2817 = vmatpush1.xpose.msra.mxu0 0.0
        %2818 = vmatprep.subr.mxu0 0.0
        %2819 = vmatpush1.xpose.msra.mxu0 0.0
        %2820 = vmatprep.subr.mxu0 0.0
        %2821 = vmatpush1.xpose.msra.mxu0 0.0
        %2822 = vmatprep.subr.mxu0 0.0
        %2823 = vmatpush1.xpose.msra.mxu0 0.0
        %2824 = vmatprep.subr.mxu0 0.0
        %2825 = vmatpush1.xpose.msra.mxu0 0.0
        %2826 = vmatprep.subr.mxu0 0.0
        %2827 = vmatpush1.xpose.msra.mxu0 0.0
        %2828 = vmatprep.subr.mxu0 0.0
        %2829 = vmatpush1.xpose.msra.mxu0 0.0
        %2830 = vmatprep.subr.mxu0 0.0
        %2831 = vmatpush1.xpose.msra.mxu0 0.0
        %2832 = vmatprep.subr.mxu0 0.0
        %2833 = vmatpush1.xpose.msra.mxu0 0.0
        %2834 = vmatprep.subr.mxu0 0.0
        %2835 = vmatpush1.xpose.msra.mxu0 0.0
        %2836 = vmatprep.subr.mxu0 0.0
        %2837 = vmatpush1.xpose.msra.mxu0 0.0
        %2838 = vmatprep.subr.mxu0 0.0
        %2839 = vmatpush1.xpose.msra.mxu0 0.0
        %2840 = vmatprep.subr.mxu0 0.0
        %2841 = vmatpush1.xpose.msra.mxu0 0.0
        %2842 = vmatprep.subr.mxu0 0.0
        %2843 = vmatpush1.xpose.msra.mxu0 0.0
        %2844 = vmatprep.subr.mxu0 0.0
        %2845 = vmatpush1.xpose.msra.mxu0 0.0
        %2846 = vmatprep.subr.mxu0 0.0
        %2847 = vmatpush1.xpose.msra.mxu0 0.0
        %2848 = vmatprep.subr.mxu0 0.0
        %2849 = vmatpush1.xpose.msra.mxu0 0.0
        %2850 = vmatprep.subr.mxu0 0.0
        %2851 = vmatpush1.xpose.msra.mxu0 0.0
        %2852 = vmatprep.subr.mxu0 0.0
        %2853 = vmatpush1.xpose.msra.mxu0 0.0
        %2854 = vmatprep.subr.mxu0 0.0
        %2855 = vmatpush1.xpose.msra.mxu0 0.0
        %2856 = vmatprep.subr.mxu0 0.0
        %2857 = vmatpush1.xpose.msra.mxu0 0.0
        %2858 = vmatprep.subr.mxu0 0.0
        %2859 = vmatpush1.xpose.msra.mxu0 0.0
        %2860 = vmatprep.subr.mxu0 0.0
        %2861 = vmatpush1.xpose.msra.mxu0 0.0
        %2862 = vmatprep.subr.mxu0 0.0
        %2863 = vmatpush1.xpose.msra.mxu0 0.0
        %2864 = vmatprep.mubr.f32.mxu0 0.0
        %2865 = vmatmul.mubr.f32.gmra.mrb[0].mxu0 %v2796
        %v2866 = vpop.f32.mrb[0].mxu0
        %v2867 = vadd.f32 0.0, %v2866
        %v2868 = vpop.f32.mrb[0].mxu0
        %2869 = vdwg.mxu0
        %v2870 = vmul.f32 %v2790, 0.35355338
        %v2871 = vmul.f32 %v2867, 0.35355338
        %v2872 = vsel %vm1084, %v2870, -inf
        %2873 = vmax.xlane.f32.xlu0 %v2872
        %v2874 = vpop.xlane.xlu0 %2873
        %v2875 = vsel %vm1084, %v2871, -inf
        %2876 = vmax.xlane.f32.xlu0 %v2875
        %v2877 = vpop.xlane.xlu0 %2876
        %v2878 = vsub.f32 %v2870, %v2874
        %v2879 = vsub.f32 %v2871, %v2877
        %v2880 = vmul.f32 %v2878, 1.442695
        %v2881 = vpow.pop %v2880
        %v2882 = vmul.f32 %v2879, 1.442695
        %v2883 = vpow.pop %v2882
        %v2884 = vsel %vm1084, %v2881, 0.0
        %2885 = vadd.xlane.f32.xlu0 %v2884
        %v2886 = vpop.xlane.xlu0 %2885
        %v2887 = vsel %vm1084, %v2883, 0.0
        %2888 = vadd.xlane.f32.xlu0 %v2887
        %v2889 = vpop.xlane.xlu0 %2888
        %2890 = vrot.lane.b32.xlu0 %v2708, 64
        %v2891 = vpop.permute.xlu0 %2890
        %v2894 = vsel %vm1084, %v2881, 0
        %2896 = vmatprep.subr.mxu0 0.0
        %2897 = vmatpush1.msra.mxu0 %v2891
        %2898 = vmatprep.subr.mxu0 0.0
        %2899 = vmatpush1.msra.mxu0 0.0
        %2900 = vmatprep.subr.mxu0 0.0
        %2901 = vmatpush1.msra.mxu0 0.0
        %2902 = vmatprep.subr.mxu0 0.0
        %2903 = vmatpush1.msra.mxu0 0.0
        %2904 = vmatprep.subr.mxu0 0.0
        %2905 = vmatpush1.msra.mxu0 0.0
        %2906 = vmatprep.subr.mxu0 0.0
        %2907 = vmatpush1.msra.mxu0 0.0
        %2908 = vmatprep.subr.mxu0 0.0
        %2909 = vmatpush1.msra.mxu0 0.0
        %2910 = vmatprep.subr.mxu0 0.0
        %2911 = vmatpush1.msra.mxu0 0.0
        %2912 = vmatprep.subr.mxu0 0.0
        %2913 = vmatpush1.msra.mxu0 0.0
        %2914 = vmatprep.subr.mxu0 0.0
        %2915 = vmatpush1.msra.mxu0 0.0
        %2916 = vmatprep.subr.mxu0 0.0
        %2917 = vmatpush1.msra.mxu0 0.0
        %2918 = vmatprep.subr.mxu0 0.0
        %2919 = vmatpush1.msra.mxu0 0.0
        %2920 = vmatprep.subr.mxu0 0.0
        %2921 = vmatpush1.msra.mxu0 0.0
        %2922 = vmatprep.subr.mxu0 0.0
        %2923 = vmatpush1.msra.mxu0 0.0
        %2924 = vmatprep.subr.mxu0 0.0
        %2925 = vmatpush1.msra.mxu0 0.0
        %2926 = vmatprep.subr.mxu0 0.0
        %2927 = vmatpush1.msra.mxu0 0.0
        %2928 = vmatprep.subr.mxu0 0.0
        %2929 = vmatpush1.msra.mxu0 0.0
        %2930 = vmatprep.subr.mxu0 0.0
        %2931 = vmatpush1.msra.mxu0 0.0
        %2932 = vmatprep.subr.mxu0 0.0
        %2933 = vmatpush1.msra.mxu0 0.0
        %2934 = vmatprep.subr.mxu0 0.0
        %2935 = vmatpush1.msra.mxu0 0.0
        %2936 = vmatprep.subr.mxu0 0.0
        %2937 = vmatpush1.msra.mxu0 0.0
        %2938 = vmatprep.subr.mxu0 0.0
        %2939 = vmatpush1.msra.mxu0 0.0
        %2940 = vmatprep.subr.mxu0 0.0
        %2941 = vmatpush1.msra.mxu0 0.0
        %2942 = vmatprep.subr.mxu0 0.0
        %2943 = vmatpush1.msra.mxu0 0.0
        %2944 = vmatprep.subr.mxu0 0.0
        %2945 = vmatpush1.msra.mxu0 0.0
        %2946 = vmatprep.subr.mxu0 0.0
        %2947 = vmatpush1.msra.mxu0 0.0
        %2948 = vmatprep.subr.mxu0 0.0
        %2949 = vmatpush1.msra.mxu0 0.0
        %2950 = vmatprep.subr.mxu0 0.0
        %2951 = vmatpush1.msra.mxu0 0.0
        %2952 = vmatprep.subr.mxu0 0.0
        %2953 = vmatpush1.msra.mxu0 0.0
        %2954 = vmatprep.subr.mxu0 0.0
        %2955 = vmatpush1.msra.mxu0 0.0
        %2956 = vmatprep.subr.mxu0 0.0
        %2957 = vmatpush1.msra.mxu0 0.0
        %2958 = vmatprep.subr.mxu0 0.0
        %2959 = vmatpush1.msra.mxu0 0.0
        %2960 = vmatprep.mubr.f32.mxu0 0.0
        %2961 = vmatmul.mubr.f32.gmra.mrb[0].mxu0 %v2894
        %v2962 = vpop.f32.mrb[0].mxu0
        %v2963 = vadd.f32 0.0, %v2962
        %v2964 = vpop.f32.mrb[0].mxu0
        %2965 = vdwg.mxu0
        %2966 = vrot.lane.b32.xlu0 %v2713, 64
        %v2967 = vpop.permute.xlu0 %2966
        %v2970 = vsel %vm1084, %v2883, 0
        %2972 = vmatprep.subr.mxu0 0.0
        %2973 = vmatpush1.msra.mxu0 %v2967
        %2974 = vmatprep.subr.mxu0 0.0
        %2975 = vmatpush1.msra.mxu0 0.0
        %2976 = vmatprep.subr.mxu0 0.0
        %2977 = vmatpush1.msra.mxu0 0.0
        %2978 = vmatprep.subr.mxu0 0.0
        %2979 = vmatpush1.msra.mxu0 0.0
        %2980 = vmatprep.subr.mxu0 0.0
        %2981 = vmatpush1.msra.mxu0 0.0
        %2982 = vmatprep.subr.mxu0 0.0
        %2983 = vmatpush1.msra.mxu0 0.0
        %2984 = vmatprep.subr.mxu0 0.0
        %2985 = vmatpush1.msra.mxu0 0.0
        %2986 = vmatprep.subr.mxu0 0.0
        %2987 = vmatpush1.msra.mxu0 0.0
        %2988 = vmatprep.subr.mxu0 0.0
        %2989 = vmatpush1.msra.mxu0 0.0
        %2990 = vmatprep.subr.mxu0 0.0
        %2991 = vmatpush1.msra.mxu0 0.0
        %2992 = vmatprep.subr.mxu0 0.0
        %2993 = vmatpush1.msra.mxu0 0.0
        %2994 = vmatprep.subr.mxu0 0.0
        %2995 = vmatpush1.msra.mxu0 0.0
        %2996 = vmatprep.subr.mxu0 0.0
        %2997 = vmatpush1.msra.mxu0 0.0
        %2998 = vmatprep.subr.mxu0 0.0
        %2999 = vmatpush1.msra.mxu0 0.0
        %3000 = vmatprep.subr.mxu0 0.0
        %3001 = vmatpush1.msra.mxu0 0.0
        %3002 = vmatprep.subr.mxu0 0.0
        %3003 = vmatpush1.msra.mxu0 0.0
        %3004 = vmatprep.subr.mxu0 0.0
        %3005 = vmatpush1.msra.mxu0 0.0
        %3006 = vmatprep.subr.mxu0 0.0
        %3007 = vmatpush1.msra.mxu0 0.0
        %3008 = vmatprep.subr.mxu0 0.0
        %3009 = vmatpush1.msra.mxu0 0.0
        %3010 = vmatprep.subr.mxu0 0.0
        %3011 = vmatpush1.msra.mxu0 0.0
        %3012 = vmatprep.subr.mxu0 0.0
        %3013 = vmatpush1.msra.mxu0 0.0
        %3014 = vmatprep.subr.mxu0 0.0
        %3015 = vmatpush1.msra.mxu0 0.0
        %3016 = vmatprep.subr.mxu0 0.0
        %3017 = vmatpush1.msra.mxu0 0.0
        %3018 = vmatprep.subr.mxu0 0.0
        %3019 = vmatpush1.msra.mxu0 0.0
        %3020 = vmatprep.subr.mxu0 0.0
        %3021 = vmatpush1.msra.mxu0 0.0
        %3022 = vmatprep.subr.mxu0 0.0
        %3023 = vmatpush1.msra.mxu0 0.0
        %3024 = vmatprep.subr.mxu0 0.0
        %3025 = vmatpush1.msra.mxu0 0.0
        %3026 = vmatprep.subr.mxu0 0.0
        %3027 = vmatpush1.msra.mxu0 0.0
        %3028 = vmatprep.subr.mxu0 0.0
        %3029 = vmatpush1.msra.mxu0 0.0
        %3030 = vmatprep.subr.mxu0 0.0
        %3031 = vmatpush1.msra.mxu0 0.0
        %3032 = vmatprep.subr.mxu0 0.0
        %3033 = vmatpush1.msra.mxu0 0.0
        %3034 = vmatprep.subr.mxu0 0.0
        %3035 = vmatpush1.msra.mxu0 0.0
        %3036 = vmatprep.mubr.f32.mxu0 0.0
        %3037 = vmatmul.mubr.f32.gmra.mrb[0].mxu0 %v2970
        %v3038 = vpop.f32.mrb[0].mxu0
        %v3039 = vadd.f32 0.0, %v3038
        %v3040 = vpop.f32.mrb[0].mxu0
        %3041 = vdwg.mxu0
        %v3042 = vrcp.pop %v2886
        %v3043 = vrcp.pop %v2889
        %v3044 = vmul.f32 %v2963, %v3042
        %v3045 = vmul.f32 %v3039, %v3043
        %3046 = vrot.lane.b32.xlu0 %v2708, 120
        %v3047 = vpop.permute.xlu0 %3046
        %3048 = vrot.lane.b32.xlu0 %v2708, 88
        %v3049 = vpop.permute.xlu0 %3048
        %v3050 = vsel %vm1084, %v3047, 0
        %v3052 = vsel %vm1084, %v3049, 0
        %3054 = vmatprep.subr.mxu0 0.0
        %3055 = vmatpush1.xpose.msra.mxu0 %v3052
        %3056 = vmatprep.subr.mxu0 0.0
        %3057 = vmatpush1.xpose.msra.mxu0 0.0
        %3058 = vmatprep.subr.mxu0 0.0
        %3059 = vmatpush1.xpose.msra.mxu0 0.0
        %3060 = vmatprep.subr.mxu0 0.0
        %3061 = vmatpush1.xpose.msra.mxu0 0.0
        %3062 = vmatprep.subr.mxu0 0.0
        %3063 = vmatpush1.xpose.msra.mxu0 0.0
        %3064 = vmatprep.subr.mxu0 0.0
        %3065 = vmatpush1.xpose.msra.mxu0 0.0
        %3066 = vmatprep.subr.mxu0 0.0
        %3067 = vmatpush1.xpose.msra.mxu0 0.0
        %3068 = vmatprep.subr.mxu0 0.0
        %3069 = vmatpush1.xpose.msra.mxu0 0.0
        %3070 = vmatprep.subr.mxu0 0.0
        %3071 = vmatpush1.xpose.msra.mxu0 0.0
        %3072 = vmatprep.subr.mxu0 0.0
        %3073 = vmatpush1.xpose.msra.mxu0 0.0
        %3074 = vmatprep.subr.mxu0 0.0
        %3075 = vmatpush1.xpose.msra.mxu0 0.0
        %3076 = vmatprep.subr.mxu0 0.0
        %3077 = vmatpush1.xpose.msra.mxu0 0.0
        %3078 = vmatprep.subr.mxu0 0.0
        %3079 = vmatpush1.xpose.msra.mxu0 0.0
        %3080 = vmatprep.subr.mxu0 0.0
        %3081 = vmatpush1.xpose.msra.mxu0 0.0
        %3082 = vmatprep.subr.mxu0 0.0
        %3083 = vmatpush1.xpose.msra.mxu0 0.0
        %3084 = vmatprep.subr.mxu0 0.0
        %3085 = vmatpush1.xpose.msra.mxu0 0.0
        %3086 = vmatprep.subr.mxu0 0.0
        %3087 = vmatpush1.xpose.msra.mxu0 0.0
        %3088 = vmatprep.subr.mxu0 0.0
        %3089 = vmatpush1.xpose.msra.mxu0 0.0
        %3090 = vmatprep.subr.mxu0 0.0
        %3091 = vmatpush1.xpose.msra.mxu0 0.0
        %3092 = vmatprep.subr.mxu0 0.0
        %3093 = vmatpush1.xpose.msra.mxu0 0.0
        %3094 = vmatprep.subr.mxu0 0.0
        %3095 = vmatpush1.xpose.msra.mxu0 0.0
        %3096 = vmatprep.subr.mxu0 0.0
        %3097 = vmatpush1.xpose.msra.mxu0 0.0
        %3098 = vmatprep.subr.mxu0 0.0
        %3099 = vmatpush1.xpose.msra.mxu0 0.0
        %3100 = vmatprep.subr.mxu0 0.0
        %3101 = vmatpush1.xpose.msra.mxu0 0.0
        %3102 = vmatprep.subr.mxu0 0.0
        %3103 = vmatpush1.xpose.msra.mxu0 0.0
        %3104 = vmatprep.subr.mxu0 0.0
        %3105 = vmatpush1.xpose.msra.mxu0 0.0
        %3106 = vmatprep.subr.mxu0 0.0
        %3107 = vmatpush1.xpose.msra.mxu0 0.0
        %3108 = vmatprep.subr.mxu0 0.0
        %3109 = vmatpush1.xpose.msra.mxu0 0.0
        %3110 = vmatprep.subr.mxu0 0.0
        %3111 = vmatpush1.xpose.msra.mxu0 0.0
        %3112 = vmatprep.subr.mxu0 0.0
        %3113 = vmatpush1.xpose.msra.mxu0 0.0
        %3114 = vmatprep.subr.mxu0 0.0
        %3115 = vmatpush1.xpose.msra.mxu0 0.0
        %3116 = vmatprep.subr.mxu0 0.0
        %3117 = vmatpush1.xpose.msra.mxu0 0.0
        %3118 = vmatprep.mubr.f32.mxu0 0.0
        %3119 = vmatmul.mubr.f32.gmra.mrb[0].mxu0 %v3050
        %v3120 = vpop.f32.mrb[0].mxu0
        %v3121 = vadd.f32 0.0, %v3120
        %v3122 = vpop.f32.mrb[0].mxu0
        %3123 = vdwg.mxu0
        %3124 = vrot.lane.b32.xlu0 %v2713, 120
        %v3125 = vpop.permute.xlu0 %3124
        %3126 = vrot.lane.b32.xlu0 %v2713, 88
        %v3127 = vpop.permute.xlu0 %3126
        %v3128 = vsel %vm1084, %v3125, 0
        %v3130 = vsel %vm1084, %v3127, 0
        %3132 = vmatprep.subr.mxu0 0.0
        %3133 = vmatpush1.xpose.msra.mxu0 %v3130
        %3134 = vmatprep.subr.mxu0 0.0
        %3135 = vmatpush1.xpose.msra.mxu0 0.0
        %3136 = vmatprep.subr.mxu0 0.0
        %3137 = vmatpush1.xpose.msra.mxu0 0.0
        %3138 = vmatprep.subr.mxu0 0.0
        %3139 = vmatpush1.xpose.msra.mxu0 0.0
        %3140 = vmatprep.subr.mxu0 0.0
        %3141 = vmatpush1.xpose.msra.mxu0 0.0
        %3142 = vmatprep.subr.mxu0 0.0
        %3143 = vmatpush1.xpose.msra.mxu0 0.0
        %3144 = vmatprep.subr.mxu0 0.0
        %3145 = vmatpush1.xpose.msra.mxu0 0.0
        %3146 = vmatprep.subr.mxu0 0.0
        %3147 = vmatpush1.xpose.msra.mxu0 0.0
        %3148 = vmatprep.subr.mxu0 0.0
        %3149 = vmatpush1.xpose.msra.mxu0 0.0
        %3150 = vmatprep.subr.mxu0 0.0
        %3151 = vmatpush1.xpose.msra.mxu0 0.0
        %3152 = vmatprep.subr.mxu0 0.0
        %3153 = vmatpush1.xpose.msra.mxu0 0.0
        %3154 = vmatprep.subr.mxu0 0.0
        %3155 = vmatpush1.xpose.msra.mxu0 0.0
        %3156 = vmatprep.subr.mxu0 0.0
        %3157 = vmatpush1.xpose.msra.mxu0 0.0
        %3158 = vmatprep.subr.mxu0 0.0
        %3159 = vmatpush1.xpose.msra.mxu0 0.0
        %3160 = vmatprep.subr.mxu0 0.0
        %3161 = vmatpush1.xpose.msra.mxu0 0.0
        %3162 = vmatprep.subr.mxu0 0.0
        %3163 = vmatpush1.xpose.msra.mxu0 0.0
        %3164 = vmatprep.subr.mxu0 0.0
        %3165 = vmatpush1.xpose.msra.mxu0 0.0
        %3166 = vmatprep.subr.mxu0 0.0
        %3167 = vmatpush1.xpose.msra.mxu0 0.0
        %3168 = vmatprep.subr.mxu0 0.0
        %3169 = vmatpush1.xpose.msra.mxu0 0.0
        %3170 = vmatprep.subr.mxu0 0.0
        %3171 = vmatpush1.xpose.msra.mxu0 0.0
        %3172 = vmatprep.subr.mxu0 0.0
        %3173 = vmatpush1.xpose.msra.mxu0 0.0
        %3174 = vmatprep.subr.mxu0 0.0
        %3175 = vmatpush1.xpose.msra.mxu0 0.0
        %3176 = vmatprep.subr.mxu0 0.0
        %3177 = vmatpush1.xpose.msra.mxu0 0.0
        %3178 = vmatprep.subr.mxu0 0.0
        %3179 = vmatpush1.xpose.msra.mxu0 0.0
        %3180 = vmatprep.subr.mxu0 0.0
        %3181 = vmatpush1.xpose.msra.mxu0 0.0
        %3182 = vmatprep.subr.mxu0 0.0
        %3183 = vmatpush1.xpose.msra.mxu0 0.0
        %3184 = vmatprep.subr.mxu0 0.0
        %3185 = vmatpush1.xpose.msra.mxu0 0.0
        %3186 = vmatprep.subr.mxu0 0.0
        %3187 = vmatpush1.xpose.msra.mxu0 0.0
        %3188 = vmatprep.subr.mxu0 0.0
        %3189 = vmatpush1.xpose.msra.mxu0 0.0
        %3190 = vmatprep.subr.mxu0 0.0
        %3191 = vmatpush1.xpose.msra.mxu0 0.0
        %3192 = vmatprep.subr.mxu0 0.0
        %3193 = vmatpush1.xpose.msra.mxu0 0.0
        %3194 = vmatprep.subr.mxu0 0.0
        %3195 = vmatpush1.xpose.msra.mxu0 0.0
        %3196 = vmatprep.mubr.f32.mxu0 0.0
        %3197 = vmatmul.mubr.f32.gmra.mrb[0].mxu0 %v3128
        %v3198 = vpop.f32.mrb[0].mxu0
        %v3199 = vadd.f32 0.0, %v3198
        %v3200 = vpop.f32.mrb[0].mxu0
        %3201 = vdwg.mxu0
        %v3202 = vmul.f32 %v3121, 0.35355338
        %v3203 = vmul.f32 %v3199, 0.35355338
        %v3204 = vsel %vm1084, %v3202, -inf
        %3205 = vmax.xlane.f32.xlu0 %v3204
        %v3206 = vpop.xlane.xlu0 %3205
        %v3207 = vsel %vm1084, %v3203, -inf
        %3208 = vmax.xlane.f32.xlu0 %v3207
        %v3209 = vpop.xlane.xlu0 %3208
        %v3210 = vsub.f32 %v3202, %v3206
        %v3211 = vsub.f32 %v3203, %v3209
        %v3212 = vmul.f32 %v3210, 1.442695
        %v3213 = vpow.pop %v3212
        %v3214 = vmul.f32 %v3211, 1.442695
        %v3215 = vpow.pop %v3214
        %v3216 = vsel %vm1084, %v3213, 0.0
        %3217 = vadd.xlane.f32.xlu0 %v3216
        %v3218 = vpop.xlane.xlu0 %3217
        %v3219 = vsel %vm1084, %v3215, 0.0
        %3220 = vadd.xlane.f32.xlu0 %v3219
        %v3221 = vpop.xlane.xlu0 %3220
        %3222 = vrot.lane.b32.xlu0 %v2708, 56
        %v3223 = vpop.permute.xlu0 %3222
        %v3226 = vsel %vm1084, %v3213, 0
        %3228 = vmatprep.subr.mxu0 0.0
        %3229 = vmatpush1.msra.mxu0 %v3223
        %3230 = vmatprep.subr.mxu0 0.0
        %3231 = vmatpush1.msra.mxu0 0.0
        %3232 = vmatprep.subr.mxu0 0.0
        %3233 = vmatpush1.msra.mxu0 0.0
        %3234 = vmatprep.subr.mxu0 0.0
        %3235 = vmatpush1.msra.mxu0 0.0
        %3236 = vmatprep.subr.mxu0 0.0
        %3237 = vmatpush1.msra.mxu0 0.0
        %3238 = vmatprep.subr.mxu0 0.0
        %3239 = vmatpush1.msra.mxu0 0.0
        %3240 = vmatprep.subr.mxu0 0.0
        %3241 = vmatpush1.msra.mxu0 0.0
        %3242 = vmatprep.subr.mxu0 0.0
        %3243 = vmatpush1.msra.mxu0 0.0
        %3244 = vmatprep.subr.mxu0 0.0
        %3245 = vmatpush1.msra.mxu0 0.0
        %3246 = vmatprep.subr.mxu0 0.0
        %3247 = vmatpush1.msra.mxu0 0.0
        %3248 = vmatprep.subr.mxu0 0.0
        %3249 = vmatpush1.msra.mxu0 0.0
        %3250 = vmatprep.subr.mxu0 0.0
        %3251 = vmatpush1.msra.mxu0 0.0
        %3252 = vmatprep.subr.mxu0 0.0
        %3253 = vmatpush1.msra.mxu0 0.0
        %3254 = vmatprep.subr.mxu0 0.0
        %3255 = vmatpush1.msra.mxu0 0.0
        %3256 = vmatprep.subr.mxu0 0.0
        %3257 = vmatpush1.msra.mxu0 0.0
        %3258 = vmatprep.subr.mxu0 0.0
        %3259 = vmatpush1.msra.mxu0 0.0
        %3260 = vmatprep.subr.mxu0 0.0
        %3261 = vmatpush1.msra.mxu0 0.0
        %3262 = vmatprep.subr.mxu0 0.0
        %3263 = vmatpush1.msra.mxu0 0.0
        %3264 = vmatprep.subr.mxu0 0.0
        %3265 = vmatpush1.msra.mxu0 0.0
        %3266 = vmatprep.subr.mxu0 0.0
        %3267 = vmatpush1.msra.mxu0 0.0
        %3268 = vmatprep.subr.mxu0 0.0
        %3269 = vmatpush1.msra.mxu0 0.0
        %3270 = vmatprep.subr.mxu0 0.0
        %3271 = vmatpush1.msra.mxu0 0.0
        %3272 = vmatprep.subr.mxu0 0.0
        %3273 = vmatpush1.msra.mxu0 0.0
        %3274 = vmatprep.subr.mxu0 0.0
        %3275 = vmatpush1.msra.mxu0 0.0
        %3276 = vmatprep.subr.mxu0 0.0
        %3277 = vmatpush1.msra.mxu0 0.0
        %3278 = vmatprep.subr.mxu0 0.0
        %3279 = vmatpush1.msra.mxu0 0.0
        %3280 = vmatprep.subr.mxu0 0.0
        %3281 = vmatpush1.msra.mxu0 0.0
        %3282 = vmatprep.subr.mxu0 0.0
        %3283 = vmatpush1.msra.mxu0 0.0
        %3284 = vmatprep.subr.mxu0 0.0
        %3285 = vmatpush1.msra.mxu0 0.0
        %3286 = vmatprep.subr.mxu0 0.0
        %3287 = vmatpush1.msra.mxu0 0.0
        %3288 = vmatprep.subr.mxu0 0.0
        %3289 = vmatpush1.msra.mxu0 0.0
        %3290 = vmatprep.subr.mxu0 0.0
        %3291 = vmatpush1.msra.mxu0 0.0
        %3292 = vmatprep.mubr.f32.mxu0 0.0
        %3293 = vmatmul.mubr.f32.gmra.mrb[0].mxu0 %v3226
        %v3294 = vpop.f32.mrb[0].mxu0
        %v3295 = vadd.f32 0.0, %v3294
        %v3296 = vpop.f32.mrb[0].mxu0
        %3297 = vdwg.mxu0
        %3298 = vrot.lane.b32.xlu0 %v2713, 56
        %v3299 = vpop.permute.xlu0 %3298
        %v3302 = vsel %vm1084, %v3215, 0
        %3304 = vmatprep.subr.mxu0 0.0
        %3305 = vmatpush1.msra.mxu0 %v3299
        %3306 = vmatprep.subr.mxu0 0.0
        %3307 = vmatpush1.msra.mxu0 0.0
        %3308 = vmatprep.subr.mxu0 0.0
        %3309 = vmatpush1.msra.mxu0 0.0
        %3310 = vmatprep.subr.mxu0 0.0
        %3311 = vmatpush1.msra.mxu0 0.0
        %3312 = vmatprep.subr.mxu0 0.0
        %3313 = vmatpush1.msra.mxu0 0.0
        %3314 = vmatprep.subr.mxu0 0.0
        %3315 = vmatpush1.msra.mxu0 0.0
        %3316 = vmatprep.subr.mxu0 0.0
        %3317 = vmatpush1.msra.mxu0 0.0
        %3318 = vmatprep.subr.mxu0 0.0
        %3319 = vmatpush1.msra.mxu0 0.0
        %3320 = vmatprep.subr.mxu0 0.0
        %3321 = vmatpush1.msra.mxu0 0.0
        %3322 = vmatprep.subr.mxu0 0.0
        %3323 = vmatpush1.msra.mxu0 0.0
        %3324 = vmatprep.subr.mxu0 0.0
        %3325 = vmatpush1.msra.mxu0 0.0
        %3326 = vmatprep.subr.mxu0 0.0
        %3327 = vmatpush1.msra.mxu0 0.0
        %3328 = vmatprep.subr.mxu0 0.0
        %3329 = vmatpush1.msra.mxu0 0.0
        %3330 = vmatprep.subr.mxu0 0.0
        %3331 = vmatpush1.msra.mxu0 0.0
        %3332 = vmatprep.subr.mxu0 0.0
        %3333 = vmatpush1.msra.mxu0 0.0
        %3334 = vmatprep.subr.mxu0 0.0
        %3335 = vmatpush1.msra.mxu0 0.0
        %3336 = vmatprep.subr.mxu0 0.0
        %3337 = vmatpush1.msra.mxu0 0.0
        %3338 = vmatprep.subr.mxu0 0.0
        %3339 = vmatpush1.msra.mxu0 0.0
        %3340 = vmatprep.subr.mxu0 0.0
        %3341 = vmatpush1.msra.mxu0 0.0
        %3342 = vmatprep.subr.mxu0 0.0
        %3343 = vmatpush1.msra.mxu0 0.0
        %3344 = vmatprep.subr.mxu0 0.0
        %3345 = vmatpush1.msra.mxu0 0.0
        %3346 = vmatprep.subr.mxu0 0.0
        %3347 = vmatpush1.msra.mxu0 0.0
        %3348 = vmatprep.subr.mxu0 0.0
        %3349 = vmatpush1.msra.mxu0 0.0
        %3350 = vmatprep.subr.mxu0 0.0
        %3351 = vmatpush1.msra.mxu0 0.0
        %3352 = vmatprep.subr.mxu0 0.0
        %3353 = vmatpush1.msra.mxu0 0.0
        %3354 = vmatprep.subr.mxu0 0.0
        %3355 = vmatpush1.msra.mxu0 0.0
        %3356 = vmatprep.subr.mxu0 0.0
        %3357 = vmatpush1.msra.mxu0 0.0
        %3358 = vmatprep.subr.mxu0 0.0
        %3359 = vmatpush1.msra.mxu0 0.0
        %3360 = vmatprep.subr.mxu0 0.0
        %3361 = vmatpush1.msra.mxu0 0.0
        %3362 = vmatprep.subr.mxu0 0.0
        %3363 = vmatpush1.msra.mxu0 0.0
        %3364 = vmatprep.subr.mxu0 0.0
        %3365 = vmatpush1.msra.mxu0 0.0
        %3366 = vmatprep.subr.mxu0 0.0
        %3367 = vmatpush1.msra.mxu0 0.0
        %3368 = vmatprep.mubr.f32.mxu0 0.0
        %3369 = vmatmul.mubr.f32.gmra.mrb[0].mxu0 %v3302
        %v3370 = vpop.f32.mrb[0].mxu0
        %v3371 = vadd.f32 0.0, %v3370
        %v3372 = vpop.f32.mrb[0].mxu0
        %3373 = vdwg.mxu0
        %v3374 = vrcp.pop %v3218
        %v3375 = vrcp.pop %v3221
        %v3376 = vmul.f32 %v3295, %v3374
        %v3377 = vmul.f32 %v3371, %v3375
        %3378 = vrot.lane.b32.xlu0 %v2708, 112
        %v3379 = vpop.permute.xlu0 %3378
        %3380 = vrot.lane.b32.xlu0 %v2708, 80
        %v3381 = vpop.permute.xlu0 %3380
        %v3382 = vsel %vm1084, %v3379, 0
        %v3384 = vsel %vm1084, %v3381, 0
        %3386 = vmatprep.subr.mxu0 0.0
        %3387 = vmatpush1.xpose.msra.mxu0 %v3384
        %3388 = vmatprep.subr.mxu0 0.0
        %3389 = vmatpush1.xpose.msra.mxu0 0.0
        %3390 = vmatprep.subr.mxu0 0.0
        %3391 = vmatpush1.xpose.msra.mxu0 0.0
        %3392 = vmatprep.subr.mxu0 0.0
        %3393 = vmatpush1.xpose.msra.mxu0 0.0
        %3394 = vmatprep.subr.mxu0 0.0
        %3395 = vmatpush1.xpose.msra.mxu0 0.0
        %3396 = vmatprep.subr.mxu0 0.0
        %3397 = vmatpush1.xpose.msra.mxu0 0.0
        %3398 = vmatprep.subr.mxu0 0.0
        %3399 = vmatpush1.xpose.msra.mxu0 0.0
        %3400 = vmatprep.subr.mxu0 0.0
        %3401 = vmatpush1.xpose.msra.mxu0 0.0
        %3402 = vmatprep.subr.mxu0 0.0
        %3403 = vmatpush1.xpose.msra.mxu0 0.0
        %3404 = vmatprep.subr.mxu0 0.0
        %3405 = vmatpush1.xpose.msra.mxu0 0.0
        %3406 = vmatprep.subr.mxu0 0.0
        %3407 = vmatpush1.xpose.msra.mxu0 0.0
        %3408 = vmatprep.subr.mxu0 0.0
        %3409 = vmatpush1.xpose.msra.mxu0 0.0
        %3410 = vmatprep.subr.mxu0 0.0
        %3411 = vmatpush1.xpose.msra.mxu0 0.0
        %3412 = vmatprep.subr.mxu0 0.0
        %3413 = vmatpush1.xpose.msra.mxu0 0.0
        %3414 = vmatprep.subr.mxu0 0.0
        %3415 = vmatpush1.xpose.msra.mxu0 0.0
        %3416 = vmatprep.subr.mxu0 0.0
        %3417 = vmatpush1.xpose.msra.mxu0 0.0
        %3418 = vmatprep.subr.mxu0 0.0
        %3419 = vmatpush1.xpose.msra.mxu0 0.0
        %3420 = vmatprep.subr.mxu0 0.0
        %3421 = vmatpush1.xpose.msra.mxu0 0.0
        %3422 = vmatprep.subr.mxu0 0.0
        %3423 = vmatpush1.xpose.msra.mxu0 0.0
        %3424 = vmatprep.subr.mxu0 0.0
        %3425 = vmatpush1.xpose.msra.mxu0 0.0
        %3426 = vmatprep.subr.mxu0 0.0
        %3427 = vmatpush1.xpose.msra.mxu0 0.0
        %3428 = vmatprep.subr.mxu0 0.0
        %3429 = vmatpush1.xpose.msra.mxu0 0.0
        %3430 = vmatprep.subr.mxu0 0.0
        %3431 = vmatpush1.xpose.msra.mxu0 0.0
        %3432 = vmatprep.subr.mxu0 0.0
        %3433 = vmatpush1.xpose.msra.mxu0 0.0
        %3434 = vmatprep.subr.mxu0 0.0
        %3435 = vmatpush1.xpose.msra.mxu0 0.0
        %3436 = vmatprep.subr.mxu0 0.0
        %3437 = vmatpush1.xpose.msra.mxu0 0.0
        %3438 = vmatprep.subr.mxu0 0.0
        %3439 = vmatpush1.xpose.msra.mxu0 0.0
        %3440 = vmatprep.subr.mxu0 0.0
        %3441 = vmatpush1.xpose.msra.mxu0 0.0
        %3442 = vmatprep.subr.mxu0 0.0
        %3443 = vmatpush1.xpose.msra.mxu0 0.0
        %3444 = vmatprep.subr.mxu0 0.0
        %3445 = vmatpush1.xpose.msra.mxu0 0.0
        %3446 = vmatprep.subr.mxu0 0.0
        %3447 = vmatpush1.xpose.msra.mxu0 0.0
        %3448 = vmatprep.subr.mxu0 0.0
        %3449 = vmatpush1.xpose.msra.mxu0 0.0
        %3450 = vmatprep.mubr.f32.mxu0 0.0
        %3451 = vmatmul.mubr.f32.gmra.mrb[0].mxu0 %v3382
        %v3452 = vpop.f32.mrb[0].mxu0
        %v3453 = vadd.f32 0.0, %v3452
        %v3454 = vpop.f32.mrb[0].mxu0
        %3455 = vdwg.mxu0
        %3456 = vrot.lane.b32.xlu0 %v2713, 112
        %v3457 = vpop.permute.xlu0 %3456
        %3458 = vrot.lane.b32.xlu0 %v2713, 80
        %v3459 = vpop.permute.xlu0 %3458
        %v3460 = vsel %vm1084, %v3457, 0
        %v3462 = vsel %vm1084, %v3459, 0
        %3464 = vmatprep.subr.mxu0 0.0
        %3465 = vmatpush1.xpose.msra.mxu0 %v3462
        %3466 = vmatprep.subr.mxu0 0.0
        %3467 = vmatpush1.xpose.msra.mxu0 0.0
        %3468 = vmatprep.subr.mxu0 0.0
        %3469 = vmatpush1.xpose.msra.mxu0 0.0
        %3470 = vmatprep.subr.mxu0 0.0
        %3471 = vmatpush1.xpose.msra.mxu0 0.0
        %3472 = vmatprep.subr.mxu0 0.0
        %3473 = vmatpush1.xpose.msra.mxu0 0.0
        %3474 = vmatprep.subr.mxu0 0.0
        %3475 = vmatpush1.xpose.msra.mxu0 0.0
        %3476 = vmatprep.subr.mxu0 0.0
        %3477 = vmatpush1.xpose.msra.mxu0 0.0
        %3478 = vmatprep.subr.mxu0 0.0
        %3479 = vmatpush1.xpose.msra.mxu0 0.0
        %3480 = vmatprep.subr.mxu0 0.0
        %3481 = vmatpush1.xpose.msra.mxu0 0.0
        %3482 = vmatprep.subr.mxu0 0.0
        %3483 = vmatpush1.xpose.msra.mxu0 0.0
        %3484 = vmatprep.subr.mxu0 0.0
        %3485 = vmatpush1.xpose.msra.mxu0 0.0
        %3486 = vmatprep.subr.mxu0 0.0
        %3487 = vmatpush1.xpose.msra.mxu0 0.0
        %3488 = vmatprep.subr.mxu0 0.0
        %3489 = vmatpush1.xpose.msra.mxu0 0.0
        %3490 = vmatprep.subr.mxu0 0.0
        %3491 = vmatpush1.xpose.msra.mxu0 0.0
        %3492 = vmatprep.subr.mxu0 0.0
        %3493 = vmatpush1.xpose.msra.mxu0 0.0
        %3494 = vmatprep.subr.mxu0 0.0
        %3495 = vmatpush1.xpose.msra.mxu0 0.0
        %3496 = vmatprep.subr.mxu0 0.0
        %3497 = vmatpush1.xpose.msra.mxu0 0.0
        %3498 = vmatprep.subr.mxu0 0.0
        %3499 = vmatpush1.xpose.msra.mxu0 0.0
        %3500 = vmatprep.subr.mxu0 0.0
        %3501 = vmatpush1.xpose.msra.mxu0 0.0
        %3502 = vmatprep.subr.mxu0 0.0
        %3503 = vmatpush1.xpose.msra.mxu0 0.0
        %3504 = vmatprep.subr.mxu0 0.0
        %3505 = vmatpush1.xpose.msra.mxu0 0.0
        %3506 = vmatprep.subr.mxu0 0.0
        %3507 = vmatpush1.xpose.msra.mxu0 0.0
        %3508 = vmatprep.subr.mxu0 0.0
        %3509 = vmatpush1.xpose.msra.mxu0 0.0
        %3510 = vmatprep.subr.mxu0 0.0
        %3511 = vmatpush1.xpose.msra.mxu0 0.0
        %3512 = vmatprep.subr.mxu0 0.0
        %3513 = vmatpush1.xpose.msra.mxu0 0.0
        %3514 = vmatprep.subr.mxu0 0.0
        %3515 = vmatpush1.xpose.msra.mxu0 0.0
        %3516 = vmatprep.subr.mxu0 0.0
        %3517 = vmatpush1.xpose.msra.mxu0 0.0
        %3518 = vmatprep.subr.mxu0 0.0
        %3519 = vmatpush1.xpose.msra.mxu0 0.0
        %3520 = vmatprep.subr.mxu0 0.0
        %3521 = vmatpush1.xpose.msra.mxu0 0.0
        %3522 = vmatprep.subr.mxu0 0.0
        %3523 = vmatpush1.xpose.msra.mxu0 0.0
        %3524 = vmatprep.subr.mxu0 0.0
        %3525 = vmatpush1.xpose.msra.mxu0 0.0
        %3526 = vmatprep.subr.mxu0 0.0
        %3527 = vmatpush1.xpose.msra.mxu0 0.0
        %3528 = vmatprep.mubr.f32.mxu0 0.0
        %3529 = vmatmul.mubr.f32.gmra.mrb[0].mxu0 %v3460
        %v3530 = vpop.f32.mrb[0].mxu0
        %v3531 = vadd.f32 0.0, %v3530
        %v3532 = vpop.f32.mrb[0].mxu0
        %3533 = vdwg.mxu0
        %v3534 = vmul.f32 %v3453, 0.35355338
        %v3535 = vmul.f32 %v3531, 0.35355338
        %v3536 = vsel %vm1084, %v3534, -inf
        %3537 = vmax.xlane.f32.xlu0 %v3536
        %v3538 = vpop.xlane.xlu0 %3537
        %v3539 = vsel %vm1084, %v3535, -inf
        %3540 = vmax.xlane.f32.xlu0 %v3539
        %v3541 = vpop.xlane.xlu0 %3540
        %v3542 = vsub.f32 %v3534, %v3538
        %v3543 = vsub.f32 %v3535, %v3541
        %v3544 = vmul.f32 %v3542, 1.442695
        %v3545 = vpow.pop %v3544
        %v3546 = vmul.f32 %v3543, 1.442695
        %v3547 = vpow.pop %v3546
        %v3548 = vsel %vm1084, %v3545, 0.0
        %3549 = vadd.xlane.f32.xlu0 %v3548
        %v3550 = vpop.xlane.xlu0 %3549
        %v3551 = vsel %vm1084, %v3547, 0.0
        %3552 = vadd.xlane.f32.xlu0 %v3551
        %v3553 = vpop.xlane.xlu0 %3552
        %3554 = vrot.lane.b32.xlu0 %v2708, 48
        %v3555 = vpop.permute.xlu0 %3554
        %v3558 = vsel %vm1084, %v3545, 0
        %3560 = vmatprep.subr.mxu0 0.0
        %3561 = vmatpush1.msra.mxu0 %v3555
        %3562 = vmatprep.subr.mxu0 0.0
        %3563 = vmatpush1.msra.mxu0 0.0
        %3564 = vmatprep.subr.mxu0 0.0
        %3565 = vmatpush1.msra.mxu0 0.0
        %3566 = vmatprep.subr.mxu0 0.0
        %3567 = vmatpush1.msra.mxu0 0.0
        %3568 = vmatprep.subr.mxu0 0.0
        %3569 = vmatpush1.msra.mxu0 0.0
        %3570 = vmatprep.subr.mxu0 0.0
        %3571 = vmatpush1.msra.mxu0 0.0
        %3572 = vmatprep.subr.mxu0 0.0
        %3573 = vmatpush1.msra.mxu0 0.0
        %3574 = vmatprep.subr.mxu0 0.0
        %3575 = vmatpush1.msra.mxu0 0.0
        %3576 = vmatprep.subr.mxu0 0.0
        %3577 = vmatpush1.msra.mxu0 0.0
        %3578 = vmatprep.subr.mxu0 0.0
        %3579 = vmatpush1.msra.mxu0 0.0
        %3580 = vmatprep.subr.mxu0 0.0
        %3581 = vmatpush1.msra.mxu0 0.0
        %3582 = vmatprep.subr.mxu0 0.0
        %3583 = vmatpush1.msra.mxu0 0.0
        %3584 = vmatprep.subr.mxu0 0.0
        %3585 = vmatpush1.msra.mxu0 0.0
        %3586 = vmatprep.subr.mxu0 0.0
        %3587 = vmatpush1.msra.mxu0 0.0
        %3588 = vmatprep.subr.mxu0 0.0
        %3589 = vmatpush1.msra.mxu0 0.0
        %3590 = vmatprep.subr.mxu0 0.0
        %3591 = vmatpush1.msra.mxu0 0.0
        %3592 = vmatprep.subr.mxu0 0.0
        %3593 = vmatpush1.msra.mxu0 0.0
        %3594 = vmatprep.subr.mxu0 0.0
        %3595 = vmatpush1.msra.mxu0 0.0
        %3596 = vmatprep.subr.mxu0 0.0
        %3597 = vmatpush1.msra.mxu0 0.0
        %3598 = vmatprep.subr.mxu0 0.0
        %3599 = vmatpush1.msra.mxu0 0.0
        %3600 = vmatprep.subr.mxu0 0.0
        %3601 = vmatpush1.msra.mxu0 0.0
        %3602 = vmatprep.subr.mxu0 0.0
        %3603 = vmatpush1.msra.mxu0 0.0
        %3604 = vmatprep.subr.mxu0 0.0
        %3605 = vmatpush1.msra.mxu0 0.0
        %3606 = vmatprep.subr.mxu0 0.0
        %3607 = vmatpush1.msra.mxu0 0.0
        %3608 = vmatprep.subr.mxu0 0.0
        %3609 = vmatpush1.msra.mxu0 0.0
        %3610 = vmatprep.subr.mxu0 0.0
        %3611 = vmatpush1.msra.mxu0 0.0
        %3612 = vmatprep.subr.mxu0 0.0
        %3613 = vmatpush1.msra.mxu0 0.0
        %3614 = vmatprep.subr.mxu0 0.0
        %3615 = vmatpush1.msra.mxu0 0.0
        %3616 = vmatprep.subr.mxu0 0.0
        %3617 = vmatpush1.msra.mxu0 0.0
        %3618 = vmatprep.subr.mxu0 0.0
        %3619 = vmatpush1.msra.mxu0 0.0
        %3620 = vmatprep.subr.mxu0 0.0
        %3621 = vmatpush1.msra.mxu0 0.0
        %3622 = vmatprep.subr.mxu0 0.0
        %3623 = vmatpush1.msra.mxu0 0.0
        %3624 = vmatprep.mubr.f32.mxu0 0.0
        %3625 = vmatmul.mubr.f32.gmra.mrb[0].mxu0 %v3558
        %v3626 = vpop.f32.mrb[0].mxu0
        %v3627 = vadd.f32 0.0, %v3626
        %v3628 = vpop.f32.mrb[0].mxu0
        %3629 = vdwg.mxu0
        %3630 = vrot.lane.b32.xlu0 %v2713, 48
        %v3631 = vpop.permute.xlu0 %3630
        %v3634 = vsel %vm1084, %v3547, 0
        %3636 = vmatprep.subr.mxu0 0.0
        %3637 = vmatpush1.msra.mxu0 %v3631
        %3638 = vmatprep.subr.mxu0 0.0
        %3639 = vmatpush1.msra.mxu0 0.0
        %3640 = vmatprep.subr.mxu0 0.0
        %3641 = vmatpush1.msra.mxu0 0.0
        %3642 = vmatprep.subr.mxu0 0.0
        %3643 = vmatpush1.msra.mxu0 0.0
        %3644 = vmatprep.subr.mxu0 0.0
        %3645 = vmatpush1.msra.mxu0 0.0
        %3646 = vmatprep.subr.mxu0 0.0
        %3647 = vmatpush1.msra.mxu0 0.0
        %3648 = vmatprep.subr.mxu0 0.0
        %3649 = vmatpush1.msra.mxu0 0.0
        %3650 = vmatprep.subr.mxu0 0.0
        %3651 = vmatpush1.msra.mxu0 0.0
        %3652 = vmatprep.subr.mxu0 0.0
        %3653 = vmatpush1.msra.mxu0 0.0
        %3654 = vmatprep.subr.mxu0 0.0
        %3655 = vmatpush1.msra.mxu0 0.0
        %3656 = vmatprep.subr.mxu0 0.0
        %3657 = vmatpush1.msra.mxu0 0.0
        %3658 = vmatprep.subr.mxu0 0.0
        %3659 = vmatpush1.msra.mxu0 0.0
        %3660 = vmatprep.subr.mxu0 0.0
        %3661 = vmatpush1.msra.mxu0 0.0
        %3662 = vmatprep.subr.mxu0 0.0
        %3663 = vmatpush1.msra.mxu0 0.0
        %3664 = vmatprep.subr.mxu0 0.0
        %3665 = vmatpush1.msra.mxu0 0.0
        %3666 = vmatprep.subr.mxu0 0.0
        %3667 = vmatpush1.msra.mxu0 0.0
        %3668 = vmatprep.subr.mxu0 0.0
        %3669 = vmatpush1.msra.mxu0 0.0
        %3670 = vmatprep.subr.mxu0 0.0
        %3671 = vmatpush1.msra.mxu0 0.0
        %3672 = vmatprep.subr.mxu0 0.0
        %3673 = vmatpush1.msra.mxu0 0.0
        %3674 = vmatprep.subr.mxu0 0.0
        %3675 = vmatpush1.msra.mxu0 0.0
        %3676 = vmatprep.subr.mxu0 0.0
        %3677 = vmatpush1.msra.mxu0 0.0
        %3678 = vmatprep.subr.mxu0 0.0
        %3679 = vmatpush1.msra.mxu0 0.0
        %3680 = vmatprep.subr.mxu0 0.0
        %3681 = vmatpush1.msra.mxu0 0.0
        %3682 = vmatprep.subr.mxu0 0.0
        %3683 = vmatpush1.msra.mxu0 0.0
        %3684 = vmatprep.subr.mxu0 0.0
        %3685 = vmatpush1.msra.mxu0 0.0
        %3686 = vmatprep.subr.mxu0 0.0
        %3687 = vmatpush1.msra.mxu0 0.0
        %3688 = vmatprep.subr.mxu0 0.0
        %3689 = vmatpush1.msra.mxu0 0.0
        %3690 = vmatprep.subr.mxu0 0.0
        %3691 = vmatpush1.msra.mxu0 0.0
        %3692 = vmatprep.subr.mxu0 0.0
        %3693 = vmatpush1.msra.mxu0 0.0
        %3694 = vmatprep.subr.mxu0 0.0
        %3695 = vmatpush1.msra.mxu0 0.0
        %3696 = vmatprep.subr.mxu0 0.0
        %3697 = vmatpush1.msra.mxu0 0.0
        %3698 = vmatprep.subr.mxu0 0.0
        %3699 = vmatpush1.msra.mxu0 0.0
        %3700 = vmatprep.mubr.f32.mxu0 0.0
        %3701 = vmatmul.mubr.f32.gmra.mrb[0].mxu0 %v3634
        %v3702 = vpop.f32.mrb[0].mxu0
        %v3703 = vadd.f32 0.0, %v3702
        %v3704 = vpop.f32.mrb[0].mxu0
        %3705 = vdwg.mxu0
        %v3706 = vrcp.pop %v3550
        %v3707 = vrcp.pop %v3553
        %v3708 = vmul.f32 %v3627, %v3706
        %v3709 = vmul.f32 %v3703, %v3707
        %3710 = vrot.lane.b32.xlu0 %v2708, 104
        %v3711 = vpop.permute.xlu0 %3710
        %3712 = vrot.lane.b32.xlu0 %v2708, 72
        %v3713 = vpop.permute.xlu0 %3712
        %v3714 = vsel %vm1084, %v3711, 0
        %v3716 = vsel %vm1084, %v3713, 0
        %3718 = vmatprep.subr.mxu0 0.0
        %3719 = vmatpush1.xpose.msra.mxu0 %v3716
        %3720 = vmatprep.subr.mxu0 0.0
        %3721 = vmatpush1.xpose.msra.mxu0 0.0
        %3722 = vmatprep.subr.mxu0 0.0
        %3723 = vmatpush1.xpose.msra.mxu0 0.0
        %3724 = vmatprep.subr.mxu0 0.0
        %3725 = vmatpush1.xpose.msra.mxu0 0.0
        %3726 = vmatprep.subr.mxu0 0.0
        %3727 = vmatpush1.xpose.msra.mxu0 0.0
        %3728 = vmatprep.subr.mxu0 0.0
        %3729 = vmatpush1.xpose.msra.mxu0 0.0
        %3730 = vmatprep.subr.mxu0 0.0
        %3731 = vmatpush1.xpose.msra.mxu0 0.0
        %3732 = vmatprep.subr.mxu0 0.0
        %3733 = vmatpush1.xpose.msra.mxu0 0.0
        %3734 = vmatprep.subr.mxu0 0.0
        %3735 = vmatpush1.xpose.msra.mxu0 0.0
        %3736 = vmatprep.subr.mxu0 0.0
        %3737 = vmatpush1.xpose.msra.mxu0 0.0
        %3738 = vmatprep.subr.mxu0 0.0
        %3739 = vmatpush1.xpose.msra.mxu0 0.0
        %3740 = vmatprep.subr.mxu0 0.0
        %3741 = vmatpush1.xpose.msra.mxu0 0.0
        %3742 = vmatprep.subr.mxu0 0.0
        %3743 = vmatpush1.xpose.msra.mxu0 0.0
        %3744 = vmatprep.subr.mxu0 0.0
        %3745 = vmatpush1.xpose.msra.mxu0 0.0
        %3746 = vmatprep.subr.mxu0 0.0
        %3747 = vmatpush1.xpose.msra.mxu0 0.0
        %3748 = vmatprep.subr.mxu0 0.0
        %3749 = vmatpush1.xpose.msra.mxu0 0.0
        %3750 = vmatprep.subr.mxu0 0.0
        %3751 = vmatpush1.xpose.msra.mxu0 0.0
        %3752 = vmatprep.subr.mxu0 0.0
        %3753 = vmatpush1.xpose.msra.mxu0 0.0
        %3754 = vmatprep.subr.mxu0 0.0
        %3755 = vmatpush1.xpose.msra.mxu0 0.0
        %3756 = vmatprep.subr.mxu0 0.0
        %3757 = vmatpush1.xpose.msra.mxu0 0.0
        %3758 = vmatprep.subr.mxu0 0.0
        %3759 = vmatpush1.xpose.msra.mxu0 0.0
        %3760 = vmatprep.subr.mxu0 0.0
        %3761 = vmatpush1.xpose.msra.mxu0 0.0
        %3762 = vmatprep.subr.mxu0 0.0
        %3763 = vmatpush1.xpose.msra.mxu0 0.0
        %3764 = vmatprep.subr.mxu0 0.0
        %3765 = vmatpush1.xpose.msra.mxu0 0.0
        %3766 = vmatprep.subr.mxu0 0.0
        %3767 = vmatpush1.xpose.msra.mxu0 0.0
        %3768 = vmatprep.subr.mxu0 0.0
        %3769 = vmatpush1.xpose.msra.mxu0 0.0
        %3770 = vmatprep.subr.mxu0 0.0
        %3771 = vmatpush1.xpose.msra.mxu0 0.0
        %3772 = vmatprep.subr.mxu0 0.0
        %3773 = vmatpush1.xpose.msra.mxu0 0.0
        %3774 = vmatprep.subr.mxu0 0.0
        %3775 = vmatpush1.xpose.msra.mxu0 0.0
        %3776 = vmatprep.subr.mxu0 0.0
        %3777 = vmatpush1.xpose.msra.mxu0 0.0
        %3778 = vmatprep.subr.mxu0 0.0
        %3779 = vmatpush1.xpose.msra.mxu0 0.0
        %3780 = vmatprep.subr.mxu0 0.0
        %3781 = vmatpush1.xpose.msra.mxu0 0.0
        %3782 = vmatprep.mubr.f32.mxu0 0.0
        %3783 = vmatmul.mubr.f32.gmra.mrb[0].mxu0 %v3714
        %v3784 = vpop.f32.mrb[0].mxu0
        %v3785 = vadd.f32 0.0, %v3784
        %v3786 = vpop.f32.mrb[0].mxu0
        %3787 = vdwg.mxu0
        %3788 = vrot.lane.b32.xlu0 %v2713, 104
        %v3789 = vpop.permute.xlu0 %3788
        %3790 = vrot.lane.b32.xlu0 %v2713, 72
        %v3791 = vpop.permute.xlu0 %3790
        %v3792 = vsel %vm1084, %v3789, 0
        %v3794 = vsel %vm1084, %v3791, 0
        %3796 = vmatprep.subr.mxu0 0.0
        %3797 = vmatpush1.xpose.msra.mxu0 %v3794
        %3798 = vmatprep.subr.mxu0 0.0
        %3799 = vmatpush1.xpose.msra.mxu0 0.0
        %3800 = vmatprep.subr.mxu0 0.0
        %3801 = vmatpush1.xpose.msra.mxu0 0.0
        %3802 = vmatprep.subr.mxu0 0.0
        %3803 = vmatpush1.xpose.msra.mxu0 0.0
        %3804 = vmatprep.subr.mxu0 0.0
        %3805 = vmatpush1.xpose.msra.mxu0 0.0
        %3806 = vmatprep.subr.mxu0 0.0
        %3807 = vmatpush1.xpose.msra.mxu0 0.0
        %3808 = vmatprep.subr.mxu0 0.0
        %3809 = vmatpush1.xpose.msra.mxu0 0.0
        %3810 = vmatprep.subr.mxu0 0.0
        %3811 = vmatpush1.xpose.msra.mxu0 0.0
        %3812 = vmatprep.subr.mxu0 0.0
        %3813 = vmatpush1.xpose.msra.mxu0 0.0
        %3814 = vmatprep.subr.mxu0 0.0
        %3815 = vmatpush1.xpose.msra.mxu0 0.0
        %3816 = vmatprep.subr.mxu0 0.0
        %3817 = vmatpush1.xpose.msra.mxu0 0.0
        %3818 = vmatprep.subr.mxu0 0.0
        %3819 = vmatpush1.xpose.msra.mxu0 0.0
        %3820 = vmatprep.subr.mxu0 0.0
        %3821 = vmatpush1.xpose.msra.mxu0 0.0
        %3822 = vmatprep.subr.mxu0 0.0
        %3823 = vmatpush1.xpose.msra.mxu0 0.0
        %3824 = vmatprep.subr.mxu0 0.0
        %3825 = vmatpush1.xpose.msra.mxu0 0.0
        %3826 = vmatprep.subr.mxu0 0.0
        %3827 = vmatpush1.xpose.msra.mxu0 0.0
        %3828 = vmatprep.subr.mxu0 0.0
        %3829 = vmatpush1.xpose.msra.mxu0 0.0
        %3830 = vmatprep.subr.mxu0 0.0
        %3831 = vmatpush1.xpose.msra.mxu0 0.0
        %3832 = vmatprep.subr.mxu0 0.0
        %3833 = vmatpush1.xpose.msra.mxu0 0.0
        %3834 = vmatprep.subr.mxu0 0.0
        %3835 = vmatpush1.xpose.msra.mxu0 0.0
        %3836 = vmatprep.subr.mxu0 0.0
        %3837 = vmatpush1.xpose.msra.mxu0 0.0
        %3838 = vmatprep.subr.mxu0 0.0
        %3839 = vmatpush1.xpose.msra.mxu0 0.0
        %3840 = vmatprep.subr.mxu0 0.0
        %3841 = vmatpush1.xpose.msra.mxu0 0.0
        %3842 = vmatprep.subr.mxu0 0.0
        %3843 = vmatpush1.xpose.msra.mxu0 0.0
        %3844 = vmatprep.subr.mxu0 0.0
        %3845 = vmatpush1.xpose.msra.mxu0 0.0
        %3846 = vmatprep.subr.mxu0 0.0
        %3847 = vmatpush1.xpose.msra.mxu0 0.0
        %3848 = vmatprep.subr.mxu0 0.0
        %3849 = vmatpush1.xpose.msra.mxu0 0.0
        %3850 = vmatprep.subr.mxu0 0.0
        %3851 = vmatpush1.xpose.msra.mxu0 0.0
        %3852 = vmatprep.subr.mxu0 0.0
        %3853 = vmatpush1.xpose.msra.mxu0 0.0
        %3854 = vmatprep.subr.mxu0 0.0
        %3855 = vmatpush1.xpose.msra.mxu0 0.0
        %3856 = vmatprep.subr.mxu0 0.0
        %3857 = vmatpush1.xpose.msra.mxu0 0.0
        %3858 = vmatprep.subr.mxu0 0.0
        %3859 = vmatpush1.xpose.msra.mxu0 0.0
        %3860 = vmatprep.mubr.f32.mxu0 0.0
        %3861 = vmatmul.mubr.f32.gmra.mrb[0].mxu0 %v3792
        %v3862 = vpop.f32.mrb[0].mxu0
        %v3863 = vadd.f32 0.0, %v3862
        %v3864 = vpop.f32.mrb[0].mxu0
        %3865 = vdwg.mxu0
        %v3866 = vmul.f32 %v3785, 0.35355338
        %v3867 = vmul.f32 %v3863, 0.35355338
        %v3868 = vsel %vm1084, %v3866, -inf
        %3869 = vmax.xlane.f32.xlu0 %v3868
        %v3870 = vpop.xlane.xlu0 %3869
        %v3871 = vsel %vm1084, %v3867, -inf
        %3872 = vmax.xlane.f32.xlu0 %v3871
        %v3873 = vpop.xlane.xlu0 %3872
        %v3874 = vsub.f32 %v3866, %v3870
        %v3875 = vsub.f32 %v3867, %v3873
        %v3876 = vmul.f32 %v3874, 1.442695
        %v3877 = vpow.pop %v3876
        %v3878 = vmul.f32 %v3875, 1.442695
        %v3879 = vpow.pop %v3878
        %v3880 = vsel %vm1084, %v3877, 0.0
        %3881 = vadd.xlane.f32.xlu0 %v3880
        %v3882 = vpop.xlane.xlu0 %3881
        %v3883 = vsel %vm1084, %v3879, 0.0
        %3884 = vadd.xlane.f32.xlu0 %v3883
        %v3885 = vpop.xlane.xlu0 %3884
        %3886 = vrot.lane.b32.xlu0 %v2708, 40
        %v3887 = vpop.permute.xlu0 %3886
        %v3890 = vsel %vm1084, %v3877, 0
        %3892 = vmatprep.subr.mxu0 0.0
        %3893 = vmatpush1.msra.mxu0 %v3887
        %3894 = vmatprep.subr.mxu0 0.0
        %3895 = vmatpush1.msra.mxu0 0.0
        %3896 = vmatprep.subr.mxu0 0.0
        %3897 = vmatpush1.msra.mxu0 0.0
        %3898 = vmatprep.subr.mxu0 0.0
        %3899 = vmatpush1.msra.mxu0 0.0
        %3900 = vmatprep.subr.mxu0 0.0
        %3901 = vmatpush1.msra.mxu0 0.0
        %3902 = vmatprep.subr.mxu0 0.0
        %3903 = vmatpush1.msra.mxu0 0.0
        %3904 = vmatprep.subr.mxu0 0.0
        %3905 = vmatpush1.msra.mxu0 0.0
        %3906 = vmatprep.subr.mxu0 0.0
        %3907 = vmatpush1.msra.mxu0 0.0
        %3908 = vmatprep.subr.mxu0 0.0
        %3909 = vmatpush1.msra.mxu0 0.0
        %3910 = vmatprep.subr.mxu0 0.0
        %3911 = vmatpush1.msra.mxu0 0.0
        %3912 = vmatprep.subr.mxu0 0.0
        %3913 = vmatpush1.msra.mxu0 0.0
        %3914 = vmatprep.subr.mxu0 0.0
        %3915 = vmatpush1.msra.mxu0 0.0
        %3916 = vmatprep.subr.mxu0 0.0
        %3917 = vmatpush1.msra.mxu0 0.0
        %3918 = vmatprep.subr.mxu0 0.0
        %3919 = vmatpush1.msra.mxu0 0.0
        %3920 = vmatprep.subr.mxu0 0.0
        %3921 = vmatpush1.msra.mxu0 0.0
        %3922 = vmatprep.subr.mxu0 0.0
        %3923 = vmatpush1.msra.mxu0 0.0
        %3924 = vmatprep.subr.mxu0 0.0
        %3925 = vmatpush1.msra.mxu0 0.0
        %3926 = vmatprep.subr.mxu0 0.0
        %3927 = vmatpush1.msra.mxu0 0.0
        %3928 = vmatprep.subr.mxu0 0.0
        %3929 = vmatpush1.msra.mxu0 0.0
        %3930 = vmatprep.subr.mxu0 0.0
        %3931 = vmatpush1.msra.mxu0 0.0
        %3932 = vmatprep.subr.mxu0 0.0
        %3933 = vmatpush1.msra.mxu0 0.0
        %3934 = vmatprep.subr.mxu0 0.0
        %3935 = vmatpush1.msra.mxu0 0.0
        %3936 = vmatprep.subr.mxu0 0.0
        %3937 = vmatpush1.msra.mxu0 0.0
        %3938 = vmatprep.subr.mxu0 0.0
        %3939 = vmatpush1.msra.mxu0 0.0
        %3940 = vmatprep.subr.mxu0 0.0
        %3941 = vmatpush1.msra.mxu0 0.0
        %3942 = vmatprep.subr.mxu0 0.0
        %3943 = vmatpush1.msra.mxu0 0.0
        %3944 = vmatprep.subr.mxu0 0.0
        %3945 = vmatpush1.msra.mxu0 0.0
        %3946 = vmatprep.subr.mxu0 0.0
        %3947 = vmatpush1.msra.mxu0 0.0
        %3948 = vmatprep.subr.mxu0 0.0
        %3949 = vmatpush1.msra.mxu0 0.0
        %3950 = vmatprep.subr.mxu0 0.0
        %3951 = vmatpush1.msra.mxu0 0.0
        %3952 = vmatprep.subr.mxu0 0.0
        %3953 = vmatpush1.msra.mxu0 0.0
        %3954 = vmatprep.subr.mxu0 0.0
        %3955 = vmatpush1.msra.mxu0 0.0
        %3956 = vmatprep.mubr.f32.mxu0 0.0
        %3957 = vmatmul.mubr.f32.gmra.mrb[0].mxu0 %v3890
        %v3958 = vpop.f32.mrb[0].mxu0
        %v3959 = vadd.f32 0.0, %v3958
        %v3960 = vpop.f32.mrb[0].mxu0
        %3961 = vdwg.mxu0
        %3962 = vrot.lane.b32.xlu0 %v2713, 40
        %v3963 = vpop.permute.xlu0 %3962
        %v3966 = vsel %vm1084, %v3879, 0
        %3968 = vmatprep.subr.mxu0 0.0
        %3969 = vmatpush1.msra.mxu0 %v3963
        %3970 = vmatprep.subr.mxu0 0.0
        %3971 = vmatpush1.msra.mxu0 0.0
        %3972 = vmatprep.subr.mxu0 0.0
        %3973 = vmatpush1.msra.mxu0 0.0
        %3974 = vmatprep.subr.mxu0 0.0
        %3975 = vmatpush1.msra.mxu0 0.0
        %3976 = vmatprep.subr.mxu0 0.0
        %3977 = vmatpush1.msra.mxu0 0.0
        %3978 = vmatprep.subr.mxu0 0.0
        %3979 = vmatpush1.msra.mxu0 0.0
        %3980 = vmatprep.subr.mxu0 0.0
        %3981 = vmatpush1.msra.mxu0 0.0
        %3982 = vmatprep.subr.mxu0 0.0
        %3983 = vmatpush1.msra.mxu0 0.0
        %3984 = vmatprep.subr.mxu0 0.0
        %3985 = vmatpush1.msra.mxu0 0.0
        %3986 = vmatprep.subr.mxu0 0.0
        %3987 = vmatpush1.msra.mxu0 0.0
        %3988 = vmatprep.subr.mxu0 0.0
        %3989 = vmatpush1.msra.mxu0 0.0
        %3990 = vmatprep.subr.mxu0 0.0
        %3991 = vmatpush1.msra.mxu0 0.0
        %3992 = vmatprep.subr.mxu0 0.0
        %3993 = vmatpush1.msra.mxu0 0.0
        %3994 = vmatprep.subr.mxu0 0.0
        %3995 = vmatpush1.msra.mxu0 0.0
        %3996 = vmatprep.subr.mxu0 0.0
        %3997 = vmatpush1.msra.mxu0 0.0
        %3998 = vmatprep.subr.mxu0 0.0
        %3999 = vmatpush1.msra.mxu0 0.0
        %4000 = vmatprep.subr.mxu0 0.0
        %4001 = vmatpush1.msra.mxu0 0.0
        %4002 = vmatprep.subr.mxu0 0.0
        %4003 = vmatpush1.msra.mxu0 0.0
        %4004 = vmatprep.subr.mxu0 0.0
        %4005 = vmatpush1.msra.mxu0 0.0
        %4006 = vmatprep.subr.mxu0 0.0
        %4007 = vmatpush1.msra.mxu0 0.0
        %4008 = vmatprep.subr.mxu0 0.0
        %4009 = vmatpush1.msra.mxu0 0.0
        %4010 = vmatprep.subr.mxu0 0.0
        %4011 = vmatpush1.msra.mxu0 0.0
        %4012 = vmatprep.subr.mxu0 0.0
        %4013 = vmatpush1.msra.mxu0 0.0
        %4014 = vmatprep.subr.mxu0 0.0
        %4015 = vmatpush1.msra.mxu0 0.0
        %4016 = vmatprep.subr.mxu0 0.0
        %4017 = vmatpush1.msra.mxu0 0.0
        %4018 = vmatprep.subr.mxu0 0.0
        %4019 = vmatpush1.msra.mxu0 0.0
        %4020 = vmatprep.subr.mxu0 0.0
        %4021 = vmatpush1.msra.mxu0 0.0
        %4022 = vmatprep.subr.mxu0 0.0
        %4023 = vmatpush1.msra.mxu0 0.0
        %4024 = vmatprep.subr.mxu0 0.0
        %4025 = vmatpush1.msra.mxu0 0.0
        %4026 = vmatprep.subr.mxu0 0.0
        %4027 = vmatpush1.msra.mxu0 0.0
        %4028 = vmatprep.subr.mxu0 0.0
        %4029 = vmatpush1.msra.mxu0 0.0
        %4030 = vmatprep.subr.mxu0 0.0
        %4031 = vmatpush1.msra.mxu0 0.0
        %4032 = vmatprep.mubr.f32.mxu0 0.0
        %4033 = vmatmul.mubr.f32.gmra.mrb[0].mxu0 %v3966
        %v4034 = vpop.f32.mrb[0].mxu0
        %v4035 = vadd.f32 0.0, %v4034
        %v4036 = vpop.f32.mrb[0].mxu0
        %4037 = vdwg.mxu0
        %v4038 = vrcp.pop %v3882
        %v4039 = vrcp.pop %v3885
        %v4040 = vmul.f32 %v3959, %v4038
        %v4041 = vmul.f32 %v4035, %v4039
        %4044 = vrot.lane.b32.xlu0 %v3376, 8
        %v4045 = vpop.permute.xlu0 %4044
        %4046 = vrot.lane.b32.xlu0 %v3377, 8
        %v4047 = vpop.permute.xlu0 %4046
        %4052 = vrot.lane.b32.xlu0 %v3708, 16
        %v4053 = vpop.permute.xlu0 %4052
        %4054 = vrot.lane.b32.xlu0 %v3709, 16
        %v4055 = vpop.permute.xlu0 %4054
        %4060 = vrot.lane.b32.xlu0 %v4040, 24
        %v4061 = vpop.permute.xlu0 %4060
        %4062 = vrot.lane.b32.xlu0 %v4041, 24
        %v4063 = vpop.permute.xlu0 %4062
        %v4066 = vsel %vm1084, %v3044, %v4045
        %v4067 = vsel %vm1084, %v3045, %v4047
        %v4068 = vsel %vm1245, %v4066, %v4053
        %v4069 = vsel %vm1245, %v4067, %v4055
        %v4070 = vsel %vm2492, %v4068, %v4061
        %v4071 = vsel %vm2492, %v4069, %v4063
        %v4072 = vld [vmem:[#allocation14] sm:$0xff]
        %v4073 = vld [vmem:[#allocation14 + $0x8] sm:$0xff]
        %v4074 = vld [vmem:[#allocation14 + $0x10] sm:$0xff]
        %v4075 = vld [vmem:[#allocation14 + $0x18] sm:$0xff]
        %v4076 = vlaneseq
        %v4077 = vshrl.u32 %v4076, 7
        %v4078 = vsub.s32 2, %v4077
        %v4079 = vrot.slane %v633, %v4078
        %v4081 = vsel %vm650, %v4070, 0
        %v4084 = vsel %vm650, %v4071, 0
        %4086 = vmatprep.subr.mxu0 0.0
        %4087 = vmatpush1.msra.mxu0 %v4072
        %4088 = vmatprep.subr.mxu0 0.0
        %4089 = vmatpush1.msra.mxu0 %v4073
        %4090 = vmatprep.subr.mxu0 0.0
        %4091 = vmatpush1.msra.mxu0 %v4074
        %4092 = vmatprep.subr.mxu0 0.0
        %4093 = vmatpush1.msra.mxu0 %v4075
        %4094 = vmatprep.subr.mxu0 0.0
        %4095 = vmatpush1.msra.mxu0 0.0
        %4096 = vmatprep.subr.mxu0 0.0
        %4097 = vmatpush1.msra.mxu0 0.0
        %4098 = vmatprep.subr.mxu0 0.0
        %4099 = vmatpush1.msra.mxu0 0.0
        %4100 = vmatprep.subr.mxu0 0.0
        %4101 = vmatpush1.msra.mxu0 0.0
        %4102 = vmatprep.subr.mxu0 0.0
        %4103 = vmatpush1.msra.mxu0 0.0
        %4104 = vmatprep.subr.mxu0 0.0
        %4105 = vmatpush1.msra.mxu0 0.0
        %4106 = vmatprep.subr.mxu0 0.0
        %4107 = vmatpush1.msra.mxu0 0.0
        %4108 = vmatprep.subr.mxu0 0.0
        %4109 = vmatpush1.msra.mxu0 0.0
        %4110 = vmatprep.subr.mxu0 0.0
        %4111 = vmatpush1.msra.mxu0 0.0
        %4112 = vmatprep.subr.mxu0 0.0
        %4113 = vmatpush1.msra.mxu0 0.0
        %4114 = vmatprep.subr.mxu0 0.0
        %4115 = vmatpush1.msra.mxu0 0.0
        %4116 = vmatprep.subr.mxu0 0.0
        %4117 = vmatpush1.msra.mxu0 0.0
        %4118 = vmatprep.subr.mxu0 0.0
        %4119 = vmatpush1.msra.mxu0 0.0
        %4120 = vmatprep.subr.mxu0 0.0
        %4121 = vmatpush1.msra.mxu0 0.0
        %4122 = vmatprep.subr.mxu0 0.0
        %4123 = vmatpush1.msra.mxu0 0.0
        %4124 = vmatprep.subr.mxu0 0.0
        %4125 = vmatpush1.msra.mxu0 0.0
        %4126 = vmatprep.subr.mxu0 0.0
        %4127 = vmatpush1.msra.mxu0 0.0
        %4128 = vmatprep.subr.mxu0 0.0
        %4129 = vmatpush1.msra.mxu0 0.0
        %4130 = vmatprep.subr.mxu0 0.0
        %4131 = vmatpush1.msra.mxu0 0.0
        %4132 = vmatprep.subr.mxu0 0.0
        %4133 = vmatpush1.msra.mxu0 0.0
        %4134 = vmatprep.subr.mxu0 0.0
        %4135 = vmatpush1.msra.mxu0 0.0
        %4136 = vmatprep.subr.mxu0 0.0
        %4137 = vmatpush1.msra.mxu0 0.0
        %4138 = vmatprep.subr.mxu0 0.0
        %4139 = vmatpush1.msra.mxu0 0.0
        %4140 = vmatprep.subr.mxu0 0.0
        %4141 = vmatpush1.msra.mxu0 0.0
        %4142 = vmatprep.subr.mxu0 0.0
        %4143 = vmatpush1.msra.mxu0 0.0
        %4144 = vmatprep.subr.mxu0 0.0
        %4145 = vmatpush1.msra.mxu0 0.0
        %4146 = vmatprep.subr.mxu0 0.0
        %4147 = vmatpush1.msra.mxu0 0.0
        %4148 = vmatprep.subr.mxu0 0.0
        %4149 = vmatpush1.msra.mxu0 0.0
        %4150 = vmatprep.mubr.f32.mxu0 0.0
        %4151 = vmatmul.mubr.f32.gmra.mrb[0].mxu0 %v4081
        %v4152 = vpop.f32.mrb[0].mxu0
        %v4153 = vadd.f32 %v4079, %v4152
        %v4154 = vpop.f32.mrb[0].mxu0
        %4155 = vmatprep.mubr.f32.mxu0 0.0
        %4156 = vmatmul.mubr.f32.gmra.mrb[0].mxu0 %v4084
        %v4157 = vpop.f32.mrb[0].mxu0
        %v4158 = vadd.f32 %v4079, %v4157
        %v4159 = vpop.f32.mrb[0].mxu0
        %4160 = vdwg.mxu0
        %v4161 = vadd.f32 %v2622, %v4153
        %v4162 = vadd.f32 %v2623, %v4158
        %v4163 = vsel %vm650, %v4161, 0.0
        %4164 = vadd.xlane.f32.xlu0 %v4163
        %v4165 = vpop.xlane.xlu0 %4164
        %v4166 = vsel %vm650, %v4162, 0.0
        %4167 = vadd.xlane.f32.xlu0 %v4166
        %v4168 = vpop.xlane.xlu0 %4167
        %v4169 = vmul.f32 %v4165, %v843
        %v4170 = vmul.f32 %v4168, %v843
        %v4171 = vsub.f32 %v4161, %v4169
        %v4172 = vsub.f32 %v4162, %v4170
        %v4173 = vmul.f32 %v4171, %v4171
        %v4174 = vmul.f32 %v4172, %v4172
        %v4175 = vsel %vm650, %v4173, 0.0
        %4176 = vadd.xlane.f32.xlu0 %v4175
        %v4177 = vpop.xlane.xlu0 %4176
        %v4178 = vsel %vm650, %v4174, 0.0
        %4179 = vadd.xlane.f32.xlu0 %v4178
        %v4180 = vpop.xlane.xlu0 %4179
        %v4181 = vmul.f32 %v4177, %v843
        %v4182 = vmul.f32 %v4180, %v843
        %v4183 = vadd.f32 %v4181, 1e-05
        %v4184 = vadd.f32 %v4182, 1e-05
        %v4185 = vrsqrt.pop %v4183
        %v4186 = vrsqrt.pop %v4184
        %v4187 = vmul.f32 %v4171, %v4185
        %v4188 = vmul.f32 %v4172, %v4186
        %v4189 = vlaneseq
        %v4190 = vshrl.u32 %v4189, 7
        %v4191 = vsub.s32 7, %v4190
        %v4192 = vrot.slane %v633, %v4191
        %v4193 = vmul.f32 %v4187, %v4192
        %v4194 = vmul.f32 %v4188, %v4192
        %v4195 = vlaneseq
        %v4196 = vshrl.u32 %v4195, 7
        %v4197 = vsub.s32 0, %v4196
        %v4198 = vrot.slane %v634, %v4197
        %v4199 = vadd.f32 %v4193, %v4198
        %v4200 = vadd.f32 %v4194, %v4198
        %v4201 = vsel %vm650, %v4199, 0.0
        %v4202 = vrot.slane %v4201, 4
        %v4203 = vadd.f32 %v4201, %v4202
        %v4204 = vrot.slane %v4203, 2
        %v4205 = vadd.f32 %v4203, %v4204
        %v4206 = vrot.slane %v4205, 1
        %v4207 = vadd.f32 %v4205, %v4206
        %v4208 = vsel %vm650, %v4200, 0.0
        %v4209 = vrot.slane %v4208, 4
        %v4210 = vadd.f32 %v4208, %v4209
        %v4211 = vrot.slane %v4210, 2
        %v4212 = vadd.f32 %v4210, %v4211
        %v4213 = vrot.slane %v4212, 1
        %v4214 = vadd.f32 %v4212, %v4213
        %v4215 = vrcp.pop 8.0
        %v4216 = vmul.f32 %v4207, %v4215
        %v4217 = vmul.f32 %v4214, %v4215
        %v4218 = vld [vmem:[#allocation5] sm:$0xff]
        %v4219 = vld [vmem:[#allocation5 + $0x8] sm:$0xff]
        %v4220 = vld [vmem:[#allocation5 + $0x10] sm:$0xff]
        %v4221 = vld [vmem:[#allocation5 + $0x18] sm:$0xff]
        %v4222 = vlaneseq
        %v4223 = vshrl.u32 %v4222, 7
        %v4224 = vsub.s32 1, %v4223
        %v4225 = vrot.slane %v635, %v4224
        %vm4228 = vcmask 1041409
        %v4229 = vsel %vm4228, %v4217, %v4216
        %v4230 = vsel %vm650, %v4229, 0
        %4232 = vmatprep.subr.mxu0 0.0
        %4233 = vmatpush1.msra.mxu0 %v4218
        %4234 = vmatprep.subr.mxu0 0.0
        %4235 = vmatpush1.msra.mxu0 %v4219
        %4236 = vmatprep.subr.mxu0 0.0
        %4237 = vmatpush1.msra.mxu0 %v4220
        %4238 = vmatprep.subr.mxu0 0.0
        %4239 = vmatpush1.msra.mxu0 %v4221
        %4240 = vmatprep.subr.mxu0 0.0
        %4241 = vmatpush1.msra.mxu0 0.0
        %4242 = vmatprep.subr.mxu0 0.0
        %4243 = vmatpush1.msra.mxu0 0.0
        %4244 = vmatprep.subr.mxu0 0.0
        %4245 = vmatpush1.msra.mxu0 0.0
        %4246 = vmatprep.subr.mxu0 0.0
        %4247 = vmatpush1.msra.mxu0 0.0
        %4248 = vmatprep.subr.mxu0 0.0
        %4249 = vmatpush1.msra.mxu0 0.0
        %4250 = vmatprep.subr.mxu0 0.0
        %4251 = vmatpush1.msra.mxu0 0.0
        %4252 = vmatprep.subr.mxu0 0.0
        %4253 = vmatpush1.msra.mxu0 0.0
        %4254 = vmatprep.subr.mxu0 0.0
        %4255 = vmatpush1.msra.mxu0 0.0
        %4256 = vmatprep.subr.mxu0 0.0
        %4257 = vmatpush1.msra.mxu0 0.0
        %4258 = vmatprep.subr.mxu0 0.0
        %4259 = vmatpush1.msra.mxu0 0.0
        %4260 = vmatprep.subr.mxu0 0.0
        %4261 = vmatpush1.msra.mxu0 0.0
        %4262 = vmatprep.subr.mxu0 0.0
        %4263 = vmatpush1.msra.mxu0 0.0
        %4264 = vmatprep.subr.mxu0 0.0
        %4265 = vmatpush1.msra.mxu0 0.0
        %4266 = vmatprep.subr.mxu0 0.0
        %4267 = vmatpush1.msra.mxu0 0.0
        %4268 = vmatprep.subr.mxu0 0.0
        %4269 = vmatpush1.msra.mxu0 0.0
        %4270 = vmatprep.subr.mxu0 0.0
        %4271 = vmatpush1.msra.mxu0 0.0
        %4272 = vmatprep.subr.mxu0 0.0
        %4273 = vmatpush1.msra.mxu0 0.0
        %4274 = vmatprep.subr.mxu0 0.0
        %4275 = vmatpush1.msra.mxu0 0.0
        %4276 = vmatprep.subr.mxu0 0.0
        %4277 = vmatpush1.msra.mxu0 0.0
        %4278 = vmatprep.subr.mxu0 0.0
        %4279 = vmatpush1.msra.mxu0 0.0
        %4280 = vmatprep.subr.mxu0 0.0
        %4281 = vmatpush1.msra.mxu0 0.0
        %4282 = vmatprep.subr.mxu0 0.0
        %4283 = vmatpush1.msra.mxu0 0.0
        %4284 = vmatprep.subr.mxu0 0.0
        %4285 = vmatpush1.msra.mxu0 0.0
        %4286 = vmatprep.subr.mxu0 0.0
        %4287 = vmatpush1.msra.mxu0 0.0
        %4288 = vmatprep.subr.mxu0 0.0
        %4289 = vmatpush1.msra.mxu0 0.0
        %4290 = vmatprep.subr.mxu0 0.0
        %4291 = vmatpush1.msra.mxu0 0.0
        %4292 = vmatprep.subr.mxu0 0.0
        %4293 = vmatpush1.msra.mxu0 0.0
        %4294 = vmatprep.subr.mxu0 0.0
        %4295 = vmatpush1.msra.mxu0 0.0
        %4296 = vmatprep.mubr.f32.mxu0 0.0
        %4297 = vmatmul.mubr.f32.gmra.mrb[0].mxu0 %v4230
        %v4298 = vpop.f32.mrb[0].mxu0
        %v4299 = vadd.f32 %v4225, %v4298
        %v4300 = vpop.f32.mrb[0].mxu0
        %4301 = vdwg.mxu0
        %v4302 = vmul.f32 %v4299, 0.5
        %v4303 = vmul.f32 %v4299, %v734
        %v4304 = verf.f32.pop %v4303
        %v4305 = vadd.f32 %v4304, 1.0
        %v4306 = vmul.f32 %v4302, %v4305
        %v4307 = vld [vmem:[#allocation7] sm:$0xff]
        %v4308 = vld [vmem:[#allocation7 + $0x8] sm:$0xff]
        %v4309 = vld [vmem:[#allocation7 + $0x10] sm:$0xff]
        %v4310 = vld [vmem:[#allocation7 + $0x18] sm:$0xff]
        %v4311 = vld [vmem:[#allocation7 + $0x20] sm:$0xff]
        %v4312 = vld [vmem:[#allocation7 + $0x28] sm:$0xff]
        %v4313 = vld [vmem:[#allocation7 + $0x30] sm:$0xff]
        %v4314 = vld [vmem:[#allocation7 + $0x38] sm:$0xff]
        %v4315 = vld [vmem:[%s6] sm:$0x1]
        %v4317 = vlaneseq
        %v4318 = vshrl.u32 %v4317, 7
        %v4319 = vsub.s32 0, %v4318
        %v4320 = vrot.slane %v4315, %v4319
        %v4323 = vsel %vm755, %v4306, 0
        %4325 = vmatprep.subr.mxu0 0.0
        %4326 = vmatpush1.msra.mxu0 %v4307
        %4327 = vmatprep.subr.mxu0 0.0
        %4328 = vmatpush1.msra.mxu0 %v4308
        %4329 = vmatprep.subr.mxu0 0.0
        %4330 = vmatpush1.msra.mxu0 %v4309
        %4331 = vmatprep.subr.mxu0 0.0
        %4332 = vmatpush1.msra.mxu0 %v4310
        %4333 = vmatprep.subr.mxu0 0.0
        %4334 = vmatpush1.msra.mxu0 %v4311
        %4335 = vmatprep.subr.mxu0 0.0
        %4336 = vmatpush1.msra.mxu0 %v4312
        %4337 = vmatprep.subr.mxu0 0.0
        %4338 = vmatpush1.msra.mxu0 %v4313
        %4339 = vmatprep.subr.mxu0 0.0
        %4340 = vmatpush1.msra.mxu0 %v4314
        %4341 = vmatprep.subr.mxu0 0.0
        %4342 = vmatpush1.msra.mxu0 0.0
        %4343 = vmatprep.subr.mxu0 0.0
        %4344 = vmatpush1.msra.mxu0 0.0
        %4345 = vmatprep.subr.mxu0 0.0
        %4346 = vmatpush1.msra.mxu0 0.0
        %4347 = vmatprep.subr.mxu0 0.0
        %4348 = vmatpush1.msra.mxu0 0.0
        %4349 = vmatprep.subr.mxu0 0.0
        %4350 = vmatpush1.msra.mxu0 0.0
        %4351 = vmatprep.subr.mxu0 0.0
        %4352 = vmatpush1.msra.mxu0 0.0
        %4353 = vmatprep.subr.mxu0 0.0
        %4354 = vmatpush1.msra.mxu0 0.0
        %4355 = vmatprep.subr.mxu0 0.0
        %4356 = vmatpush1.msra.mxu0 0.0
        %4357 = vmatprep.subr.mxu0 0.0
        %4358 = vmatpush1.msra.mxu0 0.0
        %4359 = vmatprep.subr.mxu0 0.0
        %4360 = vmatpush1.msra.mxu0 0.0
        %4361 = vmatprep.subr.mxu0 0.0
        %4362 = vmatpush1.msra.mxu0 0.0
        %4363 = vmatprep.subr.mxu0 0.0
        %4364 = vmatpush1.msra.mxu0 0.0
        %4365 = vmatprep.subr.mxu0 0.0
        %4366 = vmatpush1.msra.mxu0 0.0
        %4367 = vmatprep.subr.mxu0 0.0
        %4368 = vmatpush1.msra.mxu0 0.0
        %4369 = vmatprep.subr.mxu0 0.0
        %4370 = vmatpush1.msra.mxu0 0.0
        %4371 = vmatprep.subr.mxu0 0.0
        %4372 = vmatpush1.msra.mxu0 0.0
        %4373 = vmatprep.subr.mxu0 0.0
        %4374 = vmatpush1.msra.mxu0 0.0
        %4375 = vmatprep.subr.mxu0 0.0
        %4376 = vmatpush1.msra.mxu0 0.0
        %4377 = vmatprep.subr.mxu0 0.0
        %4378 = vmatpush1.msra.mxu0 0.0
        %4379 = vmatprep.subr.mxu0 0.0
        %4380 = vmatpush1.msra.mxu0 0.0
        %4381 = vmatprep.subr.mxu0 0.0
        %4382 = vmatpush1.msra.mxu0 0.0
        %4383 = vmatprep.subr.mxu0 0.0
        %4384 = vmatpush1.msra.mxu0 0.0
        %4385 = vmatprep.subr.mxu0 0.0
        %4386 = vmatpush1.msra.mxu0 0.0
        %4387 = vmatprep.subr.mxu0 0.0
        %4388 = vmatpush1.msra.mxu0 0.0
        %4389 = vmatprep.mubr.f32.mxu0 0.0
        %4390 = vmatmul.mubr.f32.gmra.mrb[0].mxu0 %v4323
        %v4391 = vpop.f32.mrb[0].mxu0
        %v4392 = vadd.f32 %v4320, %v4391
        %v4393 = vpop.f32.mrb[0].mxu0
        %4394 = vdwg.mxu0
        %4395 = vst [vmem:[%s619] sm:$0x3] %v4392
        %s4396 = sand.u32 %s367, 1
        %s4397 = scalar_lea.sflag [#allocation4], %s4396
        %s4398 = sand.u32 %s367, 1
        %s4399 = smul.addr %s4398, 2
        %s4400 = scalar_lea.vmem [#allocation16], %s4399
        // Predicated region
        $region113: #{tpu_custom_call.1} parent=79 // pred_check
          %p4401 = pneg %p377
        $region114: #{tpu_custom_call.1} parent=79 // pred_check_branch
          %4403 = sbr.rel (%p4401) target = $region116
        $region115: #{tpu_custom_call.1} parent=79 // pred_region
          %s4405 = ssub.s32 32, 32
          %4406 = vsyncadd %s4397, %s4405
          %s4407 = smul.addr %s34, 32
          %s4408 = scalar_lea.hbm %s15, %s4407
          %s4410 = sshll.u32 %s4400, 4
          %s4411 = int_to_ptr.vmem [resolvable:$true] %s4410
          %4413 = dma.vmem_to_hbm [thread:$0]  %s4411, 32, %s4408, %s4397
        $region116: #{tpu_custom_call.1} parent=79 // pred_fallthru
          _
      $region80: #{tpu_custom_call.1} parent=5 // pred_fallthru
        _
      %p4414 = scmp.le.s32.totalorder 2, %s29
      // Predicated region
      $region117: #{tpu_custom_call.1} parent=5 // pred_check
        %p4415 = pneg %p4414
      $region118: #{tpu_custom_call.1} parent=5 // pred_check_branch
        %4417 = sbr.rel (%p4415) target = $region120
      $region119: #{tpu_custom_call.1} parent=5 // pred_region
        %s4418 = ssub.s32 %s29, 2
        // Predicated region
        $region121: #{tpu_custom_call.1} parent=119 // pred_check
          %p4419 = pneg %p383
        $region122: #{tpu_custom_call.1} parent=119 // pred_check_branch
          %4421 = sbr.rel (%p4419) target = $region124
        $region123: #{tpu_custom_call.1} parent=119 // pred_region
          %s4422 = sand.u32 %s368, 1
          %s4423 = scalar_lea.sflag [#allocation4], %s4422
          %s4424 = sand.u32 %s368, 1
          %s4425 = smul.addr %s4424, 2
          %s4426 = scalar_lea.vmem [#allocation16], %s4425
          %4427 = dma.done %s4423, 32
        $region124: #{tpu_custom_call.1} parent=119 // pred_fallthru
          _
      $region120: #{tpu_custom_call.1} parent=5 // pred_fallthru
        _
    $region6: #{tpu_custom_call.1} parent=1 // loop_footer
      %s33 = sadd.s32 1, %s29
    $region7: #{tpu_custom_call.1} parent=1 // loop_footer_branch
      %28 = sbr.rel target = $region3
    $region8: #{tpu_custom_call.1} parent=1 // loop_exit
      _
    %4428 = vsyncpa [#allocation3], 1
    %s4429 = scalar_lea.sflag [#allocation3], 1
    %4430 = vsyncpa %s4429, 1
    %4431 = vsyncpa [#allocation6], 1
    %4432 = vsyncpa [#allocation9], 1
    %4433 = vsyncpa [#allocation12], 1
    %4434 = vsyncpa [#allocation15], 1
    %4435 = vsyncpa [#allocation4], 1
    %s4436 = scalar_lea.sflag [#allocation4], 1
    %4437 = vsyncpa %s4436, 1

</llo_original>
